<compile_context>
chip_gen: v5e
topology: v5e:2x2
jax: 0.10.0
libtpu: 0.0.40
codegen_flags: <defaults>
</compile_context>

<pallas_src>
import math

import numpy as np

import jax
import jax.numpy as jnp
from jax.experimental import pallas as pl
from jax.experimental.pallas import tpu as pltpu  # noqa: F401  (TPU target)


NEG_SLOPE = 0.1   # nn.LeakyReLU(0.1) in the reference module
BN_EPS = 1e-5


# ---------------------------------------------------------------------------
# Host-side constant builders (numpy): tap border masks & stride-2 selectors
# ---------------------------------------------------------------------------
def _make_tap_masks(H, W):
    """(9, H*W) 0/1 masks: tap t=(ki*3+kj) is valid at output (h, w) iff the
    padded-conv read (h+ki-1, w+kj-1) lies inside the image."""
    m = np.zeros((9, H * W), np.float32)
    for t in range(9):
        ki, kj = divmod(t, 3)
        for h in range(H):
            for w in range(W):
                r, c = h + ki - 1, w + kj - 1
                if 0 <= r < H and 0 <= c < W:
                    m[t, h * W + w] = 1.0
    return m


def _make_pool_matrix(H, W):
    """(H*W, Ho*Wo) 0/1 selector implementing the stride-2 subsampling of a
    stride-1 conv result (elementwise BN shift / LeakyReLU commutes with it)."""
    Ho, Wo = (H - 1) // 2 + 1, (W - 1) // 2 + 1
    P = np.zeros((H * W, Ho * Wo), np.float32)
    for ho in range(Ho):
        for wo in range(Wo):
            P[(2 * ho) * W + (2 * wo), ho * Wo + wo] = 1.0
    return P


# ---------------------------------------------------------------------------
# Fused kernel
# ---------------------------------------------------------------------------
def _shift_lanes(x, shift, size):
    """Static circular lane shift: out[:, m] = x[:, (m + shift) % size].
    Wrapped / cross-image reads are always zeroed by the tap masks."""
    k = shift % size
    if k == 0:
        return x
    return jnp.concatenate([x[:, k:], x[:, :k]], axis=1)


def _build_fused_kernel(cfgs, n_layers, n_res, n_pool, batch):
    """cfgs[i] = (cin, cout, stride, H, W, res_idx, pool_idx, shift_offset)."""

    def kernel(*refs):
        idx = 0
        x_ref = refs[idx]; idx += 1
        w_refs = refs[idx:idx + n_layers]; idx += n_layers
        shift_ref = refs[idx]; idx += 1
        mask_refs = refs[idx:idx + n_res]; idx += n_res
        pool_refs = refs[idx:idx + n_pool]; idx += n_pool
        wfc_ref = refs[idx]; idx += 1
        sel_ref = refs[idx]; idx += 1
        bfc_ref = refs[idx]; idx += 1
        feat_ref = refs[idx]; idx += 1
        cls_ref = refs[idx]; idx += 1

        shifts_all = shift_ref[...]          # (sum_Cout, 1): folded conv-bias + BN shift
        act = x_ref[...]                     # (1, B*H0*W0): whole batch, spatial on lanes

        for li, (cin, cout, stride, H, W, res_idx, pool_idx, off) in enumerate(cfgs):
            m_b = batch * H * W
            masks = mask_refs[res_idx][...]                 # (9, B*H*W)
            w = w_refs[li][...]                             # (Cout, 9*Cin), BN scale folded in

            # --- in-kernel im2col: 9 shifted + masked copies, concat along K
            cols = []
            for t in range(9):
                ki, kj = divmod(t, 3)
                sh = (ki - 1) * W + (kj - 1)
                xt = _shift_lanes(act, sh, m_b)             # (Cin, B*M)
                cols.append(xt * masks[t:t + 1, :])         # zero padding / wrap reads
            xcat = jnp.concatenate(cols, axis=0)            # (9*Cin, B*M)

            # --- one MXU matmul per layer (lane axis carries batch*spatial)
            acc = jnp.dot(w, xcat, preferred_element_type=jnp.float32)       # (Cout, B*M)

            # --- stride-2: subsample via block-diagonal 0/1 selector matmul
            if stride == 2 and pool_idx is not None:
                acc = jnp.dot(acc, pool_refs[pool_idx][...],
                              preferred_element_type=jnp.float32)            # (Cout, B*Mo)

            # --- folded eval-BatchNorm shift (scale already in w) + LeakyReLU(0.1)
            y = acc + shifts_all[off:off + cout, :]
            act = jnp.where(y >= 0.0, y, NEG_SLOPE * y)

        feat_ref[...] = act                                  # (C_last, B*Mf)

        # Classifier head: Linear(feat_dim, 1) + Sigmoid, per image.
        z = jnp.sum(act * wfc_ref[...], axis=0, keepdims=True)               # (1, B*Mf)
        z = jnp.dot(z, sel_ref[...], preferred_element_type=jnp.float32)     # (1, B)
        z = z + bfc_ref[...]
        cls_ref[...] = 1.0 / (1.0 + jnp.exp(-z))

    return kernel


# ---------------------------------------------------------------------------
# Parameter construction (deterministic; mirrors the torch module's shapes)
# ---------------------------------------------------------------------------
def init_params(key, input_size=(16, 16), channels_start=4):
    cs = channels_start
    channels = [1, cs, cs * 2, cs * 3, cs * 4, cs * 5]

    H, W = input_size
    cfgs = []
    weights_folded = []          # (Cout, 9*Cin), BN scale folded in
    shift_rows = []
    conv_w, conv_b, gammas, betas = [], [], [], []   # raw params for the reference
    res_list, masks = [], []
    pool_keys, pools = [], []
    off = 0

    for i in range(1, len(channels)):
        for (cin, cout, stride) in [(channels[i - 1], channels[i], 1),
                                    (channels[i], channels[i], 1),
                                    (channels[i], channels[i], 2)]:
            if (H, W) not in res_list:
                res_list.append((H, W))
                masks.append(_make_tap_masks(H, W))
            res_idx = res_list.index((H, W))

            key, k1, k2, k3, k4 = jax.random.split(key, 5)
            fan_in = cin * 9
            w = jax.random.normal(k1, (cout, cin, 3, 3), jnp.float32) / math.sqrt(fan_in)
            b = 0.01 * jax.random.normal(k2, (cout,), jnp.float32)
            gamma = 1.0 + 0.01 * jax.random.normal(k3, (cout,), jnp.float32)
            beta = 0.01 * jax.random.normal(k4, (cout,), jnp.float32)
            # TODO(synk): eval-mode BatchNorm with running_mean=0, running_var=1
            # folded into the conv; train-mode batch statistics are not modeled.
            scale = gamma / jnp.sqrt(1.0 + BN_EPS)
            shift = scale * b + beta

            # (Cout, Cin, 3, 3) -> (Cout, 9*Cin); column index = (ki*3+kj)*Cin + ci
            w2d = jnp.transpose(w, (0, 2, 3, 1)).reshape(cout, 9 * cin)
            weights_folded.append(w2d * scale[:, None])
            shift_rows.append(shift[:, None])
            conv_w.append(w); conv_b.append(b); gammas.append(gamma); betas.append(beta)

            Hin, Win = H, W
            pool_idx = None
            if stride == 2:
                Ho, Wo = (H - 1) // 2 + 1, (W - 1) // 2 + 1
                if (Ho, Wo) != (H, W):
                    if (H, W) not in pool_keys:
                        pool_keys.append((H, W))
                        pools.append(_make_pool_matrix(H, W))
                    pool_idx = pool_keys.index((H, W))
                H, W = Ho, Wo

            cfgs.append((cin, cout, stride, Hin, Win, res_idx, pool_idx, off))
            off += cout

    c_last = channels[-1]
    mf = H * W
    feat_dim = c_last * mf
    key, kfw, kfb = jax.random.split(key, 3)
    w_fc = jax.random.normal(kfw, (c_last, mf), jnp.float32) / math.sqrt(feat_dim)
    b_fc = (0.01 * jax.random.normal(kfb, (1,), jnp.float32)).reshape(1, 1)

    return dict(cfgs=cfgs, weights=weights_folded,
                shifts=jnp.concatenate(shift_rows, axis=0),
                masks=masks, pools=pools,          # numpy; batch-tiled at call time
                w_fc=w_fc, b_fc=b_fc,
                conv_w=conv_w, conv_b=conv_b, gammas=gammas, betas=betas,
                c_last=c_last, feat_spatial=mf)


# ---------------------------------------------------------------------------
# Discriminator forward: one fused pallas_call, whole batch in one step
# ---------------------------------------------------------------------------
def discriminator_forward(x_nchw, params):
    """Returns (classifier: (B,), features: (B, C*H*W)) matching the torch module.
    TODO(synk): Dropout(0.1) is eval-mode identity (not modeled stochastically)."""
    cfgs = params["cfgs"]
    weights = params["weights"]
    shifts = params["shifts"]
    masks_np = params["masks"]
    pools_np = params["pools"]
    w_fc = params["w_fc"]
    b_fc = params["b_fc"]
    c_last = params["c_last"]
    mf = params["feat_spatial"]

    B, cin0, H0, W0 = x_nchw.shape
    assert cin0 == 1
    M0 = H0 * W0
    x = x_nchw.astype(jnp.float32).reshape(1, B * M0)   # (Cin0=1, B*H0*W0)

    # Batch-tiled constants (host numpy -> compile-time constants under jit).
    masks_b = [jnp.asarray(np.tile(m, (1, B))) for m in masks_np]
    pools_b = [jnp.asarray(np.kron(np.eye(B, dtype=np.float32), p)) for p in pools_np]
    wfc_b = jnp.tile(w_fc, (1, B))                                       # (C_last, B*Mf)
    sel = jnp.asarray(np.kron(np.eye(B, dtype=np.float32),
                              np.ones((mf, 1), np.float32)))             # (B*Mf, B)

    kernel = _build_fused_kernel(cfgs, len(weights), len(masks_b), len(pools_b), B)
    inputs = [x, *weights, shifts, *masks_b, *pools_b, wfc_b, sel, b_fc]

    feats, cls = pl.pallas_call(
        kernel,
        out_shape=(
            jax.ShapeDtypeStruct((c_last, B * mf), jnp.float32),
            jax.ShapeDtypeStruct((1, B), jnp.float32),
        ),
    )(*inputs)

    # (C, B*Mf) -> torch NCHW-flatten order (B, C*Mf); tiny layout plumbing.
    features = feats.reshape(c_last, B, mf).transpose(1, 0, 2).reshape(B, c_last * mf)
    classifier = cls.reshape(B)
    return classifier, features


# ---------------------------------------------------------------------------
# Independent pure-JAX reference (un-fused conv/BN/LeakyReLU + Linear + Sigmoid)
# ---------------------------------------------------------------------------
def reference_forward(x_nchw, params):
    x = x_nchw.astype(jnp.float32)
    for li, (cin, cout, stride, H, W, *_rest) in enumerate(params["cfgs"]):
        w = params["conv_w"][li]
        b = params["conv_b"][li]
        gamma = params["gammas"][li]
        beta = params["betas"][li]
        y = jax.lax.conv_general_dilated(
            x, w, window_strides=(stride, stride), padding=[(1, 1), (1, 1)],
            dimension_numbers=("NCHW", "OIHW", "NCHW"),
            precision=jax.lax.Precision.HIGHEST)
        y = y + b[None, :, None, None]
        y = gamma[None, :, None, None] * y / jnp.sqrt(1.0 + BN_EPS) + beta[None, :, None, None]
        x = jnp.where(y >= 0.0, y, NEG_SLOPE * y)
    B = x.shape[0]
    feats = x.reshape(B, -1)
    z = jnp.dot(feats, params["w_fc"].reshape(-1, 1),
                precision=jax.lax.Precision.HIGHEST) + params["b_fc"][0, 0]
    cls = jax.nn.sigmoid(z).reshape(B)
    return cls, feats


# ---------------------------------------------------------------------------
if __name__ == "__main__":
    key = jax.random.PRNGKey(0)
    kx, kp = jax.random.split(key)

    input_size = (16, 16)
    channels_start = 4
    batch = 2

    x = jax.random.normal(kx, (batch, 1, *input_size), jnp.float32)  # NCHW, 1 channel
    params = init_params(kp, input_size=input_size, channels_start=channels_start)

    fwd = jax.jit(lambda xx: discriminator_forward(xx, params))
    classifier, features = fwd(x)
    classifier = jax.block_until_ready(classifier)
    features = jax.block_until_ready(features)

    feat_dim = params["c_last"] * params["feat_spatial"]
    assert classifier.shape == (batch,)
    assert features.shape == (batch, feat_dim)
    assert bool(jnp.all(jnp.isfinite(features)))
    assert bool(jnp.all((classifier >= 0.0) & (classifier <= 1.0)))

    # Numerical check against the independent lax.conv reference (same params).
    cls_ref, feat_ref = jax.jit(lambda xx: reference_forward(xx, params))(x)
    np.testing.assert_allclose(np.asarray(features), np.asarray(feat_ref),
                               rtol=5e-2, atol=1e-3)
    np.testing.assert_allclose(np.asarray(classifier), np.asarray(cls_ref),
                               rtol=5e-2, atol=1e-3)

    print("KERNEL_OK")
</pallas_src>

<mosaic_0001>
module attributes {stable_mosaic.version = 11 : i64} {
  func.func @kernel(%arg0: memref<1x512xf32, #tpu.memory_space<vmem>>, %arg1: memref<4x9xf32, #tpu.memory_space<vmem>>, %arg2: memref<4x36xf32, #tpu.memory_space<vmem>>, %arg3: memref<4x36xf32, #tpu.memory_space<vmem>>, %arg4: memref<8x36xf32, #tpu.memory_space<vmem>>, %arg5: memref<8x72xf32, #tpu.memory_space<vmem>>, %arg6: memref<8x72xf32, #tpu.memory_space<vmem>>, %arg7: memref<12x72xf32, #tpu.memory_space<vmem>>, %arg8: memref<12x108xf32, #tpu.memory_space<vmem>>, %arg9: memref<12x108xf32, #tpu.memory_space<vmem>>, %arg10: memref<16x108xf32, #tpu.memory_space<vmem>>, %arg11: memref<16x144xf32, #tpu.memory_space<vmem>>, %arg12: memref<16x144xf32, #tpu.memory_space<vmem>>, %arg13: memref<20x144xf32, #tpu.memory_space<vmem>>, %arg14: memref<20x180xf32, #tpu.memory_space<vmem>>, %arg15: memref<20x180xf32, #tpu.memory_space<vmem>>, %arg16: memref<180x1xf32, #tpu.memory_space<vmem>>, %arg17: memref<9x512xf32, #tpu.memory_space<vmem>>, %arg18: memref<9x128xf32, #tpu.memory_space<vmem>>, %arg19: memref<9x32xf32, #tpu.memory_space<vmem>>, %arg20: memref<9x8xf32, #tpu.memory_space<vmem>>, %arg21: memref<9x2xf32, #tpu.memory_space<vmem>>, %arg22: memref<512x128xf32, #tpu.memory_space<vmem>>, %arg23: memref<128x32xf32, #tpu.memory_space<vmem>>, %arg24: memref<32x8xf32, #tpu.memory_space<vmem>>, %arg25: memref<8x2xf32, #tpu.memory_space<vmem>>, %arg26: memref<20x2xf32, #tpu.memory_space<vmem>>, %arg27: memref<2x2xf32, #tpu.memory_space<vmem>>, %arg28: memref<1x1xf32, #tpu.memory_space<vmem>>, %arg29: memref<20x2xf32, #tpu.memory_space<vmem>>, %arg30: memref<1x2xf32, #tpu.memory_space<vmem>>) attributes {dimension_semantics = [], scalar_prefetch = 0 : i64, scratch_operands = 0 : i64, tpu.core_type = #tpu.core_type<tc>} {
    %c0 = arith.constant 0 : index
    %c0_0 = arith.constant 0 : index
    %0 = vector.load %arg16[%c0, %c0_0] : memref<180x1xf32, #tpu.memory_space<vmem>>, vector<180x1xf32>
    %c0_1 = arith.constant 0 : index
    %c0_2 = arith.constant 0 : index
    %1 = vector.load %arg0[%c0_1, %c0_2] : memref<1x512xf32, #tpu.memory_space<vmem>>, vector<1x512xf32>
    %c0_3 = arith.constant 0 : index
    %c0_4 = arith.constant 0 : index
    %2 = vector.load %arg17[%c0_3, %c0_4] : memref<9x512xf32, #tpu.memory_space<vmem>>, vector<9x512xf32>
    %c0_5 = arith.constant 0 : index
    %c0_6 = arith.constant 0 : index
    %3 = vector.load %arg1[%c0_5, %c0_6] : memref<4x9xf32, #tpu.memory_space<vmem>>, vector<4x9xf32>
    %4 = vector.extract_strided_slice %1 {offsets = [0, 495], sizes = [1, 17], strides = [1, 1]} : vector<1x512xf32> to vector<1x17xf32>
    %5 = vector.extract_strided_slice %1 {offsets = [0, 0], sizes = [1, 495], strides = [1, 1]} : vector<1x512xf32> to vector<1x495xf32>
    %6 = tpu.concatenate %4, %5 in 1 : vector<1x17xf32>, vector<1x495xf32> -> vector<1x512xf32>
    %7 = vector.extract_strided_slice %2 {offsets = [0, 0], sizes = [1, 512], strides = [1, 1]} : vector<9x512xf32> to vector<1x512xf32>
    %8 = arith.mulf %6, %7 : vector<1x512xf32>
    %9 = vector.extract_strided_slice %1 {offsets = [0, 496], sizes = [1, 16], strides = [1, 1]} : vector<1x512xf32> to vector<1x16xf32>
    %10 = vector.extract_strided_slice %1 {offsets = [0, 0], sizes = [1, 496], strides = [1, 1]} : vector<1x512xf32> to vector<1x496xf32>
    %11 = tpu.concatenate %9, %10 in 1 : vector<1x16xf32>, vector<1x496xf32> -> vector<1x512xf32>
    %12 = vector.extract_strided_slice %2 {offsets = [1, 0], sizes = [1, 512], strides = [1, 1]} : vector<9x512xf32> to vector<1x512xf32>
    %13 = arith.mulf %11, %12 : vector<1x512xf32>
    %14 = vector.extract_strided_slice %1 {offsets = [0, 497], sizes = [1, 15], strides = [1, 1]} : vector<1x512xf32> to vector<1x15xf32>
    %15 = vector.extract_strided_slice %1 {offsets = [0, 0], sizes = [1, 497], strides = [1, 1]} : vector<1x512xf32> to vector<1x497xf32>
    %16 = tpu.concatenate %14, %15 in 1 : vector<1x15xf32>, vector<1x497xf32> -> vector<1x512xf32>
    %17 = vector.extract_strided_slice %2 {offsets = [2, 0], sizes = [1, 512], strides = [1, 1]} : vector<9x512xf32> to vector<1x512xf32>
    %18 = arith.mulf %16, %17 : vector<1x512xf32>
    %19 = vector.extract_strided_slice %1 {offsets = [0, 511], sizes = [1, 1], strides = [1, 1]} : vector<1x512xf32> to vector<1x1xf32>
    %20 = vector.extract_strided_slice %1 {offsets = [0, 0], sizes = [1, 511], strides = [1, 1]} : vector<1x512xf32> to vector<1x511xf32>
    %21 = tpu.concatenate %19, %20 in 1 : vector<1x1xf32>, vector<1x511xf32> -> vector<1x512xf32>
    %22 = vector.extract_strided_slice %2 {offsets = [3, 0], sizes = [1, 512], strides = [1, 1]} : vector<9x512xf32> to vector<1x512xf32>
    %23 = arith.mulf %21, %22 : vector<1x512xf32>
    %24 = vector.extract_strided_slice %2 {offsets = [4, 0], sizes = [1, 512], strides = [1, 1]} : vector<9x512xf32> to vector<1x512xf32>
    %25 = arith.mulf %1, %24 : vector<1x512xf32>
    %26 = vector.extract_strided_slice %1 {offsets = [0, 1], sizes = [1, 511], strides = [1, 1]} : vector<1x512xf32> to vector<1x511xf32>
    %27 = vector.extract_strided_slice %1 {offsets = [0, 0], sizes = [1, 1], strides = [1, 1]} : vector<1x512xf32> to vector<1x1xf32>
    %28 = tpu.concatenate %26, %27 in 1 : vector<1x511xf32>, vector<1x1xf32> -> vector<1x512xf32>
    %29 = vector.extract_strided_slice %2 {offsets = [5, 0], sizes = [1, 512], strides = [1, 1]} : vector<9x512xf32> to vector<1x512xf32>
    %30 = arith.mulf %28, %29 : vector<1x512xf32>
    %31 = vector.extract_strided_slice %1 {offsets = [0, 15], sizes = [1, 497], strides = [1, 1]} : vector<1x512xf32> to vector<1x497xf32>
    %32 = vector.extract_strided_slice %1 {offsets = [0, 0], sizes = [1, 15], strides = [1, 1]} : vector<1x512xf32> to vector<1x15xf32>
    %33 = tpu.concatenate %31, %32 in 1 : vector<1x497xf32>, vector<1x15xf32> -> vector<1x512xf32>
    %34 = vector.extract_strided_slice %2 {offsets = [6, 0], sizes = [1, 512], strides = [1, 1]} : vector<9x512xf32> to vector<1x512xf32>
    %35 = arith.mulf %33, %34 : vector<1x512xf32>
    %36 = vector.extract_strided_slice %1 {offsets = [0, 16], sizes = [1, 496], strides = [1, 1]} : vector<1x512xf32> to vector<1x496xf32>
    %37 = vector.extract_strided_slice %1 {offsets = [0, 0], sizes = [1, 16], strides = [1, 1]} : vector<1x512xf32> to vector<1x16xf32>
    %38 = tpu.concatenate %36, %37 in 1 : vector<1x496xf32>, vector<1x16xf32> -> vector<1x512xf32>
    %39 = vector.extract_strided_slice %2 {offsets = [7, 0], sizes = [1, 512], strides = [1, 1]} : vector<9x512xf32> to vector<1x512xf32>
    %40 = arith.mulf %38, %39 : vector<1x512xf32>
    %41 = vector.extract_strided_slice %1 {offsets = [0, 17], sizes = [1, 495], strides = [1, 1]} : vector<1x512xf32> to vector<1x495xf32>
    %42 = vector.extract_strided_slice %1 {offsets = [0, 0], sizes = [1, 17], strides = [1, 1]} : vector<1x512xf32> to vector<1x17xf32>
    %43 = tpu.concatenate %41, %42 in 1 : vector<1x495xf32>, vector<1x17xf32> -> vector<1x512xf32>
    %44 = vector.extract_strided_slice %2 {offsets = [8, 0], sizes = [1, 512], strides = [1, 1]} : vector<9x512xf32> to vector<1x512xf32>
    %45 = arith.mulf %43, %44 : vector<1x512xf32>
    %46 = tpu.concatenate %8, %13, %18, %23, %25, %30, %35, %40, %45 in 0 : vector<1x512xf32>, vector<1x512xf32>, vector<1x512xf32>, vector<1x512xf32>, vector<1x512xf32>, vector<1x512xf32>, vector<1x512xf32>, vector<1x512xf32>, vector<1x512xf32> -> vector<9x512xf32>
    %cst = arith.constant dense<0.000000e+00> : vector<4x512xf32>
    %47 = tpu.matmul %3, %46, %cst {dimension_numbers = #tpu.dot_dimension_numbers<[1], [0], [0], [1], [0, 0, 1, 1], [], []>} : vector<4x9xf32>, vector<9x512xf32>, vector<4x512xf32> -> vector<4x512xf32>
    %48 = vector.extract_strided_slice %0 {offsets = [0, 0], sizes = [4, 1], strides = [1, 1]} : vector<180x1xf32> to vector<4x1xf32>
    %49 = vector.broadcast %48 : vector<4x1xf32> to vector<4x512xf32>
    %50 = arith.addf %47, %49 : vector<4x512xf32>
    %cst_7 = arith.constant 0.000000e+00 : f32
    %51 = vector.broadcast %cst_7 : f32 to vector<4x512xf32>
    %52 = arith.cmpf oge, %50, %51 : vector<4x512xf32>
    %cst_8 = arith.constant 1.000000e-01 : f32
    %53 = vector.broadcast %cst_8 : f32 to vector<4x512xf32>
    %54 = arith.mulf %53, %50 : vector<4x512xf32>
    %55 = arith.select %52, %50, %54 : vector<4x512xi1>, vector<4x512xf32>
    %c0_9 = arith.constant 0 : index
    %c0_10 = arith.constant 0 : index
    %56 = vector.load %arg17[%c0_9, %c0_10] : memref<9x512xf32, #tpu.memory_space<vmem>>, vector<9x512xf32>
    %c0_11 = arith.constant 0 : index
    %c0_12 = arith.constant 0 : index
    %57 = vector.load %arg2[%c0_11, %c0_12] : memref<4x36xf32, #tpu.memory_space<vmem>>, vector<4x36xf32>
    %58 = vector.extract_strided_slice %55 {offsets = [0, 495], sizes = [4, 17], strides = [1, 1]} : vector<4x512xf32> to vector<4x17xf32>
    %59 = vector.extract_strided_slice %55 {offsets = [0, 0], sizes = [4, 495], strides = [1, 1]} : vector<4x512xf32> to vector<4x495xf32>
    %60 = tpu.concatenate %58, %59 in 1 : vector<4x17xf32>, vector<4x495xf32> -> vector<4x512xf32>
    %61 = vector.extract_strided_slice %56 {offsets = [0, 0], sizes = [1, 512], strides = [1, 1]} : vector<9x512xf32> to vector<1x512xf32>
    %62 = vector.broadcast %61 : vector<1x512xf32> to vector<4x512xf32>
    %63 = arith.mulf %60, %62 : vector<4x512xf32>
    %64 = vector.extract_strided_slice %55 {offsets = [0, 496], sizes = [4, 16], strides = [1, 1]} : vector<4x512xf32> to vector<4x16xf32>
    %65 = vector.extract_strided_slice %55 {offsets = [0, 0], sizes = [4, 496], strides = [1, 1]} : vector<4x512xf32> to vector<4x496xf32>
    %66 = tpu.concatenate %64, %65 in 1 : vector<4x16xf32>, vector<4x496xf32> -> vector<4x512xf32>
    %67 = vector.extract_strided_slice %56 {offsets = [1, 0], sizes = [1, 512], strides = [1, 1]} : vector<9x512xf32> to vector<1x512xf32>
    %68 = vector.broadcast %67 : vector<1x512xf32> to vector<4x512xf32>
    %69 = arith.mulf %66, %68 : vector<4x512xf32>
    %70 = vector.extract_strided_slice %55 {offsets = [0, 497], sizes = [4, 15], strides = [1, 1]} : vector<4x512xf32> to vector<4x15xf32>
    %71 = vector.extract_strided_slice %55 {offsets = [0, 0], sizes = [4, 497], strides = [1, 1]} : vector<4x512xf32> to vector<4x497xf32>
    %72 = tpu.concatenate %70, %71 in 1 : vector<4x15xf32>, vector<4x497xf32> -> vector<4x512xf32>
    %73 = vector.extract_strided_slice %56 {offsets = [2, 0], sizes = [1, 512], strides = [1, 1]} : vector<9x512xf32> to vector<1x512xf32>
    %74 = vector.broadcast %73 : vector<1x512xf32> to vector<4x512xf32>
    %75 = arith.mulf %72, %74 : vector<4x512xf32>
    %76 = vector.extract_strided_slice %55 {offsets = [0, 511], sizes = [4, 1], strides = [1, 1]} : vector<4x512xf32> to vector<4x1xf32>
    %77 = vector.extract_strided_slice %55 {offsets = [0, 0], sizes = [4, 511], strides = [1, 1]} : vector<4x512xf32> to vector<4x511xf32>
    %78 = tpu.concatenate %76, %77 in 1 : vector<4x1xf32>, vector<4x511xf32> -> vector<4x512xf32>
    %79 = vector.extract_strided_slice %56 {offsets = [3, 0], sizes = [1, 512], strides = [1, 1]} : vector<9x512xf32> to vector<1x512xf32>
    %80 = vector.broadcast %79 : vector<1x512xf32> to vector<4x512xf32>
    %81 = arith.mulf %78, %80 : vector<4x512xf32>
    %82 = vector.extract_strided_slice %56 {offsets = [4, 0], sizes = [1, 512], strides = [1, 1]} : vector<9x512xf32> to vector<1x512xf32>
    %83 = vector.broadcast %82 : vector<1x512xf32> to vector<4x512xf32>
    %84 = arith.mulf %55, %83 : vector<4x512xf32>
    %85 = vector.extract_strided_slice %55 {offsets = [0, 1], sizes = [4, 511], strides = [1, 1]} : vector<4x512xf32> to vector<4x511xf32>
    %86 = vector.extract_strided_slice %55 {offsets = [0, 0], sizes = [4, 1], strides = [1, 1]} : vector<4x512xf32> to vector<4x1xf32>
    %87 = tpu.concatenate %85, %86 in 1 : vector<4x511xf32>, vector<4x1xf32> -> vector<4x512xf32>
    %88 = vector.extract_strided_slice %56 {offsets = [5, 0], sizes = [1, 512], strides = [1, 1]} : vector<9x512xf32> to vector<1x512xf32>
    %89 = vector.broadcast %88 : vector<1x512xf32> to vector<4x512xf32>
    %90 = arith.mulf %87, %89 : vector<4x512xf32>
    %91 = vector.extract_strided_slice %55 {offsets = [0, 15], sizes = [4, 497], strides = [1, 1]} : vector<4x512xf32> to vector<4x497xf32>
    %92 = vector.extract_strided_slice %55 {offsets = [0, 0], sizes = [4, 15], strides = [1, 1]} : vector<4x512xf32> to vector<4x15xf32>
    %93 = tpu.concatenate %91, %92 in 1 : vector<4x497xf32>, vector<4x15xf32> -> vector<4x512xf32>
    %94 = vector.extract_strided_slice %56 {offsets = [6, 0], sizes = [1, 512], strides = [1, 1]} : vector<9x512xf32> to vector<1x512xf32>
    %95 = vector.broadcast %94 : vector<1x512xf32> to vector<4x512xf32>
    %96 = arith.mulf %93, %95 : vector<4x512xf32>
    %97 = vector.extract_strided_slice %55 {offsets = [0, 16], sizes = [4, 496], strides = [1, 1]} : vector<4x512xf32> to vector<4x496xf32>
    %98 = vector.extract_strided_slice %55 {offsets = [0, 0], sizes = [4, 16], strides = [1, 1]} : vector<4x512xf32> to vector<4x16xf32>
    %99 = tpu.concatenate %97, %98 in 1 : vector<4x496xf32>, vector<4x16xf32> -> vector<4x512xf32>
    %100 = vector.extract_strided_slice %56 {offsets = [7, 0], sizes = [1, 512], strides = [1, 1]} : vector<9x512xf32> to vector<1x512xf32>
    %101 = vector.broadcast %100 : vector<1x512xf32> to vector<4x512xf32>
    %102 = arith.mulf %99, %101 : vector<4x512xf32>
    %103 = vector.extract_strided_slice %55 {offsets = [0, 17], sizes = [4, 495], strides = [1, 1]} : vector<4x512xf32> to vector<4x495xf32>
    %104 = vector.extract_strided_slice %55 {offsets = [0, 0], sizes = [4, 17], strides = [1, 1]} : vector<4x512xf32> to vector<4x17xf32>
    %105 = tpu.concatenate %103, %104 in 1 : vector<4x495xf32>, vector<4x17xf32> -> vector<4x512xf32>
    %106 = vector.extract_strided_slice %56 {offsets = [8, 0], sizes = [1, 512], strides = [1, 1]} : vector<9x512xf32> to vector<1x512xf32>
    %107 = vector.broadcast %106 : vector<1x512xf32> to vector<4x512xf32>
    %108 = arith.mulf %105, %107 : vector<4x512xf32>
    %109 = tpu.concatenate %63, %69, %75, %81, %84, %90, %96, %102, %108 in 0 : vector<4x512xf32>, vector<4x512xf32>, vector<4x512xf32>, vector<4x512xf32>, vector<4x512xf32>, vector<4x512xf32>, vector<4x512xf32>, vector<4x512xf32>, vector<4x512xf32> -> vector<36x512xf32>
    %cst_13 = arith.constant dense<0.000000e+00> : vector<4x512xf32>
    %110 = tpu.matmul %57, %109, %cst_13 {dimension_numbers = #tpu.dot_dimension_numbers<[1], [0], [0], [1], [0, 0, 1, 1], [], []>} : vector<4x36xf32>, vector<36x512xf32>, vector<4x512xf32> -> vector<4x512xf32>
    %111 = vector.extract_strided_slice %0 {offsets = [4, 0], sizes = [4, 1], strides = [1, 1]} : vector<180x1xf32> to vector<4x1xf32>
    %112 = vector.broadcast %111 : vector<4x1xf32> to vector<4x512xf32>
    %113 = arith.addf %110, %112 : vector<4x512xf32>
    %cst_14 = arith.constant 0.000000e+00 : f32
    %114 = vector.broadcast %cst_14 : f32 to vector<4x512xf32>
    %115 = arith.cmpf oge, %113, %114 : vector<4x512xf32>
    %cst_15 = arith.constant 1.000000e-01 : f32
    %116 = vector.broadcast %cst_15 : f32 to vector<4x512xf32>
    %117 = arith.mulf %116, %113 : vector<4x512xf32>
    %118 = arith.select %115, %113, %117 : vector<4x512xi1>, vector<4x512xf32>
    %c0_16 = arith.constant 0 : index
    %c0_17 = arith.constant 0 : index
    %119 = vector.load %arg17[%c0_16, %c0_17] : memref<9x512xf32, #tpu.memory_space<vmem>>, vector<9x512xf32>
    %c0_18 = arith.constant 0 : index
    %c0_19 = arith.constant 0 : index
    %120 = vector.load %arg3[%c0_18, %c0_19] : memref<4x36xf32, #tpu.memory_space<vmem>>, vector<4x36xf32>
    %121 = vector.extract_strided_slice %118 {offsets = [0, 495], sizes = [4, 17], strides = [1, 1]} : vector<4x512xf32> to vector<4x17xf32>
    %122 = vector.extract_strided_slice %118 {offsets = [0, 0], sizes = [4, 495], strides = [1, 1]} : vector<4x512xf32> to vector<4x495xf32>
    %123 = tpu.concatenate %121, %122 in 1 : vector<4x17xf32>, vector<4x495xf32> -> vector<4x512xf32>
    %124 = vector.extract_strided_slice %119 {offsets = [0, 0], sizes = [1, 512], strides = [1, 1]} : vector<9x512xf32> to vector<1x512xf32>
    %125 = vector.broadcast %124 : vector<1x512xf32> to vector<4x512xf32>
    %126 = arith.mulf %123, %125 : vector<4x512xf32>
    %127 = vector.extract_strided_slice %118 {offsets = [0, 496], sizes = [4, 16], strides = [1, 1]} : vector<4x512xf32> to vector<4x16xf32>
    %128 = vector.extract_strided_slice %118 {offsets = [0, 0], sizes = [4, 496], strides = [1, 1]} : vector<4x512xf32> to vector<4x496xf32>
    %129 = tpu.concatenate %127, %128 in 1 : vector<4x16xf32>, vector<4x496xf32> -> vector<4x512xf32>
    %130 = vector.extract_strided_slice %119 {offsets = [1, 0], sizes = [1, 512], strides = [1, 1]} : vector<9x512xf32> to vector<1x512xf32>
    %131 = vector.broadcast %130 : vector<1x512xf32> to vector<4x512xf32>
    %132 = arith.mulf %129, %131 : vector<4x512xf32>
    %133 = vector.extract_strided_slice %118 {offsets = [0, 497], sizes = [4, 15], strides = [1, 1]} : vector<4x512xf32> to vector<4x15xf32>
    %134 = vector.extract_strided_slice %118 {offsets = [0, 0], sizes = [4, 497], strides = [1, 1]} : vector<4x512xf32> to vector<4x497xf32>
    %135 = tpu.concatenate %133, %134 in 1 : vector<4x15xf32>, vector<4x497xf32> -> vector<4x512xf32>
    %136 = vector.extract_strided_slice %119 {offsets = [2, 0], sizes = [1, 512], strides = [1, 1]} : vector<9x512xf32> to vector<1x512xf32>
    %137 = vector.broadcast %136 : vector<1x512xf32> to vector<4x512xf32>
    %138 = arith.mulf %135, %137 : vector<4x512xf32>
    %139 = vector.extract_strided_slice %118 {offsets = [0, 511], sizes = [4, 1], strides = [1, 1]} : vector<4x512xf32> to vector<4x1xf32>
    %140 = vector.extract_strided_slice %118 {offsets = [0, 0], sizes = [4, 511], strides = [1, 1]} : vector<4x512xf32> to vector<4x511xf32>
    %141 = tpu.concatenate %139, %140 in 1 : vector<4x1xf32>, vector<4x511xf32> -> vector<4x512xf32>
    %142 = vector.extract_strided_slice %119 {offsets = [3, 0], sizes = [1, 512], strides = [1, 1]} : vector<9x512xf32> to vector<1x512xf32>
    %143 = vector.broadcast %142 : vector<1x512xf32> to vector<4x512xf32>
    %144 = arith.mulf %141, %143 : vector<4x512xf32>
    %145 = vector.extract_strided_slice %119 {offsets = [4, 0], sizes = [1, 512], strides = [1, 1]} : vector<9x512xf32> to vector<1x512xf32>
    %146 = vector.broadcast %145 : vector<1x512xf32> to vector<4x512xf32>
    %147 = arith.mulf %118, %146 : vector<4x512xf32>
    %148 = vector.extract_strided_slice %118 {offsets = [0, 1], sizes = [4, 511], strides = [1, 1]} : vector<4x512xf32> to vector<4x511xf32>
    %149 = vector.extract_strided_slice %118 {offsets = [0, 0], sizes = [4, 1], strides = [1, 1]} : vector<4x512xf32> to vector<4x1xf32>
    %150 = tpu.concatenate %148, %149 in 1 : vector<4x511xf32>, vector<4x1xf32> -> vector<4x512xf32>
    %151 = vector.extract_strided_slice %119 {offsets = [5, 0], sizes = [1, 512], strides = [1, 1]} : vector<9x512xf32> to vector<1x512xf32>
    %152 = vector.broadcast %151 : vector<1x512xf32> to vector<4x512xf32>
    %153 = arith.mulf %150, %152 : vector<4x512xf32>
    %154 = vector.extract_strided_slice %118 {offsets = [0, 15], sizes = [4, 497], strides = [1, 1]} : vector<4x512xf32> to vector<4x497xf32>
    %155 = vector.extract_strided_slice %118 {offsets = [0, 0], sizes = [4, 15], strides = [1, 1]} : vector<4x512xf32> to vector<4x15xf32>
    %156 = tpu.concatenate %154, %155 in 1 : vector<4x497xf32>, vector<4x15xf32> -> vector<4x512xf32>
    %157 = vector.extract_strided_slice %119 {offsets = [6, 0], sizes = [1, 512], strides = [1, 1]} : vector<9x512xf32> to vector<1x512xf32>
    %158 = vector.broadcast %157 : vector<1x512xf32> to vector<4x512xf32>
    %159 = arith.mulf %156, %158 : vector<4x512xf32>
    %160 = vector.extract_strided_slice %118 {offsets = [0, 16], sizes = [4, 496], strides = [1, 1]} : vector<4x512xf32> to vector<4x496xf32>
    %161 = vector.extract_strided_slice %118 {offsets = [0, 0], sizes = [4, 16], strides = [1, 1]} : vector<4x512xf32> to vector<4x16xf32>
    %162 = tpu.concatenate %160, %161 in 1 : vector<4x496xf32>, vector<4x16xf32> -> vector<4x512xf32>
    %163 = vector.extract_strided_slice %119 {offsets = [7, 0], sizes = [1, 512], strides = [1, 1]} : vector<9x512xf32> to vector<1x512xf32>
    %164 = vector.broadcast %163 : vector<1x512xf32> to vector<4x512xf32>
    %165 = arith.mulf %162, %164 : vector<4x512xf32>
    %166 = vector.extract_strided_slice %118 {offsets = [0, 17], sizes = [4, 495], strides = [1, 1]} : vector<4x512xf32> to vector<4x495xf32>
    %167 = vector.extract_strided_slice %118 {offsets = [0, 0], sizes = [4, 17], strides = [1, 1]} : vector<4x512xf32> to vector<4x17xf32>
    %168 = tpu.concatenate %166, %167 in 1 : vector<4x495xf32>, vector<4x17xf32> -> vector<4x512xf32>
    %169 = vector.extract_strided_slice %119 {offsets = [8, 0], sizes = [1, 512], strides = [1, 1]} : vector<9x512xf32> to vector<1x512xf32>
    %170 = vector.broadcast %169 : vector<1x512xf32> to vector<4x512xf32>
    %171 = arith.mulf %168, %170 : vector<4x512xf32>
    %172 = tpu.concatenate %126, %132, %138, %144, %147, %153, %159, %165, %171 in 0 : vector<4x512xf32>, vector<4x512xf32>, vector<4x512xf32>, vector<4x512xf32>, vector<4x512xf32>, vector<4x512xf32>, vector<4x512xf32>, vector<4x512xf32>, vector<4x512xf32> -> vector<36x512xf32>
    %cst_20 = arith.constant dense<0.000000e+00> : vector<4x512xf32>
    %173 = tpu.matmul %120, %172, %cst_20 {dimension_numbers = #tpu.dot_dimension_numbers<[1], [0], [0], [1], [0, 0, 1, 1], [], []>} : vector<4x36xf32>, vector<36x512xf32>, vector<4x512xf32> -> vector<4x512xf32>
    %c0_21 = arith.constant 0 : index
    %c0_22 = arith.constant 0 : index
    %174 = vector.load %arg22[%c0_21, %c0_22] : memref<512x128xf32, #tpu.memory_space<vmem>>, vector<512x128xf32>
    %cst_23 = arith.constant dense<0.000000e+00> : vector<4x128xf32>
    %175 = tpu.matmul %173, %174, %cst_23 {dimension_numbers = #tpu.dot_dimension_numbers<[1], [0], [0], [1], [0, 0, 1, 1], [], []>} : vector<4x512xf32>, vector<512x128xf32>, vector<4x128xf32> -> vector<4x128xf32>
    %176 = vector.extract_strided_slice %0 {offsets = [8, 0], sizes = [4, 1], strides = [1, 1]} : vector<180x1xf32> to vector<4x1xf32>
    %177 = vector.broadcast %176 : vector<4x1xf32> to vector<4x128xf32>
    %178 = arith.addf %175, %177 : vector<4x128xf32>
    %cst_24 = arith.constant 0.000000e+00 : f32
    %179 = vector.broadcast %cst_24 : f32 to vector<4x128xf32>
    %180 = arith.cmpf oge, %178, %179 : vector<4x128xf32>
    %cst_25 = arith.constant 1.000000e-01 : f32
    %181 = vector.broadcast %cst_25 : f32 to vector<4x128xf32>
    %182 = arith.mulf %181, %178 : vector<4x128xf32>
    %183 = arith.select %180, %178, %182 : vector<4x128xi1>, vector<4x128xf32>
    %c0_26 = arith.constant 0 : index
    %c0_27 = arith.constant 0 : index
    %184 = vector.load %arg18[%c0_26, %c0_27] : memref<9x128xf32, #tpu.memory_space<vmem>>, vector<9x128xf32>
    %c0_28 = arith.constant 0 : index
    %c0_29 = arith.constant 0 : index
    %185 = vector.load %arg4[%c0_28, %c0_29] : memref<8x36xf32, #tpu.memory_space<vmem>>, vector<8x36xf32>
    %186 = vector.extract_strided_slice %183 {offsets = [0, 119], sizes = [4, 9], strides = [1, 1]} : vector<4x128xf32> to vector<4x9xf32>
    %187 = vector.extract_strided_slice %183 {offsets = [0, 0], sizes = [4, 119], strides = [1, 1]} : vector<4x128xf32> to vector<4x119xf32>
    %188 = tpu.concatenate %186, %187 in 1 : vector<4x9xf32>, vector<4x119xf32> -> vector<4x128xf32>
    %189 = vector.extract_strided_slice %184 {offsets = [0, 0], sizes = [1, 128], strides = [1, 1]} : vector<9x128xf32> to vector<1x128xf32>
    %190 = vector.broadcast %189 : vector<1x128xf32> to vector<4x128xf32>
    %191 = arith.mulf %188, %190 : vector<4x128xf32>
    %192 = vector.extract_strided_slice %183 {offsets = [0, 120], sizes = [4, 8], strides = [1, 1]} : vector<4x128xf32> to vector<4x8xf32>
    %193 = vector.extract_strided_slice %183 {offsets = [0, 0], sizes = [4, 120], strides = [1, 1]} : vector<4x128xf32> to vector<4x120xf32>
    %194 = tpu.concatenate %192, %193 in 1 : vector<4x8xf32>, vector<4x120xf32> -> vector<4x128xf32>
    %195 = vector.extract_strided_slice %184 {offsets = [1, 0], sizes = [1, 128], strides = [1, 1]} : vector<9x128xf32> to vector<1x128xf32>
    %196 = vector.broadcast %195 : vector<1x128xf32> to vector<4x128xf32>
    %197 = arith.mulf %194, %196 : vector<4x128xf32>
    %198 = vector.extract_strided_slice %183 {offsets = [0, 121], sizes = [4, 7], strides = [1, 1]} : vector<4x128xf32> to vector<4x7xf32>
    %199 = vector.extract_strided_slice %183 {offsets = [0, 0], sizes = [4, 121], strides = [1, 1]} : vector<4x128xf32> to vector<4x121xf32>
    %200 = tpu.concatenate %198, %199 in 1 : vector<4x7xf32>, vector<4x121xf32> -> vector<4x128xf32>
    %201 = vector.extract_strided_slice %184 {offsets = [2, 0], sizes = [1, 128], strides = [1, 1]} : vector<9x128xf32> to vector<1x128xf32>
    %202 = vector.broadcast %201 : vector<1x128xf32> to vector<4x128xf32>
    %203 = arith.mulf %200, %202 : vector<4x128xf32>
    %204 = vector.extract_strided_slice %183 {offsets = [0, 127], sizes = [4, 1], strides = [1, 1]} : vector<4x128xf32> to vector<4x1xf32>
    %205 = vector.extract_strided_slice %183 {offsets = [0, 0], sizes = [4, 127], strides = [1, 1]} : vector<4x128xf32> to vector<4x127xf32>
    %206 = tpu.concatenate %204, %205 in 1 : vector<4x1xf32>, vector<4x127xf32> -> vector<4x128xf32>
    %207 = vector.extract_strided_slice %184 {offsets = [3, 0], sizes = [1, 128], strides = [1, 1]} : vector<9x128xf32> to vector<1x128xf32>
    %208 = vector.broadcast %207 : vector<1x128xf32> to vector<4x128xf32>
    %209 = arith.mulf %206, %208 : vector<4x128xf32>
    %210 = vector.extract_strided_slice %184 {offsets = [4, 0], sizes = [1, 128], strides = [1, 1]} : vector<9x128xf32> to vector<1x128xf32>
    %211 = vector.broadcast %210 : vector<1x128xf32> to vector<4x128xf32>
    %212 = arith.mulf %183, %211 : vector<4x128xf32>
    %213 = vector.extract_strided_slice %183 {offsets = [0, 1], sizes = [4, 127], strides = [1, 1]} : vector<4x128xf32> to vector<4x127xf32>
    %214 = vector.extract_strided_slice %183 {offsets = [0, 0], sizes = [4, 1], strides = [1, 1]} : vector<4x128xf32> to vector<4x1xf32>
    %215 = tpu.concatenate %213, %214 in 1 : vector<4x127xf32>, vector<4x1xf32> -> vector<4x128xf32>
    %216 = vector.extract_strided_slice %184 {offsets = [5, 0], sizes = [1, 128], strides = [1, 1]} : vector<9x128xf32> to vector<1x128xf32>
    %217 = vector.broadcast %216 : vector<1x128xf32> to vector<4x128xf32>
    %218 = arith.mulf %215, %217 : vector<4x128xf32>
    %219 = vector.extract_strided_slice %183 {offsets = [0, 7], sizes = [4, 121], strides = [1, 1]} : vector<4x128xf32> to vector<4x121xf32>
    %220 = vector.extract_strided_slice %183 {offsets = [0, 0], sizes = [4, 7], strides = [1, 1]} : vector<4x128xf32> to vector<4x7xf32>
    %221 = tpu.concatenate %219, %220 in 1 : vector<4x121xf32>, vector<4x7xf32> -> vector<4x128xf32>
    %222 = vector.extract_strided_slice %184 {offsets = [6, 0], sizes = [1, 128], strides = [1, 1]} : vector<9x128xf32> to vector<1x128xf32>
    %223 = vector.broadcast %222 : vector<1x128xf32> to vector<4x128xf32>
    %224 = arith.mulf %221, %223 : vector<4x128xf32>
    %225 = vector.extract_strided_slice %183 {offsets = [0, 8], sizes = [4, 120], strides = [1, 1]} : vector<4x128xf32> to vector<4x120xf32>
    %226 = vector.extract_strided_slice %183 {offsets = [0, 0], sizes = [4, 8], strides = [1, 1]} : vector<4x128xf32> to vector<4x8xf32>
    %227 = tpu.concatenate %225, %226 in 1 : vector<4x120xf32>, vector<4x8xf32> -> vector<4x128xf32>
    %228 = vector.extract_strided_slice %184 {offsets = [7, 0], sizes = [1, 128], strides = [1, 1]} : vector<9x128xf32> to vector<1x128xf32>
    %229 = vector.broadcast %228 : vector<1x128xf32> to vector<4x128xf32>
    %230 = arith.mulf %227, %229 : vector<4x128xf32>
    %231 = vector.extract_strided_slice %183 {offsets = [0, 9], sizes = [4, 119], strides = [1, 1]} : vector<4x128xf32> to vector<4x119xf32>
    %232 = vector.extract_strided_slice %183 {offsets = [0, 0], sizes = [4, 9], strides = [1, 1]} : vector<4x128xf32> to vector<4x9xf32>
    %233 = tpu.concatenate %231, %232 in 1 : vector<4x119xf32>, vector<4x9xf32> -> vector<4x128xf32>
    %234 = vector.extract_strided_slice %184 {offsets = [8, 0], sizes = [1, 128], strides = [1, 1]} : vector<9x128xf32> to vector<1x128xf32>
    %235 = vector.broadcast %234 : vector<1x128xf32> to vector<4x128xf32>
    %236 = arith.mulf %233, %235 : vector<4x128xf32>
    %237 = tpu.concatenate %191, %197, %203, %209, %212, %218, %224, %230, %236 in 0 : vector<4x128xf32>, vector<4x128xf32>, vector<4x128xf32>, vector<4x128xf32>, vector<4x128xf32>, vector<4x128xf32>, vector<4x128xf32>, vector<4x128xf32>, vector<4x128xf32> -> vector<36x128xf32>
    %cst_30 = arith.constant dense<0.000000e+00> : vector<8x128xf32>
    %238 = tpu.matmul %185, %237, %cst_30 {dimension_numbers = #tpu.dot_dimension_numbers<[1], [0], [0], [1], [0, 0, 1, 1], [], []>} : vector<8x36xf32>, vector<36x128xf32>, vector<8x128xf32> -> vector<8x128xf32>
    %239 = vector.extract_strided_slice %0 {offsets = [12, 0], sizes = [8, 1], strides = [1, 1]} : vector<180x1xf32> to vector<8x1xf32>
    %240 = vector.broadcast %239 : vector<8x1xf32> to vector<8x128xf32>
    %241 = arith.addf %238, %240 : vector<8x128xf32>
    %cst_31 = arith.constant 0.000000e+00 : f32
    %242 = vector.broadcast %cst_31 : f32 to vector<8x128xf32>
    %243 = arith.cmpf oge, %241, %242 : vector<8x128xf32>
    %cst_32 = arith.constant 1.000000e-01 : f32
    %244 = vector.broadcast %cst_32 : f32 to vector<8x128xf32>
    %245 = arith.mulf %244, %241 : vector<8x128xf32>
    %246 = arith.select %243, %241, %245 : vector<8x128xi1>, vector<8x128xf32>
    %c0_33 = arith.constant 0 : index
    %c0_34 = arith.constant 0 : index
    %247 = vector.load %arg18[%c0_33, %c0_34] : memref<9x128xf32, #tpu.memory_space<vmem>>, vector<9x128xf32>
    %c0_35 = arith.constant 0 : index
    %c0_36 = arith.constant 0 : index
    %248 = vector.load %arg5[%c0_35, %c0_36] : memref<8x72xf32, #tpu.memory_space<vmem>>, vector<8x72xf32>
    %249 = vector.extract_strided_slice %246 {offsets = [0, 119], sizes = [8, 9], strides = [1, 1]} : vector<8x128xf32> to vector<8x9xf32>
    %250 = vector.extract_strided_slice %246 {offsets = [0, 0], sizes = [8, 119], strides = [1, 1]} : vector<8x128xf32> to vector<8x119xf32>
    %251 = tpu.concatenate %249, %250 in 1 : vector<8x9xf32>, vector<8x119xf32> -> vector<8x128xf32>
    %252 = vector.extract_strided_slice %247 {offsets = [0, 0], sizes = [1, 128], strides = [1, 1]} : vector<9x128xf32> to vector<1x128xf32>
    %253 = vector.broadcast %252 : vector<1x128xf32> to vector<8x128xf32>
    %254 = arith.mulf %251, %253 : vector<8x128xf32>
    %255 = vector.extract_strided_slice %246 {offsets = [0, 120], sizes = [8, 8], strides = [1, 1]} : vector<8x128xf32> to vector<8x8xf32>
    %256 = vector.extract_strided_slice %246 {offsets = [0, 0], sizes = [8, 120], strides = [1, 1]} : vector<8x128xf32> to vector<8x120xf32>
    %257 = tpu.concatenate %255, %256 in 1 : vector<8x8xf32>, vector<8x120xf32> -> vector<8x128xf32>
    %258 = vector.extract_strided_slice %247 {offsets = [1, 0], sizes = [1, 128], strides = [1, 1]} : vector<9x128xf32> to vector<1x128xf32>
    %259 = vector.broadcast %258 : vector<1x128xf32> to vector<8x128xf32>
    %260 = arith.mulf %257, %259 : vector<8x128xf32>
    %261 = vector.extract_strided_slice %246 {offsets = [0, 121], sizes = [8, 7], strides = [1, 1]} : vector<8x128xf32> to vector<8x7xf32>
    %262 = vector.extract_strided_slice %246 {offsets = [0, 0], sizes = [8, 121], strides = [1, 1]} : vector<8x128xf32> to vector<8x121xf32>
    %263 = tpu.concatenate %261, %262 in 1 : vector<8x7xf32>, vector<8x121xf32> -> vector<8x128xf32>
    %264 = vector.extract_strided_slice %247 {offsets = [2, 0], sizes = [1, 128], strides = [1, 1]} : vector<9x128xf32> to vector<1x128xf32>
    %265 = vector.broadcast %264 : vector<1x128xf32> to vector<8x128xf32>
    %266 = arith.mulf %263, %265 : vector<8x128xf32>
    %267 = vector.extract_strided_slice %246 {offsets = [0, 127], sizes = [8, 1], strides = [1, 1]} : vector<8x128xf32> to vector<8x1xf32>
    %268 = vector.extract_strided_slice %246 {offsets = [0, 0], sizes = [8, 127], strides = [1, 1]} : vector<8x128xf32> to vector<8x127xf32>
    %269 = tpu.concatenate %267, %268 in 1 : vector<8x1xf32>, vector<8x127xf32> -> vector<8x128xf32>
    %270 = vector.extract_strided_slice %247 {offsets = [3, 0], sizes = [1, 128], strides = [1, 1]} : vector<9x128xf32> to vector<1x128xf32>
    %271 = vector.broadcast %270 : vector<1x128xf32> to vector<8x128xf32>
    %272 = arith.mulf %269, %271 : vector<8x128xf32>
    %273 = vector.extract_strided_slice %247 {offsets = [4, 0], sizes = [1, 128], strides = [1, 1]} : vector<9x128xf32> to vector<1x128xf32>
    %274 = vector.broadcast %273 : vector<1x128xf32> to vector<8x128xf32>
    %275 = arith.mulf %246, %274 : vector<8x128xf32>
    %276 = vector.extract_strided_slice %246 {offsets = [0, 1], sizes = [8, 127], strides = [1, 1]} : vector<8x128xf32> to vector<8x127xf32>
    %277 = vector.extract_strided_slice %246 {offsets = [0, 0], sizes = [8, 1], strides = [1, 1]} : vector<8x128xf32> to vector<8x1xf32>
    %278 = tpu.concatenate %276, %277 in 1 : vector<8x127xf32>, vector<8x1xf32> -> vector<8x128xf32>
    %279 = vector.extract_strided_slice %247 {offsets = [5, 0], sizes = [1, 128], strides = [1, 1]} : vector<9x128xf32> to vector<1x128xf32>
    %280 = vector.broadcast %279 : vector<1x128xf32> to vector<8x128xf32>
    %281 = arith.mulf %278, %280 : vector<8x128xf32>
    %282 = vector.extract_strided_slice %246 {offsets = [0, 7], sizes = [8, 121], strides = [1, 1]} : vector<8x128xf32> to vector<8x121xf32>
    %283 = vector.extract_strided_slice %246 {offsets = [0, 0], sizes = [8, 7], strides = [1, 1]} : vector<8x128xf32> to vector<8x7xf32>
    %284 = tpu.concatenate %282, %283 in 1 : vector<8x121xf32>, vector<8x7xf32> -> vector<8x128xf32>
    %285 = vector.extract_strided_slice %247 {offsets = [6, 0], sizes = [1, 128], strides = [1, 1]} : vector<9x128xf32> to vector<1x128xf32>
    %286 = vector.broadcast %285 : vector<1x128xf32> to vector<8x128xf32>
    %287 = arith.mulf %284, %286 : vector<8x128xf32>
    %288 = vector.extract_strided_slice %246 {offsets = [0, 8], sizes = [8, 120], strides = [1, 1]} : vector<8x128xf32> to vector<8x120xf32>
    %289 = vector.extract_strided_slice %246 {offsets = [0, 0], sizes = [8, 8], strides = [1, 1]} : vector<8x128xf32> to vector<8x8xf32>
    %290 = tpu.concatenate %288, %289 in 1 : vector<8x120xf32>, vector<8x8xf32> -> vector<8x128xf32>
    %291 = vector.extract_strided_slice %247 {offsets = [7, 0], sizes = [1, 128], strides = [1, 1]} : vector<9x128xf32> to vector<1x128xf32>
    %292 = vector.broadcast %291 : vector<1x128xf32> to vector<8x128xf32>
    %293 = arith.mulf %290, %292 : vector<8x128xf32>
    %294 = vector.extract_strided_slice %246 {offsets = [0, 9], sizes = [8, 119], strides = [1, 1]} : vector<8x128xf32> to vector<8x119xf32>
    %295 = vector.extract_strided_slice %246 {offsets = [0, 0], sizes = [8, 9], strides = [1, 1]} : vector<8x128xf32> to vector<8x9xf32>
    %296 = tpu.concatenate %294, %295 in 1 : vector<8x119xf32>, vector<8x9xf32> -> vector<8x128xf32>
    %297 = vector.extract_strided_slice %247 {offsets = [8, 0], sizes = [1, 128], strides = [1, 1]} : vector<9x128xf32> to vector<1x128xf32>
    %298 = vector.broadcast %297 : vector<1x128xf32> to vector<8x128xf32>
    %299 = arith.mulf %296, %298 : vector<8x128xf32>
    %300 = tpu.concatenate %254, %260, %266, %272, %275, %281, %287, %293, %299 in 0 : vector<8x128xf32>, vector<8x128xf32>, vector<8x128xf32>, vector<8x128xf32>, vector<8x128xf32>, vector<8x128xf32>, vector<8x128xf32>, vector<8x128xf32>, vector<8x128xf32> -> vector<72x128xf32>
    %cst_37 = arith.constant dense<0.000000e+00> : vector<8x128xf32>
    %301 = tpu.matmul %248, %300, %cst_37 {dimension_numbers = #tpu.dot_dimension_numbers<[1], [0], [0], [1], [0, 0, 1, 1], [], []>} : vector<8x72xf32>, vector<72x128xf32>, vector<8x128xf32> -> vector<8x128xf32>
    %302 = vector.extract_strided_slice %0 {offsets = [20, 0], sizes = [8, 1], strides = [1, 1]} : vector<180x1xf32> to vector<8x1xf32>
    %303 = vector.broadcast %302 : vector<8x1xf32> to vector<8x128xf32>
    %304 = arith.addf %301, %303 : vector<8x128xf32>
    %cst_38 = arith.constant 0.000000e+00 : f32
    %305 = vector.broadcast %cst_38 : f32 to vector<8x128xf32>
    %306 = arith.cmpf oge, %304, %305 : vector<8x128xf32>
    %cst_39 = arith.constant 1.000000e-01 : f32
    %307 = vector.broadcast %cst_39 : f32 to vector<8x128xf32>
    %308 = arith.mulf %307, %304 : vector<8x128xf32>
    %309 = arith.select %306, %304, %308 : vector<8x128xi1>, vector<8x128xf32>
    %c0_40 = arith.constant 0 : index
    %c0_41 = arith.constant 0 : index
    %310 = vector.load %arg18[%c0_40, %c0_41] : memref<9x128xf32, #tpu.memory_space<vmem>>, vector<9x128xf32>
    %c0_42 = arith.constant 0 : index
    %c0_43 = arith.constant 0 : index
    %311 = vector.load %arg6[%c0_42, %c0_43] : memref<8x72xf32, #tpu.memory_space<vmem>>, vector<8x72xf32>
    %312 = vector.extract_strided_slice %309 {offsets = [0, 119], sizes = [8, 9], strides = [1, 1]} : vector<8x128xf32> to vector<8x9xf32>
    %313 = vector.extract_strided_slice %309 {offsets = [0, 0], sizes = [8, 119], strides = [1, 1]} : vector<8x128xf32> to vector<8x119xf32>
    %314 = tpu.concatenate %312, %313 in 1 : vector<8x9xf32>, vector<8x119xf32> -> vector<8x128xf32>
    %315 = vector.extract_strided_slice %310 {offsets = [0, 0], sizes = [1, 128], strides = [1, 1]} : vector<9x128xf32> to vector<1x128xf32>
    %316 = vector.broadcast %315 : vector<1x128xf32> to vector<8x128xf32>
    %317 = arith.mulf %314, %316 : vector<8x128xf32>
    %318 = vector.extract_strided_slice %309 {offsets = [0, 120], sizes = [8, 8], strides = [1, 1]} : vector<8x128xf32> to vector<8x8xf32>
    %319 = vector.extract_strided_slice %309 {offsets = [0, 0], sizes = [8, 120], strides = [1, 1]} : vector<8x128xf32> to vector<8x120xf32>
    %320 = tpu.concatenate %318, %319 in 1 : vector<8x8xf32>, vector<8x120xf32> -> vector<8x128xf32>
    %321 = vector.extract_strided_slice %310 {offsets = [1, 0], sizes = [1, 128], strides = [1, 1]} : vector<9x128xf32> to vector<1x128xf32>
    %322 = vector.broadcast %321 : vector<1x128xf32> to vector<8x128xf32>
    %323 = arith.mulf %320, %322 : vector<8x128xf32>
    %324 = vector.extract_strided_slice %309 {offsets = [0, 121], sizes = [8, 7], strides = [1, 1]} : vector<8x128xf32> to vector<8x7xf32>
    %325 = vector.extract_strided_slice %309 {offsets = [0, 0], sizes = [8, 121], strides = [1, 1]} : vector<8x128xf32> to vector<8x121xf32>
    %326 = tpu.concatenate %324, %325 in 1 : vector<8x7xf32>, vector<8x121xf32> -> vector<8x128xf32>
    %327 = vector.extract_strided_slice %310 {offsets = [2, 0], sizes = [1, 128], strides = [1, 1]} : vector<9x128xf32> to vector<1x128xf32>
    %328 = vector.broadcast %327 : vector<1x128xf32> to vector<8x128xf32>
    %329 = arith.mulf %326, %328 : vector<8x128xf32>
    %330 = vector.extract_strided_slice %309 {offsets = [0, 127], sizes = [8, 1], strides = [1, 1]} : vector<8x128xf32> to vector<8x1xf32>
    %331 = vector.extract_strided_slice %309 {offsets = [0, 0], sizes = [8, 127], strides = [1, 1]} : vector<8x128xf32> to vector<8x127xf32>
    %332 = tpu.concatenate %330, %331 in 1 : vector<8x1xf32>, vector<8x127xf32> -> vector<8x128xf32>
    %333 = vector.extract_strided_slice %310 {offsets = [3, 0], sizes = [1, 128], strides = [1, 1]} : vector<9x128xf32> to vector<1x128xf32>
    %334 = vector.broadcast %333 : vector<1x128xf32> to vector<8x128xf32>
    %335 = arith.mulf %332, %334 : vector<8x128xf32>
    %336 = vector.extract_strided_slice %310 {offsets = [4, 0], sizes = [1, 128], strides = [1, 1]} : vector<9x128xf32> to vector<1x128xf32>
    %337 = vector.broadcast %336 : vector<1x128xf32> to vector<8x128xf32>
    %338 = arith.mulf %309, %337 : vector<8x128xf32>
    %339 = vector.extract_strided_slice %309 {offsets = [0, 1], sizes = [8, 127], strides = [1, 1]} : vector<8x128xf32> to vector<8x127xf32>
    %340 = vector.extract_strided_slice %309 {offsets = [0, 0], sizes = [8, 1], strides = [1, 1]} : vector<8x128xf32> to vector<8x1xf32>
    %341 = tpu.concatenate %339, %340 in 1 : vector<8x127xf32>, vector<8x1xf32> -> vector<8x128xf32>
    %342 = vector.extract_strided_slice %310 {offsets = [5, 0], sizes = [1, 128], strides = [1, 1]} : vector<9x128xf32> to vector<1x128xf32>
    %343 = vector.broadcast %342 : vector<1x128xf32> to vector<8x128xf32>
    %344 = arith.mulf %341, %343 : vector<8x128xf32>
    %345 = vector.extract_strided_slice %309 {offsets = [0, 7], sizes = [8, 121], strides = [1, 1]} : vector<8x128xf32> to vector<8x121xf32>
    %346 = vector.extract_strided_slice %309 {offsets = [0, 0], sizes = [8, 7], strides = [1, 1]} : vector<8x128xf32> to vector<8x7xf32>
    %347 = tpu.concatenate %345, %346 in 1 : vector<8x121xf32>, vector<8x7xf32> -> vector<8x128xf32>
    %348 = vector.extract_strided_slice %310 {offsets = [6, 0], sizes = [1, 128], strides = [1, 1]} : vector<9x128xf32> to vector<1x128xf32>
    %349 = vector.broadcast %348 : vector<1x128xf32> to vector<8x128xf32>
    %350 = arith.mulf %347, %349 : vector<8x128xf32>
    %351 = vector.extract_strided_slice %309 {offsets = [0, 8], sizes = [8, 120], strides = [1, 1]} : vector<8x128xf32> to vector<8x120xf32>
    %352 = vector.extract_strided_slice %309 {offsets = [0, 0], sizes = [8, 8], strides = [1, 1]} : vector<8x128xf32> to vector<8x8xf32>
    %353 = tpu.concatenate %351, %352 in 1 : vector<8x120xf32>, vector<8x8xf32> -> vector<8x128xf32>
    %354 = vector.extract_strided_slice %310 {offsets = [7, 0], sizes = [1, 128], strides = [1, 1]} : vector<9x128xf32> to vector<1x128xf32>
    %355 = vector.broadcast %354 : vector<1x128xf32> to vector<8x128xf32>
    %356 = arith.mulf %353, %355 : vector<8x128xf32>
    %357 = vector.extract_strided_slice %309 {offsets = [0, 9], sizes = [8, 119], strides = [1, 1]} : vector<8x128xf32> to vector<8x119xf32>
    %358 = vector.extract_strided_slice %309 {offsets = [0, 0], sizes = [8, 9], strides = [1, 1]} : vector<8x128xf32> to vector<8x9xf32>
    %359 = tpu.concatenate %357, %358 in 1 : vector<8x119xf32>, vector<8x9xf32> -> vector<8x128xf32>
    %360 = vector.extract_strided_slice %310 {offsets = [8, 0], sizes = [1, 128], strides = [1, 1]} : vector<9x128xf32> to vector<1x128xf32>
    %361 = vector.broadcast %360 : vector<1x128xf32> to vector<8x128xf32>
    %362 = arith.mulf %359, %361 : vector<8x128xf32>
    %363 = tpu.concatenate %317, %323, %329, %335, %338, %344, %350, %356, %362 in 0 : vector<8x128xf32>, vector<8x128xf32>, vector<8x128xf32>, vector<8x128xf32>, vector<8x128xf32>, vector<8x128xf32>, vector<8x128xf32>, vector<8x128xf32>, vector<8x128xf32> -> vector<72x128xf32>
    %cst_44 = arith.constant dense<0.000000e+00> : vector<8x128xf32>
    %364 = tpu.matmul %311, %363, %cst_44 {dimension_numbers = #tpu.dot_dimension_numbers<[1], [0], [0], [1], [0, 0, 1, 1], [], []>} : vector<8x72xf32>, vector<72x128xf32>, vector<8x128xf32> -> vector<8x128xf32>
    %c0_45 = arith.constant 0 : index
    %c0_46 = arith.constant 0 : index
    %365 = vector.load %arg23[%c0_45, %c0_46] : memref<128x32xf32, #tpu.memory_space<vmem>>, vector<128x32xf32>
    %cst_47 = arith.constant dense<0.000000e+00> : vector<8x32xf32>
    %366 = tpu.matmul %364, %365, %cst_47 {dimension_numbers = #tpu.dot_dimension_numbers<[1], [0], [0], [1], [0, 0, 1, 1], [], []>} : vector<8x128xf32>, vector<128x32xf32>, vector<8x32xf32> -> vector<8x32xf32>
    %367 = vector.extract_strided_slice %0 {offsets = [28, 0], sizes = [8, 1], strides = [1, 1]} : vector<180x1xf32> to vector<8x1xf32>
    %368 = vector.broadcast %367 : vector<8x1xf32> to vector<8x32xf32>
    %369 = arith.addf %366, %368 : vector<8x32xf32>
    %cst_48 = arith.constant 0.000000e+00 : f32
    %370 = vector.broadcast %cst_48 : f32 to vector<8x32xf32>
    %371 = arith.cmpf oge, %369, %370 : vector<8x32xf32>
    %cst_49 = arith.constant 1.000000e-01 : f32
    %372 = vector.broadcast %cst_49 : f32 to vector<8x32xf32>
    %373 = arith.mulf %372, %369 : vector<8x32xf32>
    %374 = arith.select %371, %369, %373 : vector<8x32xi1>, vector<8x32xf32>
    %c0_50 = arith.constant 0 : index
    %c0_51 = arith.constant 0 : index
    %375 = vector.load %arg19[%c0_50, %c0_51] : memref<9x32xf32, #tpu.memory_space<vmem>>, vector<9x32xf32>
    %c0_52 = arith.constant 0 : index
    %c0_53 = arith.constant 0 : index
    %376 = vector.load %arg7[%c0_52, %c0_53] : memref<12x72xf32, #tpu.memory_space<vmem>>, vector<12x72xf32>
    %377 = vector.extract_strided_slice %374 {offsets = [0, 27], sizes = [8, 5], strides = [1, 1]} : vector<8x32xf32> to vector<8x5xf32>
    %378 = vector.extract_strided_slice %374 {offsets = [0, 0], sizes = [8, 27], strides = [1, 1]} : vector<8x32xf32> to vector<8x27xf32>
    %379 = tpu.concatenate %377, %378 in 1 : vector<8x5xf32>, vector<8x27xf32> -> vector<8x32xf32>
    %380 = vector.extract_strided_slice %375 {offsets = [0, 0], sizes = [1, 32], strides = [1, 1]} : vector<9x32xf32> to vector<1x32xf32>
    %381 = vector.broadcast %380 : vector<1x32xf32> to vector<8x32xf32>
    %382 = arith.mulf %379, %381 : vector<8x32xf32>
    %383 = vector.extract_strided_slice %374 {offsets = [0, 28], sizes = [8, 4], strides = [1, 1]} : vector<8x32xf32> to vector<8x4xf32>
    %384 = vector.extract_strided_slice %374 {offsets = [0, 0], sizes = [8, 28], strides = [1, 1]} : vector<8x32xf32> to vector<8x28xf32>
    %385 = tpu.concatenate %383, %384 in 1 : vector<8x4xf32>, vector<8x28xf32> -> vector<8x32xf32>
    %386 = vector.extract_strided_slice %375 {offsets = [1, 0], sizes = [1, 32], strides = [1, 1]} : vector<9x32xf32> to vector<1x32xf32>
    %387 = vector.broadcast %386 : vector<1x32xf32> to vector<8x32xf32>
    %388 = arith.mulf %385, %387 : vector<8x32xf32>
    %389 = vector.extract_strided_slice %374 {offsets = [0, 29], sizes = [8, 3], strides = [1, 1]} : vector<8x32xf32> to vector<8x3xf32>
    %390 = vector.extract_strided_slice %374 {offsets = [0, 0], sizes = [8, 29], strides = [1, 1]} : vector<8x32xf32> to vector<8x29xf32>
    %391 = tpu.concatenate %389, %390 in 1 : vector<8x3xf32>, vector<8x29xf32> -> vector<8x32xf32>
    %392 = vector.extract_strided_slice %375 {offsets = [2, 0], sizes = [1, 32], strides = [1, 1]} : vector<9x32xf32> to vector<1x32xf32>
    %393 = vector.broadcast %392 : vector<1x32xf32> to vector<8x32xf32>
    %394 = arith.mulf %391, %393 : vector<8x32xf32>
    %395 = vector.extract_strided_slice %374 {offsets = [0, 31], sizes = [8, 1], strides = [1, 1]} : vector<8x32xf32> to vector<8x1xf32>
    %396 = vector.extract_strided_slice %374 {offsets = [0, 0], sizes = [8, 31], strides = [1, 1]} : vector<8x32xf32> to vector<8x31xf32>
    %397 = tpu.concatenate %395, %396 in 1 : vector<8x1xf32>, vector<8x31xf32> -> vector<8x32xf32>
    %398 = vector.extract_strided_slice %375 {offsets = [3, 0], sizes = [1, 32], strides = [1, 1]} : vector<9x32xf32> to vector<1x32xf32>
    %399 = vector.broadcast %398 : vector<1x32xf32> to vector<8x32xf32>
    %400 = arith.mulf %397, %399 : vector<8x32xf32>
    %401 = vector.extract_strided_slice %375 {offsets = [4, 0], sizes = [1, 32], strides = [1, 1]} : vector<9x32xf32> to vector<1x32xf32>
    %402 = vector.broadcast %401 : vector<1x32xf32> to vector<8x32xf32>
    %403 = arith.mulf %374, %402 : vector<8x32xf32>
    %404 = vector.extract_strided_slice %374 {offsets = [0, 1], sizes = [8, 31], strides = [1, 1]} : vector<8x32xf32> to vector<8x31xf32>
    %405 = vector.extract_strided_slice %374 {offsets = [0, 0], sizes = [8, 1], strides = [1, 1]} : vector<8x32xf32> to vector<8x1xf32>
    %406 = tpu.concatenate %404, %405 in 1 : vector<8x31xf32>, vector<8x1xf32> -> vector<8x32xf32>
    %407 = vector.extract_strided_slice %375 {offsets = [5, 0], sizes = [1, 32], strides = [1, 1]} : vector<9x32xf32> to vector<1x32xf32>
    %408 = vector.broadcast %407 : vector<1x32xf32> to vector<8x32xf32>
    %409 = arith.mulf %406, %408 : vector<8x32xf32>
    %410 = vector.extract_strided_slice %374 {offsets = [0, 3], sizes = [8, 29], strides = [1, 1]} : vector<8x32xf32> to vector<8x29xf32>
    %411 = vector.extract_strided_slice %374 {offsets = [0, 0], sizes = [8, 3], strides = [1, 1]} : vector<8x32xf32> to vector<8x3xf32>
    %412 = tpu.concatenate %410, %411 in 1 : vector<8x29xf32>, vector<8x3xf32> -> vector<8x32xf32>
    %413 = vector.extract_strided_slice %375 {offsets = [6, 0], sizes = [1, 32], strides = [1, 1]} : vector<9x32xf32> to vector<1x32xf32>
    %414 = vector.broadcast %413 : vector<1x32xf32> to vector<8x32xf32>
    %415 = arith.mulf %412, %414 : vector<8x32xf32>
    %416 = vector.extract_strided_slice %374 {offsets = [0, 4], sizes = [8, 28], strides = [1, 1]} : vector<8x32xf32> to vector<8x28xf32>
    %417 = vector.extract_strided_slice %374 {offsets = [0, 0], sizes = [8, 4], strides = [1, 1]} : vector<8x32xf32> to vector<8x4xf32>
    %418 = tpu.concatenate %416, %417 in 1 : vector<8x28xf32>, vector<8x4xf32> -> vector<8x32xf32>
    %419 = vector.extract_strided_slice %375 {offsets = [7, 0], sizes = [1, 32], strides = [1, 1]} : vector<9x32xf32> to vector<1x32xf32>
    %420 = vector.broadcast %419 : vector<1x32xf32> to vector<8x32xf32>
    %421 = arith.mulf %418, %420 : vector<8x32xf32>
    %422 = vector.extract_strided_slice %374 {offsets = [0, 5], sizes = [8, 27], strides = [1, 1]} : vector<8x32xf32> to vector<8x27xf32>
    %423 = vector.extract_strided_slice %374 {offsets = [0, 0], sizes = [8, 5], strides = [1, 1]} : vector<8x32xf32> to vector<8x5xf32>
    %424 = tpu.concatenate %422, %423 in 1 : vector<8x27xf32>, vector<8x5xf32> -> vector<8x32xf32>
    %425 = vector.extract_strided_slice %375 {offsets = [8, 0], sizes = [1, 32], strides = [1, 1]} : vector<9x32xf32> to vector<1x32xf32>
    %426 = vector.broadcast %425 : vector<1x32xf32> to vector<8x32xf32>
    %427 = arith.mulf %424, %426 : vector<8x32xf32>
    %428 = tpu.concatenate %382, %388, %394, %400, %403, %409, %415, %421, %427 in 0 : vector<8x32xf32>, vector<8x32xf32>, vector<8x32xf32>, vector<8x32xf32>, vector<8x32xf32>, vector<8x32xf32>, vector<8x32xf32>, vector<8x32xf32>, vector<8x32xf32> -> vector<72x32xf32>
    %cst_54 = arith.constant dense<0.000000e+00> : vector<12x32xf32>
    %429 = tpu.matmul %376, %428, %cst_54 {dimension_numbers = #tpu.dot_dimension_numbers<[1], [0], [0], [1], [0, 0, 1, 1], [], []>} : vector<12x72xf32>, vector<72x32xf32>, vector<12x32xf32> -> vector<12x32xf32>
    %430 = vector.extract_strided_slice %0 {offsets = [36, 0], sizes = [12, 1], strides = [1, 1]} : vector<180x1xf32> to vector<12x1xf32>
    %431 = vector.broadcast %430 : vector<12x1xf32> to vector<12x32xf32>
    %432 = arith.addf %429, %431 : vector<12x32xf32>
    %cst_55 = arith.constant 0.000000e+00 : f32
    %433 = vector.broadcast %cst_55 : f32 to vector<12x32xf32>
    %434 = arith.cmpf oge, %432, %433 : vector<12x32xf32>
    %cst_56 = arith.constant 1.000000e-01 : f32
    %435 = vector.broadcast %cst_56 : f32 to vector<12x32xf32>
    %436 = arith.mulf %435, %432 : vector<12x32xf32>
    %437 = arith.select %434, %432, %436 : vector<12x32xi1>, vector<12x32xf32>
    %c0_57 = arith.constant 0 : index
    %c0_58 = arith.constant 0 : index
    %438 = vector.load %arg19[%c0_57, %c0_58] : memref<9x32xf32, #tpu.memory_space<vmem>>, vector<9x32xf32>
    %c0_59 = arith.constant 0 : index
    %c0_60 = arith.constant 0 : index
    %439 = vector.load %arg8[%c0_59, %c0_60] : memref<12x108xf32, #tpu.memory_space<vmem>>, vector<12x108xf32>
    %440 = vector.extract_strided_slice %437 {offsets = [0, 27], sizes = [12, 5], strides = [1, 1]} : vector<12x32xf32> to vector<12x5xf32>
    %441 = vector.extract_strided_slice %437 {offsets = [0, 0], sizes = [12, 27], strides = [1, 1]} : vector<12x32xf32> to vector<12x27xf32>
    %442 = tpu.concatenate %440, %441 in 1 : vector<12x5xf32>, vector<12x27xf32> -> vector<12x32xf32>
    %443 = vector.extract_strided_slice %438 {offsets = [0, 0], sizes = [1, 32], strides = [1, 1]} : vector<9x32xf32> to vector<1x32xf32>
    %444 = vector.broadcast %443 : vector<1x32xf32> to vector<12x32xf32>
    %445 = arith.mulf %442, %444 : vector<12x32xf32>
    %446 = vector.extract_strided_slice %437 {offsets = [0, 28], sizes = [12, 4], strides = [1, 1]} : vector<12x32xf32> to vector<12x4xf32>
    %447 = vector.extract_strided_slice %437 {offsets = [0, 0], sizes = [12, 28], strides = [1, 1]} : vector<12x32xf32> to vector<12x28xf32>
    %448 = tpu.concatenate %446, %447 in 1 : vector<12x4xf32>, vector<12x28xf32> -> vector<12x32xf32>
    %449 = vector.extract_strided_slice %438 {offsets = [1, 0], sizes = [1, 32], strides = [1, 1]} : vector<9x32xf32> to vector<1x32xf32>
    %450 = vector.broadcast %449 : vector<1x32xf32> to vector<12x32xf32>
    %451 = arith.mulf %448, %450 : vector<12x32xf32>
    %452 = vector.extract_strided_slice %437 {offsets = [0, 29], sizes = [12, 3], strides = [1, 1]} : vector<12x32xf32> to vector<12x3xf32>
    %453 = vector.extract_strided_slice %437 {offsets = [0, 0], sizes = [12, 29], strides = [1, 1]} : vector<12x32xf32> to vector<12x29xf32>
    %454 = tpu.concatenate %452, %453 in 1 : vector<12x3xf32>, vector<12x29xf32> -> vector<12x32xf32>
    %455 = vector.extract_strided_slice %438 {offsets = [2, 0], sizes = [1, 32], strides = [1, 1]} : vector<9x32xf32> to vector<1x32xf32>
    %456 = vector.broadcast %455 : vector<1x32xf32> to vector<12x32xf32>
    %457 = arith.mulf %454, %456 : vector<12x32xf32>
    %458 = vector.extract_strided_slice %437 {offsets = [0, 31], sizes = [12, 1], strides = [1, 1]} : vector<12x32xf32> to vector<12x1xf32>
    %459 = vector.extract_strided_slice %437 {offsets = [0, 0], sizes = [12, 31], strides = [1, 1]} : vector<12x32xf32> to vector<12x31xf32>
    %460 = tpu.concatenate %458, %459 in 1 : vector<12x1xf32>, vector<12x31xf32> -> vector<12x32xf32>
    %461 = vector.extract_strided_slice %438 {offsets = [3, 0], sizes = [1, 32], strides = [1, 1]} : vector<9x32xf32> to vector<1x32xf32>
    %462 = vector.broadcast %461 : vector<1x32xf32> to vector<12x32xf32>
    %463 = arith.mulf %460, %462 : vector<12x32xf32>
    %464 = vector.extract_strided_slice %438 {offsets = [4, 0], sizes = [1, 32], strides = [1, 1]} : vector<9x32xf32> to vector<1x32xf32>
    %465 = vector.broadcast %464 : vector<1x32xf32> to vector<12x32xf32>
    %466 = arith.mulf %437, %465 : vector<12x32xf32>
    %467 = vector.extract_strided_slice %437 {offsets = [0, 1], sizes = [12, 31], strides = [1, 1]} : vector<12x32xf32> to vector<12x31xf32>
    %468 = vector.extract_strided_slice %437 {offsets = [0, 0], sizes = [12, 1], strides = [1, 1]} : vector<12x32xf32> to vector<12x1xf32>
    %469 = tpu.concatenate %467, %468 in 1 : vector<12x31xf32>, vector<12x1xf32> -> vector<12x32xf32>
    %470 = vector.extract_strided_slice %438 {offsets = [5, 0], sizes = [1, 32], strides = [1, 1]} : vector<9x32xf32> to vector<1x32xf32>
    %471 = vector.broadcast %470 : vector<1x32xf32> to vector<12x32xf32>
    %472 = arith.mulf %469, %471 : vector<12x32xf32>
    %473 = vector.extract_strided_slice %437 {offsets = [0, 3], sizes = [12, 29], strides = [1, 1]} : vector<12x32xf32> to vector<12x29xf32>
    %474 = vector.extract_strided_slice %437 {offsets = [0, 0], sizes = [12, 3], strides = [1, 1]} : vector<12x32xf32> to vector<12x3xf32>
    %475 = tpu.concatenate %473, %474 in 1 : vector<12x29xf32>, vector<12x3xf32> -> vector<12x32xf32>
    %476 = vector.extract_strided_slice %438 {offsets = [6, 0], sizes = [1, 32], strides = [1, 1]} : vector<9x32xf32> to vector<1x32xf32>
    %477 = vector.broadcast %476 : vector<1x32xf32> to vector<12x32xf32>
    %478 = arith.mulf %475, %477 : vector<12x32xf32>
    %479 = vector.extract_strided_slice %437 {offsets = [0, 4], sizes = [12, 28], strides = [1, 1]} : vector<12x32xf32> to vector<12x28xf32>
    %480 = vector.extract_strided_slice %437 {offsets = [0, 0], sizes = [12, 4], strides = [1, 1]} : vector<12x32xf32> to vector<12x4xf32>
    %481 = tpu.concatenate %479, %480 in 1 : vector<12x28xf32>, vector<12x4xf32> -> vector<12x32xf32>
    %482 = vector.extract_strided_slice %438 {offsets = [7, 0], sizes = [1, 32], strides = [1, 1]} : vector<9x32xf32> to vector<1x32xf32>
    %483 = vector.broadcast %482 : vector<1x32xf32> to vector<12x32xf32>
    %484 = arith.mulf %481, %483 : vector<12x32xf32>
    %485 = vector.extract_strided_slice %437 {offsets = [0, 5], sizes = [12, 27], strides = [1, 1]} : vector<12x32xf32> to vector<12x27xf32>
    %486 = vector.extract_strided_slice %437 {offsets = [0, 0], sizes = [12, 5], strides = [1, 1]} : vector<12x32xf32> to vector<12x5xf32>
    %487 = tpu.concatenate %485, %486 in 1 : vector<12x27xf32>, vector<12x5xf32> -> vector<12x32xf32>
    %488 = vector.extract_strided_slice %438 {offsets = [8, 0], sizes = [1, 32], strides = [1, 1]} : vector<9x32xf32> to vector<1x32xf32>
    %489 = vector.broadcast %488 : vector<1x32xf32> to vector<12x32xf32>
    %490 = arith.mulf %487, %489 : vector<12x32xf32>
    %491 = tpu.concatenate %445, %451, %457, %463, %466, %472, %478, %484, %490 in 0 : vector<12x32xf32>, vector<12x32xf32>, vector<12x32xf32>, vector<12x32xf32>, vector<12x32xf32>, vector<12x32xf32>, vector<12x32xf32>, vector<12x32xf32>, vector<12x32xf32> -> vector<108x32xf32>
    %cst_61 = arith.constant dense<0.000000e+00> : vector<12x32xf32>
    %492 = tpu.matmul %439, %491, %cst_61 {dimension_numbers = #tpu.dot_dimension_numbers<[1], [0], [0], [1], [0, 0, 1, 1], [], []>} : vector<12x108xf32>, vector<108x32xf32>, vector<12x32xf32> -> vector<12x32xf32>
    %493 = vector.extract_strided_slice %0 {offsets = [48, 0], sizes = [12, 1], strides = [1, 1]} : vector<180x1xf32> to vector<12x1xf32>
    %494 = vector.broadcast %493 : vector<12x1xf32> to vector<12x32xf32>
    %495 = arith.addf %492, %494 : vector<12x32xf32>
    %cst_62 = arith.constant 0.000000e+00 : f32
    %496 = vector.broadcast %cst_62 : f32 to vector<12x32xf32>
    %497 = arith.cmpf oge, %495, %496 : vector<12x32xf32>
    %cst_63 = arith.constant 1.000000e-01 : f32
    %498 = vector.broadcast %cst_63 : f32 to vector<12x32xf32>
    %499 = arith.mulf %498, %495 : vector<12x32xf32>
    %500 = arith.select %497, %495, %499 : vector<12x32xi1>, vector<12x32xf32>
    %c0_64 = arith.constant 0 : index
    %c0_65 = arith.constant 0 : index
    %501 = vector.load %arg19[%c0_64, %c0_65] : memref<9x32xf32, #tpu.memory_space<vmem>>, vector<9x32xf32>
    %c0_66 = arith.constant 0 : index
    %c0_67 = arith.constant 0 : index
    %502 = vector.load %arg9[%c0_66, %c0_67] : memref<12x108xf32, #tpu.memory_space<vmem>>, vector<12x108xf32>
    %503 = vector.extract_strided_slice %500 {offsets = [0, 27], sizes = [12, 5], strides = [1, 1]} : vector<12x32xf32> to vector<12x5xf32>
    %504 = vector.extract_strided_slice %500 {offsets = [0, 0], sizes = [12, 27], strides = [1, 1]} : vector<12x32xf32> to vector<12x27xf32>
    %505 = tpu.concatenate %503, %504 in 1 : vector<12x5xf32>, vector<12x27xf32> -> vector<12x32xf32>
    %506 = vector.extract_strided_slice %501 {offsets = [0, 0], sizes = [1, 32], strides = [1, 1]} : vector<9x32xf32> to vector<1x32xf32>
    %507 = vector.broadcast %506 : vector<1x32xf32> to vector<12x32xf32>
    %508 = arith.mulf %505, %507 : vector<12x32xf32>
    %509 = vector.extract_strided_slice %500 {offsets = [0, 28], sizes = [12, 4], strides = [1, 1]} : vector<12x32xf32> to vector<12x4xf32>
    %510 = vector.extract_strided_slice %500 {offsets = [0, 0], sizes = [12, 28], strides = [1, 1]} : vector<12x32xf32> to vector<12x28xf32>
    %511 = tpu.concatenate %509, %510 in 1 : vector<12x4xf32>, vector<12x28xf32> -> vector<12x32xf32>
    %512 = vector.extract_strided_slice %501 {offsets = [1, 0], sizes = [1, 32], strides = [1, 1]} : vector<9x32xf32> to vector<1x32xf32>
    %513 = vector.broadcast %512 : vector<1x32xf32> to vector<12x32xf32>
    %514 = arith.mulf %511, %513 : vector<12x32xf32>
    %515 = vector.extract_strided_slice %500 {offsets = [0, 29], sizes = [12, 3], strides = [1, 1]} : vector<12x32xf32> to vector<12x3xf32>
    %516 = vector.extract_strided_slice %500 {offsets = [0, 0], sizes = [12, 29], strides = [1, 1]} : vector<12x32xf32> to vector<12x29xf32>
    %517 = tpu.concatenate %515, %516 in 1 : vector<12x3xf32>, vector<12x29xf32> -> vector<12x32xf32>
    %518 = vector.extract_strided_slice %501 {offsets = [2, 0], sizes = [1, 32], strides = [1, 1]} : vector<9x32xf32> to vector<1x32xf32>
    %519 = vector.broadcast %518 : vector<1x32xf32> to vector<12x32xf32>
    %520 = arith.mulf %517, %519 : vector<12x32xf32>
    %521 = vector.extract_strided_slice %500 {offsets = [0, 31], sizes = [12, 1], strides = [1, 1]} : vector<12x32xf32> to vector<12x1xf32>
    %522 = vector.extract_strided_slice %500 {offsets = [0, 0], sizes = [12, 31], strides = [1, 1]} : vector<12x32xf32> to vector<12x31xf32>
    %523 = tpu.concatenate %521, %522 in 1 : vector<12x1xf32>, vector<12x31xf32> -> vector<12x32xf32>
    %524 = vector.extract_strided_slice %501 {offsets = [3, 0], sizes = [1, 32], strides = [1, 1]} : vector<9x32xf32> to vector<1x32xf32>
    %525 = vector.broadcast %524 : vector<1x32xf32> to vector<12x32xf32>
    %526 = arith.mulf %523, %525 : vector<12x32xf32>
    %527 = vector.extract_strided_slice %501 {offsets = [4, 0], sizes = [1, 32], strides = [1, 1]} : vector<9x32xf32> to vector<1x32xf32>
    %528 = vector.broadcast %527 : vector<1x32xf32> to vector<12x32xf32>
    %529 = arith.mulf %500, %528 : vector<12x32xf32>
    %530 = vector.extract_strided_slice %500 {offsets = [0, 1], sizes = [12, 31], strides = [1, 1]} : vector<12x32xf32> to vector<12x31xf32>
    %531 = vector.extract_strided_slice %500 {offsets = [0, 0], sizes = [12, 1], strides = [1, 1]} : vector<12x32xf32> to vector<12x1xf32>
    %532 = tpu.concatenate %530, %531 in 1 : vector<12x31xf32>, vector<12x1xf32> -> vector<12x32xf32>
    %533 = vector.extract_strided_slice %501 {offsets = [5, 0], sizes = [1, 32], strides = [1, 1]} : vector<9x32xf32> to vector<1x32xf32>
    %534 = vector.broadcast %533 : vector<1x32xf32> to vector<12x32xf32>
    %535 = arith.mulf %532, %534 : vector<12x32xf32>
    %536 = vector.extract_strided_slice %500 {offsets = [0, 3], sizes = [12, 29], strides = [1, 1]} : vector<12x32xf32> to vector<12x29xf32>
    %537 = vector.extract_strided_slice %500 {offsets = [0, 0], sizes = [12, 3], strides = [1, 1]} : vector<12x32xf32> to vector<12x3xf32>
    %538 = tpu.concatenate %536, %537 in 1 : vector<12x29xf32>, vector<12x3xf32> -> vector<12x32xf32>
    %539 = vector.extract_strided_slice %501 {offsets = [6, 0], sizes = [1, 32], strides = [1, 1]} : vector<9x32xf32> to vector<1x32xf32>
    %540 = vector.broadcast %539 : vector<1x32xf32> to vector<12x32xf32>
    %541 = arith.mulf %538, %540 : vector<12x32xf32>
    %542 = vector.extract_strided_slice %500 {offsets = [0, 4], sizes = [12, 28], strides = [1, 1]} : vector<12x32xf32> to vector<12x28xf32>
    %543 = vector.extract_strided_slice %500 {offsets = [0, 0], sizes = [12, 4], strides = [1, 1]} : vector<12x32xf32> to vector<12x4xf32>
    %544 = tpu.concatenate %542, %543 in 1 : vector<12x28xf32>, vector<12x4xf32> -> vector<12x32xf32>
    %545 = vector.extract_strided_slice %501 {offsets = [7, 0], sizes = [1, 32], strides = [1, 1]} : vector<9x32xf32> to vector<1x32xf32>
    %546 = vector.broadcast %545 : vector<1x32xf32> to vector<12x32xf32>
    %547 = arith.mulf %544, %546 : vector<12x32xf32>
    %548 = vector.extract_strided_slice %500 {offsets = [0, 5], sizes = [12, 27], strides = [1, 1]} : vector<12x32xf32> to vector<12x27xf32>
    %549 = vector.extract_strided_slice %500 {offsets = [0, 0], sizes = [12, 5], strides = [1, 1]} : vector<12x32xf32> to vector<12x5xf32>
    %550 = tpu.concatenate %548, %549 in 1 : vector<12x27xf32>, vector<12x5xf32> -> vector<12x32xf32>
    %551 = vector.extract_strided_slice %501 {offsets = [8, 0], sizes = [1, 32], strides = [1, 1]} : vector<9x32xf32> to vector<1x32xf32>
    %552 = vector.broadcast %551 : vector<1x32xf32> to vector<12x32xf32>
    %553 = arith.mulf %550, %552 : vector<12x32xf32>
    %554 = tpu.concatenate %508, %514, %520, %526, %529, %535, %541, %547, %553 in 0 : vector<12x32xf32>, vector<12x32xf32>, vector<12x32xf32>, vector<12x32xf32>, vector<12x32xf32>, vector<12x32xf32>, vector<12x32xf32>, vector<12x32xf32>, vector<12x32xf32> -> vector<108x32xf32>
    %cst_68 = arith.constant dense<0.000000e+00> : vector<12x32xf32>
    %555 = tpu.matmul %502, %554, %cst_68 {dimension_numbers = #tpu.dot_dimension_numbers<[1], [0], [0], [1], [0, 0, 1, 1], [], []>} : vector<12x108xf32>, vector<108x32xf32>, vector<12x32xf32> -> vector<12x32xf32>
    %c0_69 = arith.constant 0 : index
    %c0_70 = arith.constant 0 : index
    %556 = vector.load %arg24[%c0_69, %c0_70] : memref<32x8xf32, #tpu.memory_space<vmem>>, vector<32x8xf32>
    %cst_71 = arith.constant dense<0.000000e+00> : vector<12x8xf32>
    %557 = tpu.matmul %555, %556, %cst_71 {dimension_numbers = #tpu.dot_dimension_numbers<[1], [0], [0], [1], [0, 0, 1, 1], [], []>} : vector<12x32xf32>, vector<32x8xf32>, vector<12x8xf32> -> vector<12x8xf32>
    %558 = vector.extract_strided_slice %0 {offsets = [60, 0], sizes = [12, 1], strides = [1, 1]} : vector<180x1xf32> to vector<12x1xf32>
    %559 = vector.broadcast %558 : vector<12x1xf32> to vector<12x8xf32>
    %560 = arith.addf %557, %559 : vector<12x8xf32>
    %cst_72 = arith.constant 0.000000e+00 : f32
    %561 = vector.broadcast %cst_72 : f32 to vector<12x8xf32>
    %562 = arith.cmpf oge, %560, %561 : vector<12x8xf32>
    %cst_73 = arith.constant 1.000000e-01 : f32
    %563 = vector.broadcast %cst_73 : f32 to vector<12x8xf32>
    %564 = arith.mulf %563, %560 : vector<12x8xf32>
    %565 = arith.select %562, %560, %564 : vector<12x8xi1>, vector<12x8xf32>
    %c0_74 = arith.constant 0 : index
    %c0_75 = arith.constant 0 : index
    %566 = vector.load %arg20[%c0_74, %c0_75] : memref<9x8xf32, #tpu.memory_space<vmem>>, vector<9x8xf32>
    %c0_76 = arith.constant 0 : index
    %c0_77 = arith.constant 0 : index
    %567 = vector.load %arg10[%c0_76, %c0_77] : memref<16x108xf32, #tpu.memory_space<vmem>>, vector<16x108xf32>
    %568 = vector.extract_strided_slice %565 {offsets = [0, 5], sizes = [12, 3], strides = [1, 1]} : vector<12x8xf32> to vector<12x3xf32>
    %569 = vector.extract_strided_slice %565 {offsets = [0, 0], sizes = [12, 5], strides = [1, 1]} : vector<12x8xf32> to vector<12x5xf32>
    %570 = tpu.concatenate %568, %569 in 1 : vector<12x3xf32>, vector<12x5xf32> -> vector<12x8xf32>
    %571 = vector.extract_strided_slice %566 {offsets = [0, 0], sizes = [1, 8], strides = [1, 1]} : vector<9x8xf32> to vector<1x8xf32>
    %572 = vector.broadcast %571 : vector<1x8xf32> to vector<12x8xf32>
    %573 = arith.mulf %570, %572 : vector<12x8xf32>
    %574 = vector.extract_strided_slice %565 {offsets = [0, 6], sizes = [12, 2], strides = [1, 1]} : vector<12x8xf32> to vector<12x2xf32>
    %575 = vector.extract_strided_slice %565 {offsets = [0, 0], sizes = [12, 6], strides = [1, 1]} : vector<12x8xf32> to vector<12x6xf32>
    %576 = tpu.concatenate %574, %575 in 1 : vector<12x2xf32>, vector<12x6xf32> -> vector<12x8xf32>
    %577 = vector.extract_strided_slice %566 {offsets = [1, 0], sizes = [1, 8], strides = [1, 1]} : vector<9x8xf32> to vector<1x8xf32>
    %578 = vector.broadcast %577 : vector<1x8xf32> to vector<12x8xf32>
    %579 = arith.mulf %576, %578 : vector<12x8xf32>
    %580 = vector.extract_strided_slice %565 {offsets = [0, 7], sizes = [12, 1], strides = [1, 1]} : vector<12x8xf32> to vector<12x1xf32>
    %581 = vector.extract_strided_slice %565 {offsets = [0, 0], sizes = [12, 7], strides = [1, 1]} : vector<12x8xf32> to vector<12x7xf32>
    %582 = tpu.concatenate %580, %581 in 1 : vector<12x1xf32>, vector<12x7xf32> -> vector<12x8xf32>
    %583 = vector.extract_strided_slice %566 {offsets = [2, 0], sizes = [1, 8], strides = [1, 1]} : vector<9x8xf32> to vector<1x8xf32>
    %584 = vector.broadcast %583 : vector<1x8xf32> to vector<12x8xf32>
    %585 = arith.mulf %582, %584 : vector<12x8xf32>
    %586 = vector.extract_strided_slice %565 {offsets = [0, 7], sizes = [12, 1], strides = [1, 1]} : vector<12x8xf32> to vector<12x1xf32>
    %587 = vector.extract_strided_slice %565 {offsets = [0, 0], sizes = [12, 7], strides = [1, 1]} : vector<12x8xf32> to vector<12x7xf32>
    %588 = tpu.concatenate %586, %587 in 1 : vector<12x1xf32>, vector<12x7xf32> -> vector<12x8xf32>
    %589 = vector.extract_strided_slice %566 {offsets = [3, 0], sizes = [1, 8], strides = [1, 1]} : vector<9x8xf32> to vector<1x8xf32>
    %590 = vector.broadcast %589 : vector<1x8xf32> to vector<12x8xf32>
    %591 = arith.mulf %588, %590 : vector<12x8xf32>
    %592 = vector.extract_strided_slice %566 {offsets = [4, 0], sizes = [1, 8], strides = [1, 1]} : vector<9x8xf32> to vector<1x8xf32>
    %593 = vector.broadcast %592 : vector<1x8xf32> to vector<12x8xf32>
    %594 = arith.mulf %565, %593 : vector<12x8xf32>
    %595 = vector.extract_strided_slice %565 {offsets = [0, 1], sizes = [12, 7], strides = [1, 1]} : vector<12x8xf32> to vector<12x7xf32>
    %596 = vector.extract_strided_slice %565 {offsets = [0, 0], sizes = [12, 1], strides = [1, 1]} : vector<12x8xf32> to vector<12x1xf32>
    %597 = tpu.concatenate %595, %596 in 1 : vector<12x7xf32>, vector<12x1xf32> -> vector<12x8xf32>
    %598 = vector.extract_strided_slice %566 {offsets = [5, 0], sizes = [1, 8], strides = [1, 1]} : vector<9x8xf32> to vector<1x8xf32>
    %599 = vector.broadcast %598 : vector<1x8xf32> to vector<12x8xf32>
    %600 = arith.mulf %597, %599 : vector<12x8xf32>
    %601 = vector.extract_strided_slice %565 {offsets = [0, 1], sizes = [12, 7], strides = [1, 1]} : vector<12x8xf32> to vector<12x7xf32>
    %602 = vector.extract_strided_slice %565 {offsets = [0, 0], sizes = [12, 1], strides = [1, 1]} : vector<12x8xf32> to vector<12x1xf32>
    %603 = tpu.concatenate %601, %602 in 1 : vector<12x7xf32>, vector<12x1xf32> -> vector<12x8xf32>
    %604 = vector.extract_strided_slice %566 {offsets = [6, 0], sizes = [1, 8], strides = [1, 1]} : vector<9x8xf32> to vector<1x8xf32>
    %605 = vector.broadcast %604 : vector<1x8xf32> to vector<12x8xf32>
    %606 = arith.mulf %603, %605 : vector<12x8xf32>
    %607 = vector.extract_strided_slice %565 {offsets = [0, 2], sizes = [12, 6], strides = [1, 1]} : vector<12x8xf32> to vector<12x6xf32>
    %608 = vector.extract_strided_slice %565 {offsets = [0, 0], sizes = [12, 2], strides = [1, 1]} : vector<12x8xf32> to vector<12x2xf32>
    %609 = tpu.concatenate %607, %608 in 1 : vector<12x6xf32>, vector<12x2xf32> -> vector<12x8xf32>
    %610 = vector.extract_strided_slice %566 {offsets = [7, 0], sizes = [1, 8], strides = [1, 1]} : vector<9x8xf32> to vector<1x8xf32>
    %611 = vector.broadcast %610 : vector<1x8xf32> to vector<12x8xf32>
    %612 = arith.mulf %609, %611 : vector<12x8xf32>
    %613 = vector.extract_strided_slice %565 {offsets = [0, 3], sizes = [12, 5], strides = [1, 1]} : vector<12x8xf32> to vector<12x5xf32>
    %614 = vector.extract_strided_slice %565 {offsets = [0, 0], sizes = [12, 3], strides = [1, 1]} : vector<12x8xf32> to vector<12x3xf32>
    %615 = tpu.concatenate %613, %614 in 1 : vector<12x5xf32>, vector<12x3xf32> -> vector<12x8xf32>
    %616 = vector.extract_strided_slice %566 {offsets = [8, 0], sizes = [1, 8], strides = [1, 1]} : vector<9x8xf32> to vector<1x8xf32>
    %617 = vector.broadcast %616 : vector<1x8xf32> to vector<12x8xf32>
    %618 = arith.mulf %615, %617 : vector<12x8xf32>
    %619 = tpu.concatenate %573, %579, %585, %591, %594, %600, %606, %612, %618 in 0 : vector<12x8xf32>, vector<12x8xf32>, vector<12x8xf32>, vector<12x8xf32>, vector<12x8xf32>, vector<12x8xf32>, vector<12x8xf32>, vector<12x8xf32>, vector<12x8xf32> -> vector<108x8xf32>
    %cst_78 = arith.constant dense<0.000000e+00> : vector<16x8xf32>
    %620 = tpu.matmul %567, %619, %cst_78 {dimension_numbers = #tpu.dot_dimension_numbers<[1], [0], [0], [1], [0, 0, 1, 1], [], []>} : vector<16x108xf32>, vector<108x8xf32>, vector<16x8xf32> -> vector<16x8xf32>
    %621 = vector.extract_strided_slice %0 {offsets = [72, 0], sizes = [16, 1], strides = [1, 1]} : vector<180x1xf32> to vector<16x1xf32>
    %622 = vector.broadcast %621 : vector<16x1xf32> to vector<16x8xf32>
    %623 = arith.addf %620, %622 : vector<16x8xf32>
    %cst_79 = arith.constant 0.000000e+00 : f32
    %624 = vector.broadcast %cst_79 : f32 to vector<16x8xf32>
    %625 = arith.cmpf oge, %623, %624 : vector<16x8xf32>
    %cst_80 = arith.constant 1.000000e-01 : f32
    %626 = vector.broadcast %cst_80 : f32 to vector<16x8xf32>
    %627 = arith.mulf %626, %623 : vector<16x8xf32>
    %628 = arith.select %625, %623, %627 : vector<16x8xi1>, vector<16x8xf32>
    %c0_81 = arith.constant 0 : index
    %c0_82 = arith.constant 0 : index
    %629 = vector.load %arg20[%c0_81, %c0_82] : memref<9x8xf32, #tpu.memory_space<vmem>>, vector<9x8xf32>
    %c0_83 = arith.constant 0 : index
    %c0_84 = arith.constant 0 : index
    %630 = vector.load %arg11[%c0_83, %c0_84] : memref<16x144xf32, #tpu.memory_space<vmem>>, vector<16x144xf32>
    %631 = vector.extract_strided_slice %628 {offsets = [0, 5], sizes = [16, 3], strides = [1, 1]} : vector<16x8xf32> to vector<16x3xf32>
    %632 = vector.extract_strided_slice %628 {offsets = [0, 0], sizes = [16, 5], strides = [1, 1]} : vector<16x8xf32> to vector<16x5xf32>
    %633 = tpu.concatenate %631, %632 in 1 : vector<16x3xf32>, vector<16x5xf32> -> vector<16x8xf32>
    %634 = vector.extract_strided_slice %629 {offsets = [0, 0], sizes = [1, 8], strides = [1, 1]} : vector<9x8xf32> to vector<1x8xf32>
    %635 = vector.broadcast %634 : vector<1x8xf32> to vector<16x8xf32>
    %636 = arith.mulf %633, %635 : vector<16x8xf32>
    %637 = vector.extract_strided_slice %628 {offsets = [0, 6], sizes = [16, 2], strides = [1, 1]} : vector<16x8xf32> to vector<16x2xf32>
    %638 = vector.extract_strided_slice %628 {offsets = [0, 0], sizes = [16, 6], strides = [1, 1]} : vector<16x8xf32> to vector<16x6xf32>
    %639 = tpu.concatenate %637, %638 in 1 : vector<16x2xf32>, vector<16x6xf32> -> vector<16x8xf32>
    %640 = vector.extract_strided_slice %629 {offsets = [1, 0], sizes = [1, 8], strides = [1, 1]} : vector<9x8xf32> to vector<1x8xf32>
    %641 = vector.broadcast %640 : vector<1x8xf32> to vector<16x8xf32>
    %642 = arith.mulf %639, %641 : vector<16x8xf32>
    %643 = vector.extract_strided_slice %628 {offsets = [0, 7], sizes = [16, 1], strides = [1, 1]} : vector<16x8xf32> to vector<16x1xf32>
    %644 = vector.extract_strided_slice %628 {offsets = [0, 0], sizes = [16, 7], strides = [1, 1]} : vector<16x8xf32> to vector<16x7xf32>
    %645 = tpu.concatenate %643, %644 in 1 : vector<16x1xf32>, vector<16x7xf32> -> vector<16x8xf32>
    %646 = vector.extract_strided_slice %629 {offsets = [2, 0], sizes = [1, 8], strides = [1, 1]} : vector<9x8xf32> to vector<1x8xf32>
    %647 = vector.broadcast %646 : vector<1x8xf32> to vector<16x8xf32>
    %648 = arith.mulf %645, %647 : vector<16x8xf32>
    %649 = vector.extract_strided_slice %628 {offsets = [0, 7], sizes = [16, 1], strides = [1, 1]} : vector<16x8xf32> to vector<16x1xf32>
    %650 = vector.extract_strided_slice %628 {offsets = [0, 0], sizes = [16, 7], strides = [1, 1]} : vector<16x8xf32> to vector<16x7xf32>
    %651 = tpu.concatenate %649, %650 in 1 : vector<16x1xf32>, vector<16x7xf32> -> vector<16x8xf32>
    %652 = vector.extract_strided_slice %629 {offsets = [3, 0], sizes = [1, 8], strides = [1, 1]} : vector<9x8xf32> to vector<1x8xf32>
    %653 = vector.broadcast %652 : vector<1x8xf32> to vector<16x8xf32>
    %654 = arith.mulf %651, %653 : vector<16x8xf32>
    %655 = vector.extract_strided_slice %629 {offsets = [4, 0], sizes = [1, 8], strides = [1, 1]} : vector<9x8xf32> to vector<1x8xf32>
    %656 = vector.broadcast %655 : vector<1x8xf32> to vector<16x8xf32>
    %657 = arith.mulf %628, %656 : vector<16x8xf32>
    %658 = vector.extract_strided_slice %628 {offsets = [0, 1], sizes = [16, 7], strides = [1, 1]} : vector<16x8xf32> to vector<16x7xf32>
    %659 = vector.extract_strided_slice %628 {offsets = [0, 0], sizes = [16, 1], strides = [1, 1]} : vector<16x8xf32> to vector<16x1xf32>
    %660 = tpu.concatenate %658, %659 in 1 : vector<16x7xf32>, vector<16x1xf32> -> vector<16x8xf32>
    %661 = vector.extract_strided_slice %629 {offsets = [5, 0], sizes = [1, 8], strides = [1, 1]} : vector<9x8xf32> to vector<1x8xf32>
    %662 = vector.broadcast %661 : vector<1x8xf32> to vector<16x8xf32>
    %663 = arith.mulf %660, %662 : vector<16x8xf32>
    %664 = vector.extract_strided_slice %628 {offsets = [0, 1], sizes = [16, 7], strides = [1, 1]} : vector<16x8xf32> to vector<16x7xf32>
    %665 = vector.extract_strided_slice %628 {offsets = [0, 0], sizes = [16, 1], strides = [1, 1]} : vector<16x8xf32> to vector<16x1xf32>
    %666 = tpu.concatenate %664, %665 in 1 : vector<16x7xf32>, vector<16x1xf32> -> vector<16x8xf32>
    %667 = vector.extract_strided_slice %629 {offsets = [6, 0], sizes = [1, 8], strides = [1, 1]} : vector<9x8xf32> to vector<1x8xf32>
    %668 = vector.broadcast %667 : vector<1x8xf32> to vector<16x8xf32>
    %669 = arith.mulf %666, %668 : vector<16x8xf32>
    %670 = vector.extract_strided_slice %628 {offsets = [0, 2], sizes = [16, 6], strides = [1, 1]} : vector<16x8xf32> to vector<16x6xf32>
    %671 = vector.extract_strided_slice %628 {offsets = [0, 0], sizes = [16, 2], strides = [1, 1]} : vector<16x8xf32> to vector<16x2xf32>
    %672 = tpu.concatenate %670, %671 in 1 : vector<16x6xf32>, vector<16x2xf32> -> vector<16x8xf32>
    %673 = vector.extract_strided_slice %629 {offsets = [7, 0], sizes = [1, 8], strides = [1, 1]} : vector<9x8xf32> to vector<1x8xf32>
    %674 = vector.broadcast %673 : vector<1x8xf32> to vector<16x8xf32>
    %675 = arith.mulf %672, %674 : vector<16x8xf32>
    %676 = vector.extract_strided_slice %628 {offsets = [0, 3], sizes = [16, 5], strides = [1, 1]} : vector<16x8xf32> to vector<16x5xf32>
    %677 = vector.extract_strided_slice %628 {offsets = [0, 0], sizes = [16, 3], strides = [1, 1]} : vector<16x8xf32> to vector<16x3xf32>
    %678 = tpu.concatenate %676, %677 in 1 : vector<16x5xf32>, vector<16x3xf32> -> vector<16x8xf32>
    %679 = vector.extract_strided_slice %629 {offsets = [8, 0], sizes = [1, 8], strides = [1, 1]} : vector<9x8xf32> to vector<1x8xf32>
    %680 = vector.broadcast %679 : vector<1x8xf32> to vector<16x8xf32>
    %681 = arith.mulf %678, %680 : vector<16x8xf32>
    %682 = tpu.concatenate %636, %642, %648, %654, %657, %663, %669, %675, %681 in 0 : vector<16x8xf32>, vector<16x8xf32>, vector<16x8xf32>, vector<16x8xf32>, vector<16x8xf32>, vector<16x8xf32>, vector<16x8xf32>, vector<16x8xf32>, vector<16x8xf32> -> vector<144x8xf32>
    %cst_85 = arith.constant dense<0.000000e+00> : vector<16x8xf32>
    %683 = tpu.matmul %630, %682, %cst_85 {dimension_numbers = #tpu.dot_dimension_numbers<[1], [0], [0], [1], [0, 0, 1, 1], [], []>} : vector<16x144xf32>, vector<144x8xf32>, vector<16x8xf32> -> vector<16x8xf32>
    %684 = vector.extract_strided_slice %0 {offsets = [88, 0], sizes = [16, 1], strides = [1, 1]} : vector<180x1xf32> to vector<16x1xf32>
    %685 = vector.broadcast %684 : vector<16x1xf32> to vector<16x8xf32>
    %686 = arith.addf %683, %685 : vector<16x8xf32>
    %cst_86 = arith.constant 0.000000e+00 : f32
    %687 = vector.broadcast %cst_86 : f32 to vector<16x8xf32>
    %688 = arith.cmpf oge, %686, %687 : vector<16x8xf32>
    %cst_87 = arith.constant 1.000000e-01 : f32
    %689 = vector.broadcast %cst_87 : f32 to vector<16x8xf32>
    %690 = arith.mulf %689, %686 : vector<16x8xf32>
    %691 = arith.select %688, %686, %690 : vector<16x8xi1>, vector<16x8xf32>
    %c0_88 = arith.constant 0 : index
    %c0_89 = arith.constant 0 : index
    %692 = vector.load %arg20[%c0_88, %c0_89] : memref<9x8xf32, #tpu.memory_space<vmem>>, vector<9x8xf32>
    %c0_90 = arith.constant 0 : index
    %c0_91 = arith.constant 0 : index
    %693 = vector.load %arg12[%c0_90, %c0_91] : memref<16x144xf32, #tpu.memory_space<vmem>>, vector<16x144xf32>
    %694 = vector.extract_strided_slice %691 {offsets = [0, 5], sizes = [16, 3], strides = [1, 1]} : vector<16x8xf32> to vector<16x3xf32>
    %695 = vector.extract_strided_slice %691 {offsets = [0, 0], sizes = [16, 5], strides = [1, 1]} : vector<16x8xf32> to vector<16x5xf32>
    %696 = tpu.concatenate %694, %695 in 1 : vector<16x3xf32>, vector<16x5xf32> -> vector<16x8xf32>
    %697 = vector.extract_strided_slice %692 {offsets = [0, 0], sizes = [1, 8], strides = [1, 1]} : vector<9x8xf32> to vector<1x8xf32>
    %698 = vector.broadcast %697 : vector<1x8xf32> to vector<16x8xf32>
    %699 = arith.mulf %696, %698 : vector<16x8xf32>
    %700 = vector.extract_strided_slice %691 {offsets = [0, 6], sizes = [16, 2], strides = [1, 1]} : vector<16x8xf32> to vector<16x2xf32>
    %701 = vector.extract_strided_slice %691 {offsets = [0, 0], sizes = [16, 6], strides = [1, 1]} : vector<16x8xf32> to vector<16x6xf32>
    %702 = tpu.concatenate %700, %701 in 1 : vector<16x2xf32>, vector<16x6xf32> -> vector<16x8xf32>
    %703 = vector.extract_strided_slice %692 {offsets = [1, 0], sizes = [1, 8], strides = [1, 1]} : vector<9x8xf32> to vector<1x8xf32>
    %704 = vector.broadcast %703 : vector<1x8xf32> to vector<16x8xf32>
    %705 = arith.mulf %702, %704 : vector<16x8xf32>
    %706 = vector.extract_strided_slice %691 {offsets = [0, 7], sizes = [16, 1], strides = [1, 1]} : vector<16x8xf32> to vector<16x1xf32>
    %707 = vector.extract_strided_slice %691 {offsets = [0, 0], sizes = [16, 7], strides = [1, 1]} : vector<16x8xf32> to vector<16x7xf32>
    %708 = tpu.concatenate %706, %707 in 1 : vector<16x1xf32>, vector<16x7xf32> -> vector<16x8xf32>
    %709 = vector.extract_strided_slice %692 {offsets = [2, 0], sizes = [1, 8], strides = [1, 1]} : vector<9x8xf32> to vector<1x8xf32>
    %710 = vector.broadcast %709 : vector<1x8xf32> to vector<16x8xf32>
    %711 = arith.mulf %708, %710 : vector<16x8xf32>
    %712 = vector.extract_strided_slice %691 {offsets = [0, 7], sizes = [16, 1], strides = [1, 1]} : vector<16x8xf32> to vector<16x1xf32>
    %713 = vector.extract_strided_slice %691 {offsets = [0, 0], sizes = [16, 7], strides = [1, 1]} : vector<16x8xf32> to vector<16x7xf32>
    %714 = tpu.concatenate %712, %713 in 1 : vector<16x1xf32>, vector<16x7xf32> -> vector<16x8xf32>
    %715 = vector.extract_strided_slice %692 {offsets = [3, 0], sizes = [1, 8], strides = [1, 1]} : vector<9x8xf32> to vector<1x8xf32>
    %716 = vector.broadcast %715 : vector<1x8xf32> to vector<16x8xf32>
    %717 = arith.mulf %714, %716 : vector<16x8xf32>
    %718 = vector.extract_strided_slice %692 {offsets = [4, 0], sizes = [1, 8], strides = [1, 1]} : vector<9x8xf32> to vector<1x8xf32>
    %719 = vector.broadcast %718 : vector<1x8xf32> to vector<16x8xf32>
    %720 = arith.mulf %691, %719 : vector<16x8xf32>
    %721 = vector.extract_strided_slice %691 {offsets = [0, 1], sizes = [16, 7], strides = [1, 1]} : vector<16x8xf32> to vector<16x7xf32>
    %722 = vector.extract_strided_slice %691 {offsets = [0, 0], sizes = [16, 1], strides = [1, 1]} : vector<16x8xf32> to vector<16x1xf32>
    %723 = tpu.concatenate %721, %722 in 1 : vector<16x7xf32>, vector<16x1xf32> -> vector<16x8xf32>
    %724 = vector.extract_strided_slice %692 {offsets = [5, 0], sizes = [1, 8], strides = [1, 1]} : vector<9x8xf32> to vector<1x8xf32>
    %725 = vector.broadcast %724 : vector<1x8xf32> to vector<16x8xf32>
    %726 = arith.mulf %723, %725 : vector<16x8xf32>
    %727 = vector.extract_strided_slice %691 {offsets = [0, 1], sizes = [16, 7], strides = [1, 1]} : vector<16x8xf32> to vector<16x7xf32>
    %728 = vector.extract_strided_slice %691 {offsets = [0, 0], sizes = [16, 1], strides = [1, 1]} : vector<16x8xf32> to vector<16x1xf32>
    %729 = tpu.concatenate %727, %728 in 1 : vector<16x7xf32>, vector<16x1xf32> -> vector<16x8xf32>
    %730 = vector.extract_strided_slice %692 {offsets = [6, 0], sizes = [1, 8], strides = [1, 1]} : vector<9x8xf32> to vector<1x8xf32>
    %731 = vector.broadcast %730 : vector<1x8xf32> to vector<16x8xf32>
    %732 = arith.mulf %729, %731 : vector<16x8xf32>
    %733 = vector.extract_strided_slice %691 {offsets = [0, 2], sizes = [16, 6], strides = [1, 1]} : vector<16x8xf32> to vector<16x6xf32>
    %734 = vector.extract_strided_slice %691 {offsets = [0, 0], sizes = [16, 2], strides = [1, 1]} : vector<16x8xf32> to vector<16x2xf32>
    %735 = tpu.concatenate %733, %734 in 1 : vector<16x6xf32>, vector<16x2xf32> -> vector<16x8xf32>
    %736 = vector.extract_strided_slice %692 {offsets = [7, 0], sizes = [1, 8], strides = [1, 1]} : vector<9x8xf32> to vector<1x8xf32>
    %737 = vector.broadcast %736 : vector<1x8xf32> to vector<16x8xf32>
    %738 = arith.mulf %735, %737 : vector<16x8xf32>
    %739 = vector.extract_strided_slice %691 {offsets = [0, 3], sizes = [16, 5], strides = [1, 1]} : vector<16x8xf32> to vector<16x5xf32>
    %740 = vector.extract_strided_slice %691 {offsets = [0, 0], sizes = [16, 3], strides = [1, 1]} : vector<16x8xf32> to vector<16x3xf32>
    %741 = tpu.concatenate %739, %740 in 1 : vector<16x5xf32>, vector<16x3xf32> -> vector<16x8xf32>
    %742 = vector.extract_strided_slice %692 {offsets = [8, 0], sizes = [1, 8], strides = [1, 1]} : vector<9x8xf32> to vector<1x8xf32>
    %743 = vector.broadcast %742 : vector<1x8xf32> to vector<16x8xf32>
    %744 = arith.mulf %741, %743 : vector<16x8xf32>
    %745 = tpu.concatenate %699, %705, %711, %717, %720, %726, %732, %738, %744 in 0 : vector<16x8xf32>, vector<16x8xf32>, vector<16x8xf32>, vector<16x8xf32>, vector<16x8xf32>, vector<16x8xf32>, vector<16x8xf32>, vector<16x8xf32>, vector<16x8xf32> -> vector<144x8xf32>
    %cst_92 = arith.constant dense<0.000000e+00> : vector<16x8xf32>
    %746 = tpu.matmul %693, %745, %cst_92 {dimension_numbers = #tpu.dot_dimension_numbers<[1], [0], [0], [1], [0, 0, 1, 1], [], []>} : vector<16x144xf32>, vector<144x8xf32>, vector<16x8xf32> -> vector<16x8xf32>
    %c0_93 = arith.constant 0 : index
    %c0_94 = arith.constant 0 : index
    %747 = vector.load %arg25[%c0_93, %c0_94] : memref<8x2xf32, #tpu.memory_space<vmem>>, vector<8x2xf32>
    %cst_95 = arith.constant dense<0.000000e+00> : vector<16x2xf32>
    %748 = tpu.matmul %746, %747, %cst_95 {dimension_numbers = #tpu.dot_dimension_numbers<[1], [0], [0], [1], [0, 0, 1, 1], [], []>} : vector<16x8xf32>, vector<8x2xf32>, vector<16x2xf32> -> vector<16x2xf32>
    %749 = vector.extract_strided_slice %0 {offsets = [104, 0], sizes = [16, 1], strides = [1, 1]} : vector<180x1xf32> to vector<16x1xf32>
    %750 = vector.broadcast %749 : vector<16x1xf32> to vector<16x2xf32>
    %751 = arith.addf %748, %750 : vector<16x2xf32>
    %cst_96 = arith.constant 0.000000e+00 : f32
    %752 = vector.broadcast %cst_96 : f32 to vector<16x2xf32>
    %753 = arith.cmpf oge, %751, %752 : vector<16x2xf32>
    %cst_97 = arith.constant 1.000000e-01 : f32
    %754 = vector.broadcast %cst_97 : f32 to vector<16x2xf32>
    %755 = arith.mulf %754, %751 : vector<16x2xf32>
    %756 = arith.select %753, %751, %755 : vector<16x2xi1>, vector<16x2xf32>
    %c0_98 = arith.constant 0 : index
    %c0_99 = arith.constant 0 : index
    %757 = vector.load %arg21[%c0_98, %c0_99] : memref<9x2xf32, #tpu.memory_space<vmem>>, vector<9x2xf32>
    %c0_100 = arith.constant 0 : index
    %c0_101 = arith.constant 0 : index
    %758 = vector.load %arg13[%c0_100, %c0_101] : memref<20x144xf32, #tpu.memory_space<vmem>>, vector<20x144xf32>
    %759 = vector.extract_strided_slice %757 {offsets = [0, 0], sizes = [1, 2], strides = [1, 1]} : vector<9x2xf32> to vector<1x2xf32>
    %760 = vector.broadcast %759 : vector<1x2xf32> to vector<16x2xf32>
    %761 = arith.mulf %756, %760 : vector<16x2xf32>
    %762 = vector.extract_strided_slice %756 {offsets = [0, 1], sizes = [16, 1], strides = [1, 1]} : vector<16x2xf32> to vector<16x1xf32>
    %763 = vector.extract_strided_slice %756 {offsets = [0, 0], sizes = [16, 1], strides = [1, 1]} : vector<16x2xf32> to vector<16x1xf32>
    %764 = tpu.concatenate %762, %763 in 1 : vector<16x1xf32>, vector<16x1xf32> -> vector<16x2xf32>
    %765 = vector.extract_strided_slice %757 {offsets = [1, 0], sizes = [1, 2], strides = [1, 1]} : vector<9x2xf32> to vector<1x2xf32>
    %766 = vector.broadcast %765 : vector<1x2xf32> to vector<16x2xf32>
    %767 = arith.mulf %764, %766 : vector<16x2xf32>
    %768 = vector.extract_strided_slice %757 {offsets = [2, 0], sizes = [1, 2], strides = [1, 1]} : vector<9x2xf32> to vector<1x2xf32>
    %769 = vector.broadcast %768 : vector<1x2xf32> to vector<16x2xf32>
    %770 = arith.mulf %756, %769 : vector<16x2xf32>
    %771 = vector.extract_strided_slice %756 {offsets = [0, 1], sizes = [16, 1], strides = [1, 1]} : vector<16x2xf32> to vector<16x1xf32>
    %772 = vector.extract_strided_slice %756 {offsets = [0, 0], sizes = [16, 1], strides = [1, 1]} : vector<16x2xf32> to vector<16x1xf32>
    %773 = tpu.concatenate %771, %772 in 1 : vector<16x1xf32>, vector<16x1xf32> -> vector<16x2xf32>
    %774 = vector.extract_strided_slice %757 {offsets = [3, 0], sizes = [1, 2], strides = [1, 1]} : vector<9x2xf32> to vector<1x2xf32>
    %775 = vector.broadcast %774 : vector<1x2xf32> to vector<16x2xf32>
    %776 = arith.mulf %773, %775 : vector<16x2xf32>
    %777 = vector.extract_strided_slice %757 {offsets = [4, 0], sizes = [1, 2], strides = [1, 1]} : vector<9x2xf32> to vector<1x2xf32>
    %778 = vector.broadcast %777 : vector<1x2xf32> to vector<16x2xf32>
    %779 = arith.mulf %756, %778 : vector<16x2xf32>
    %780 = vector.extract_strided_slice %756 {offsets = [0, 1], sizes = [16, 1], strides = [1, 1]} : vector<16x2xf32> to vector<16x1xf32>
    %781 = vector.extract_strided_slice %756 {offsets = [0, 0], sizes = [16, 1], strides = [1, 1]} : vector<16x2xf32> to vector<16x1xf32>
    %782 = tpu.concatenate %780, %781 in 1 : vector<16x1xf32>, vector<16x1xf32> -> vector<16x2xf32>
    %783 = vector.extract_strided_slice %757 {offsets = [5, 0], sizes = [1, 2], strides = [1, 1]} : vector<9x2xf32> to vector<1x2xf32>
    %784 = vector.broadcast %783 : vector<1x2xf32> to vector<16x2xf32>
    %785 = arith.mulf %782, %784 : vector<16x2xf32>
    %786 = vector.extract_strided_slice %757 {offsets = [6, 0], sizes = [1, 2], strides = [1, 1]} : vector<9x2xf32> to vector<1x2xf32>
    %787 = vector.broadcast %786 : vector<1x2xf32> to vector<16x2xf32>
    %788 = arith.mulf %756, %787 : vector<16x2xf32>
    %789 = vector.extract_strided_slice %756 {offsets = [0, 1], sizes = [16, 1], strides = [1, 1]} : vector<16x2xf32> to vector<16x1xf32>
    %790 = vector.extract_strided_slice %756 {offsets = [0, 0], sizes = [16, 1], strides = [1, 1]} : vector<16x2xf32> to vector<16x1xf32>
    %791 = tpu.concatenate %789, %790 in 1 : vector<16x1xf32>, vector<16x1xf32> -> vector<16x2xf32>
    %792 = vector.extract_strided_slice %757 {offsets = [7, 0], sizes = [1, 2], strides = [1, 1]} : vector<9x2xf32> to vector<1x2xf32>
    %793 = vector.broadcast %792 : vector<1x2xf32> to vector<16x2xf32>
    %794 = arith.mulf %791, %793 : vector<16x2xf32>
    %795 = vector.extract_strided_slice %757 {offsets = [8, 0], sizes = [1, 2], strides = [1, 1]} : vector<9x2xf32> to vector<1x2xf32>
    %796 = vector.broadcast %795 : vector<1x2xf32> to vector<16x2xf32>
    %797 = arith.mulf %756, %796 : vector<16x2xf32>
    %798 = tpu.concatenate %761, %767, %770, %776, %779, %785, %788, %794, %797 in 0 : vector<16x2xf32>, vector<16x2xf32>, vector<16x2xf32>, vector<16x2xf32>, vector<16x2xf32>, vector<16x2xf32>, vector<16x2xf32>, vector<16x2xf32>, vector<16x2xf32> -> vector<144x2xf32>
    %cst_102 = arith.constant dense<0.000000e+00> : vector<20x2xf32>
    %799 = tpu.matmul %758, %798, %cst_102 {dimension_numbers = #tpu.dot_dimension_numbers<[1], [0], [0], [1], [0, 0, 1, 1], [], []>} : vector<20x144xf32>, vector<144x2xf32>, vector<20x2xf32> -> vector<20x2xf32>
    %800 = vector.extract_strided_slice %0 {offsets = [120, 0], sizes = [20, 1], strides = [1, 1]} : vector<180x1xf32> to vector<20x1xf32>
    %801 = vector.broadcast %800 : vector<20x1xf32> to vector<20x2xf32>
    %802 = arith.addf %799, %801 : vector<20x2xf32>
    %cst_103 = arith.constant 0.000000e+00 : f32
    %803 = vector.broadcast %cst_103 : f32 to vector<20x2xf32>
    %804 = arith.cmpf oge, %802, %803 : vector<20x2xf32>
    %cst_104 = arith.constant 1.000000e-01 : f32
    %805 = vector.broadcast %cst_104 : f32 to vector<20x2xf32>
    %806 = arith.mulf %805, %802 : vector<20x2xf32>
    %807 = arith.select %804, %802, %806 : vector<20x2xi1>, vector<20x2xf32>
    %c0_105 = arith.constant 0 : index
    %c0_106 = arith.constant 0 : index
    %808 = vector.load %arg21[%c0_105, %c0_106] : memref<9x2xf32, #tpu.memory_space<vmem>>, vector<9x2xf32>
    %c0_107 = arith.constant 0 : index
    %c0_108 = arith.constant 0 : index
    %809 = vector.load %arg14[%c0_107, %c0_108] : memref<20x180xf32, #tpu.memory_space<vmem>>, vector<20x180xf32>
    %810 = vector.extract_strided_slice %808 {offsets = [0, 0], sizes = [1, 2], strides = [1, 1]} : vector<9x2xf32> to vector<1x2xf32>
    %811 = vector.broadcast %810 : vector<1x2xf32> to vector<20x2xf32>
    %812 = arith.mulf %807, %811 : vector<20x2xf32>
    %813 = vector.extract_strided_slice %807 {offsets = [0, 1], sizes = [20, 1], strides = [1, 1]} : vector<20x2xf32> to vector<20x1xf32>
    %814 = vector.extract_strided_slice %807 {offsets = [0, 0], sizes = [20, 1], strides = [1, 1]} : vector<20x2xf32> to vector<20x1xf32>
    %815 = tpu.concatenate %813, %814 in 1 : vector<20x1xf32>, vector<20x1xf32> -> vector<20x2xf32>
    %816 = vector.extract_strided_slice %808 {offsets = [1, 0], sizes = [1, 2], strides = [1, 1]} : vector<9x2xf32> to vector<1x2xf32>
    %817 = vector.broadcast %816 : vector<1x2xf32> to vector<20x2xf32>
    %818 = arith.mulf %815, %817 : vector<20x2xf32>
    %819 = vector.extract_strided_slice %808 {offsets = [2, 0], sizes = [1, 2], strides = [1, 1]} : vector<9x2xf32> to vector<1x2xf32>
    %820 = vector.broadcast %819 : vector<1x2xf32> to vector<20x2xf32>
    %821 = arith.mulf %807, %820 : vector<20x2xf32>
    %822 = vector.extract_strided_slice %807 {offsets = [0, 1], sizes = [20, 1], strides = [1, 1]} : vector<20x2xf32> to vector<20x1xf32>
    %823 = vector.extract_strided_slice %807 {offsets = [0, 0], sizes = [20, 1], strides = [1, 1]} : vector<20x2xf32> to vector<20x1xf32>
    %824 = tpu.concatenate %822, %823 in 1 : vector<20x1xf32>, vector<20x1xf32> -> vector<20x2xf32>
    %825 = vector.extract_strided_slice %808 {offsets = [3, 0], sizes = [1, 2], strides = [1, 1]} : vector<9x2xf32> to vector<1x2xf32>
    %826 = vector.broadcast %825 : vector<1x2xf32> to vector<20x2xf32>
    %827 = arith.mulf %824, %826 : vector<20x2xf32>
    %828 = vector.extract_strided_slice %808 {offsets = [4, 0], sizes = [1, 2], strides = [1, 1]} : vector<9x2xf32> to vector<1x2xf32>
    %829 = vector.broadcast %828 : vector<1x2xf32> to vector<20x2xf32>
    %830 = arith.mulf %807, %829 : vector<20x2xf32>
    %831 = vector.extract_strided_slice %807 {offsets = [0, 1], sizes = [20, 1], strides = [1, 1]} : vector<20x2xf32> to vector<20x1xf32>
    %832 = vector.extract_strided_slice %807 {offsets = [0, 0], sizes = [20, 1], strides = [1, 1]} : vector<20x2xf32> to vector<20x1xf32>
    %833 = tpu.concatenate %831, %832 in 1 : vector<20x1xf32>, vector<20x1xf32> -> vector<20x2xf32>
    %834 = vector.extract_strided_slice %808 {offsets = [5, 0], sizes = [1, 2], strides = [1, 1]} : vector<9x2xf32> to vector<1x2xf32>
    %835 = vector.broadcast %834 : vector<1x2xf32> to vector<20x2xf32>
    %836 = arith.mulf %833, %835 : vector<20x2xf32>
    %837 = vector.extract_strided_slice %808 {offsets = [6, 0], sizes = [1, 2], strides = [1, 1]} : vector<9x2xf32> to vector<1x2xf32>
    %838 = vector.broadcast %837 : vector<1x2xf32> to vector<20x2xf32>
    %839 = arith.mulf %807, %838 : vector<20x2xf32>
    %840 = vector.extract_strided_slice %807 {offsets = [0, 1], sizes = [20, 1], strides = [1, 1]} : vector<20x2xf32> to vector<20x1xf32>
    %841 = vector.extract_strided_slice %807 {offsets = [0, 0], sizes = [20, 1], strides = [1, 1]} : vector<20x2xf32> to vector<20x1xf32>
    %842 = tpu.concatenate %840, %841 in 1 : vector<20x1xf32>, vector<20x1xf32> -> vector<20x2xf32>
    %843 = vector.extract_strided_slice %808 {offsets = [7, 0], sizes = [1, 2], strides = [1, 1]} : vector<9x2xf32> to vector<1x2xf32>
    %844 = vector.broadcast %843 : vector<1x2xf32> to vector<20x2xf32>
    %845 = arith.mulf %842, %844 : vector<20x2xf32>
    %846 = vector.extract_strided_slice %808 {offsets = [8, 0], sizes = [1, 2], strides = [1, 1]} : vector<9x2xf32> to vector<1x2xf32>
    %847 = vector.broadcast %846 : vector<1x2xf32> to vector<20x2xf32>
    %848 = arith.mulf %807, %847 : vector<20x2xf32>
    %849 = tpu.concatenate %812, %818, %821, %827, %830, %836, %839, %845, %848 in 0 : vector<20x2xf32>, vector<20x2xf32>, vector<20x2xf32>, vector<20x2xf32>, vector<20x2xf32>, vector<20x2xf32>, vector<20x2xf32>, vector<20x2xf32>, vector<20x2xf32> -> vector<180x2xf32>
    %cst_109 = arith.constant dense<0.000000e+00> : vector<20x2xf32>
    %850 = tpu.matmul %809, %849, %cst_109 {dimension_numbers = #tpu.dot_dimension_numbers<[1], [0], [0], [1], [0, 0, 1, 1], [], []>} : vector<20x180xf32>, vector<180x2xf32>, vector<20x2xf32> -> vector<20x2xf32>
    %851 = vector.extract_strided_slice %0 {offsets = [140, 0], sizes = [20, 1], strides = [1, 1]} : vector<180x1xf32> to vector<20x1xf32>
    %852 = vector.broadcast %851 : vector<20x1xf32> to vector<20x2xf32>
    %853 = arith.addf %850, %852 : vector<20x2xf32>
    %cst_110 = arith.constant 0.000000e+00 : f32
    %854 = vector.broadcast %cst_110 : f32 to vector<20x2xf32>
    %855 = arith.cmpf oge, %853, %854 : vector<20x2xf32>
    %cst_111 = arith.constant 1.000000e-01 : f32
    %856 = vector.broadcast %cst_111 : f32 to vector<20x2xf32>
    %857 = arith.mulf %856, %853 : vector<20x2xf32>
    %858 = arith.select %855, %853, %857 : vector<20x2xi1>, vector<20x2xf32>
    %c0_112 = arith.constant 0 : index
    %c0_113 = arith.constant 0 : index
    %859 = vector.load %arg21[%c0_112, %c0_113] : memref<9x2xf32, #tpu.memory_space<vmem>>, vector<9x2xf32>
    %c0_114 = arith.constant 0 : index
    %c0_115 = arith.constant 0 : index
    %860 = vector.load %arg15[%c0_114, %c0_115] : memref<20x180xf32, #tpu.memory_space<vmem>>, vector<20x180xf32>
    %861 = vector.extract_strided_slice %859 {offsets = [0, 0], sizes = [1, 2], strides = [1, 1]} : vector<9x2xf32> to vector<1x2xf32>
    %862 = vector.broadcast %861 : vector<1x2xf32> to vector<20x2xf32>
    %863 = arith.mulf %858, %862 : vector<20x2xf32>
    %864 = vector.extract_strided_slice %858 {offsets = [0, 1], sizes = [20, 1], strides = [1, 1]} : vector<20x2xf32> to vector<20x1xf32>
    %865 = vector.extract_strided_slice %858 {offsets = [0, 0], sizes = [20, 1], strides = [1, 1]} : vector<20x2xf32> to vector<20x1xf32>
    %866 = tpu.concatenate %864, %865 in 1 : vector<20x1xf32>, vector<20x1xf32> -> vector<20x2xf32>
    %867 = vector.extract_strided_slice %859 {offsets = [1, 0], sizes = [1, 2], strides = [1, 1]} : vector<9x2xf32> to vector<1x2xf32>
    %868 = vector.broadcast %867 : vector<1x2xf32> to vector<20x2xf32>
    %869 = arith.mulf %866, %868 : vector<20x2xf32>
    %870 = vector.extract_strided_slice %859 {offsets = [2, 0], sizes = [1, 2], strides = [1, 1]} : vector<9x2xf32> to vector<1x2xf32>
    %871 = vector.broadcast %870 : vector<1x2xf32> to vector<20x2xf32>
    %872 = arith.mulf %858, %871 : vector<20x2xf32>
    %873 = vector.extract_strided_slice %858 {offsets = [0, 1], sizes = [20, 1], strides = [1, 1]} : vector<20x2xf32> to vector<20x1xf32>
    %874 = vector.extract_strided_slice %858 {offsets = [0, 0], sizes = [20, 1], strides = [1, 1]} : vector<20x2xf32> to vector<20x1xf32>
    %875 = tpu.concatenate %873, %874 in 1 : vector<20x1xf32>, vector<20x1xf32> -> vector<20x2xf32>
    %876 = vector.extract_strided_slice %859 {offsets = [3, 0], sizes = [1, 2], strides = [1, 1]} : vector<9x2xf32> to vector<1x2xf32>
    %877 = vector.broadcast %876 : vector<1x2xf32> to vector<20x2xf32>
    %878 = arith.mulf %875, %877 : vector<20x2xf32>
    %879 = vector.extract_strided_slice %859 {offsets = [4, 0], sizes = [1, 2], strides = [1, 1]} : vector<9x2xf32> to vector<1x2xf32>
    %880 = vector.broadcast %879 : vector<1x2xf32> to vector<20x2xf32>
    %881 = arith.mulf %858, %880 : vector<20x2xf32>
    %882 = vector.extract_strided_slice %858 {offsets = [0, 1], sizes = [20, 1], strides = [1, 1]} : vector<20x2xf32> to vector<20x1xf32>
    %883 = vector.extract_strided_slice %858 {offsets = [0, 0], sizes = [20, 1], strides = [1, 1]} : vector<20x2xf32> to vector<20x1xf32>
    %884 = tpu.concatenate %882, %883 in 1 : vector<20x1xf32>, vector<20x1xf32> -> vector<20x2xf32>
    %885 = vector.extract_strided_slice %859 {offsets = [5, 0], sizes = [1, 2], strides = [1, 1]} : vector<9x2xf32> to vector<1x2xf32>
    %886 = vector.broadcast %885 : vector<1x2xf32> to vector<20x2xf32>
    %887 = arith.mulf %884, %886 : vector<20x2xf32>
    %888 = vector.extract_strided_slice %859 {offsets = [6, 0], sizes = [1, 2], strides = [1, 1]} : vector<9x2xf32> to vector<1x2xf32>
    %889 = vector.broadcast %888 : vector<1x2xf32> to vector<20x2xf32>
    %890 = arith.mulf %858, %889 : vector<20x2xf32>
    %891 = vector.extract_strided_slice %858 {offsets = [0, 1], sizes = [20, 1], strides = [1, 1]} : vector<20x2xf32> to vector<20x1xf32>
    %892 = vector.extract_strided_slice %858 {offsets = [0, 0], sizes = [20, 1], strides = [1, 1]} : vector<20x2xf32> to vector<20x1xf32>
    %893 = tpu.concatenate %891, %892 in 1 : vector<20x1xf32>, vector<20x1xf32> -> vector<20x2xf32>
    %894 = vector.extract_strided_slice %859 {offsets = [7, 0], sizes = [1, 2], strides = [1, 1]} : vector<9x2xf32> to vector<1x2xf32>
    %895 = vector.broadcast %894 : vector<1x2xf32> to vector<20x2xf32>
    %896 = arith.mulf %893, %895 : vector<20x2xf32>
    %897 = vector.extract_strided_slice %859 {offsets = [8, 0], sizes = [1, 2], strides = [1, 1]} : vector<9x2xf32> to vector<1x2xf32>
    %898 = vector.broadcast %897 : vector<1x2xf32> to vector<20x2xf32>
    %899 = arith.mulf %858, %898 : vector<20x2xf32>
    %900 = tpu.concatenate %863, %869, %872, %878, %881, %887, %890, %896, %899 in 0 : vector<20x2xf32>, vector<20x2xf32>, vector<20x2xf32>, vector<20x2xf32>, vector<20x2xf32>, vector<20x2xf32>, vector<20x2xf32>, vector<20x2xf32>, vector<20x2xf32> -> vector<180x2xf32>
    %cst_116 = arith.constant dense<0.000000e+00> : vector<20x2xf32>
    %901 = tpu.matmul %860, %900, %cst_116 {dimension_numbers = #tpu.dot_dimension_numbers<[1], [0], [0], [1], [0, 0, 1, 1], [], []>} : vector<20x180xf32>, vector<180x2xf32>, vector<20x2xf32> -> vector<20x2xf32>
    %902 = vector.extract_strided_slice %0 {offsets = [160, 0], sizes = [20, 1], strides = [1, 1]} : vector<180x1xf32> to vector<20x1xf32>
    %903 = vector.broadcast %902 : vector<20x1xf32> to vector<20x2xf32>
    %904 = arith.addf %901, %903 : vector<20x2xf32>
    %cst_117 = arith.constant 0.000000e+00 : f32
    %905 = vector.broadcast %cst_117 : f32 to vector<20x2xf32>
    %906 = arith.cmpf oge, %904, %905 : vector<20x2xf32>
    %cst_118 = arith.constant 1.000000e-01 : f32
    %907 = vector.broadcast %cst_118 : f32 to vector<20x2xf32>
    %908 = arith.mulf %907, %904 : vector<20x2xf32>
    %909 = arith.select %906, %904, %908 : vector<20x2xi1>, vector<20x2xf32>
    %c0_119 = arith.constant 0 : index
    %c0_120 = arith.constant 0 : index
    %910 = vector.load %arg29[%c0_119, %c0_120] : memref<20x2xf32, #tpu.memory_space<vmem>>, vector<20x2xf32>
    tpu.vector_store %arg29[%c0_119, %c0_120], %909 {strides = array<i32>} : memref<20x2xf32, #tpu.memory_space<vmem>>, vector<20x2xf32>,
    %c0_121 = arith.constant 0 : index
    %c0_122 = arith.constant 0 : index
    %911 = vector.load %arg26[%c0_121, %c0_122] : memref<20x2xf32, #tpu.memory_space<vmem>>, vector<20x2xf32>
    %912 = arith.mulf %909, %911 : vector<20x2xf32>
    %cst_123 = arith.constant dense<0.000000e+00> : vector<2xf32>
    %913 = vector.multi_reduction <add>, %912, %cst_123 [0] : vector<20x2xf32> to vector<2xf32>
    %914 = vector.shape_cast %913 : vector<2xf32> to vector<1x2xf32>
    %c0_124 = arith.constant 0 : index
    %c0_125 = arith.constant 0 : index
    %915 = vector.load %arg27[%c0_124, %c0_125] : memref<2x2xf32, #tpu.memory_space<vmem>>, vector<2x2xf32>
    %cst_126 = arith.constant dense<0.000000e+00> : vector<1x2xf32>
    %916 = tpu.matmul %914, %915, %cst_126 {dimension_numbers = #tpu.dot_dimension_numbers<[1], [0], [0], [1], [0, 0, 1, 1], [], []>} : vector<1x2xf32>, vector<2x2xf32>, vector<1x2xf32> -> vector<1x2xf32>
    %c0_127 = arith.constant 0 : index
    %c0_128 = arith.constant 0 : index
    %917 = vector.load %arg28[%c0_127, %c0_128] : memref<1x1xf32, #tpu.memory_space<vmem>>, vector<1x1xf32>
    %918 = vector.broadcast %917 : vector<1x1xf32> to vector<1x2xf32>
    %919 = arith.addf %916, %918 : vector<1x2xf32>
    %cst_129 = arith.constant 0.000000e+00 : f32
    %920 = vector.broadcast %cst_129 : f32 to vector<1x2xf32>
    %921 = arith.subf %920, %919 : vector<1x2xf32>
    %922 = math.exp %921 : vector<1x2xf32>
    %cst_130 = arith.constant 1.000000e+00 : f32
    %923 = vector.broadcast %cst_130 : f32 to vector<1x2xf32>
    %924 = arith.addf %923, %922 : vector<1x2xf32>
    %cst_131 = arith.constant 1.000000e+00 : f32
    %925 = vector.broadcast %cst_131 : f32 to vector<1x2xf32>
    %926 = arith.divf %925, %924 : vector<1x2xf32>
    %c0_132 = arith.constant 0 : index
    %c0_133 = arith.constant 0 : index
    %927 = vector.load %arg30[%c0_132, %c0_133] : memref<1x2xf32, #tpu.memory_space<vmem>>, vector<1x2xf32>
    tpu.vector_store %arg30[%c0_132, %c0_133], %926 {strides = array<i32>} : memref<1x2xf32, #tpu.memory_space<vmem>>, vector<1x2xf32>,
    return
  }
}

</mosaic_0001>

<llo_original>
// kernel: _lambda_.1
$region0: #{_lambda_.1}
  #allocation0 [shape = 'u32[]', space=smem, size = 0x4, offset = 0x4, fixed_abs, tag = 'smem constant byte address 0x4 - core index']
  #allocation1 [shape = 'u32[72,128]{1,0:T(1,128)}', space=vmem, size = 0x9000, scoped, tag = 'internal scratch']
  #allocation2 [shape = 'f32[1,1]{1,0:T(1,128)S(1)}', space=vmem, size = 0x200, scoped, tag = 'scoped memory for _lambda_.1']
  %s0 = inlined_call_operand.smem [shape: u32[31], index: -1, kind: input, shape index: {}]
  %s1 = sld [smem:[%s0]]
  %s2 = scalar_lea.smem %s0, 1
  %s3 = sld [smem:[%s2]]
  %s4 = scalar_lea.smem %s0, 2
  %s5 = sld [smem:[%s4]]
  %s6 = scalar_lea.smem %s0, 3
  %s7 = sld [smem:[%s6]]
  %s8 = scalar_lea.smem %s0, 4
  %s9 = sld [smem:[%s8]]
  %s10 = scalar_lea.smem %s0, 5
  %s11 = sld [smem:[%s10]]
  %s12 = scalar_lea.smem %s0, 6
  %s13 = sld [smem:[%s12]]
  %s14 = scalar_lea.smem %s0, 7
  %s15 = sld [smem:[%s14]]
  %s16 = scalar_lea.smem %s0, 8
  %s17 = sld [smem:[%s16]]
  %s18 = scalar_lea.smem %s0, 9
  %s19 = sld [smem:[%s18]]
  %s20 = scalar_lea.smem %s0, 10
  %s21 = sld [smem:[%s20]]
  %s22 = scalar_lea.smem %s0, 11
  %s23 = sld [smem:[%s22]]
  %s24 = scalar_lea.smem %s0, 12
  %s25 = sld [smem:[%s24]]
  %s26 = scalar_lea.smem %s0, 13
  %s27 = sld [smem:[%s26]]
  %s28 = scalar_lea.smem %s0, 14
  %s29 = sld [smem:[%s28]]
  %s30 = scalar_lea.smem %s0, 15
  %s31 = sld [smem:[%s30]]
  %s32 = scalar_lea.smem %s0, 16
  %s33 = sld [smem:[%s32]]
  %s34 = scalar_lea.smem %s0, 17
  %s35 = sld [smem:[%s34]]
  %s36 = scalar_lea.smem %s0, 18
  %s37 = sld [smem:[%s36]]
  %s38 = scalar_lea.smem %s0, 19
  %s39 = sld [smem:[%s38]]
  %s40 = scalar_lea.smem %s0, 20
  %s41 = sld [smem:[%s40]]
  %s42 = scalar_lea.smem %s0, 21
  %s43 = sld [smem:[%s42]]
  %s44 = scalar_lea.smem %s0, 22
  %s45 = sld [smem:[%s44]]
  %s46 = scalar_lea.smem %s0, 23
  %s47 = sld [smem:[%s46]]
  %s48 = scalar_lea.smem %s0, 24
  %s49 = sld [smem:[%s48]]
  %s50 = scalar_lea.smem %s0, 25
  %s51 = sld [smem:[%s50]]
  %s52 = scalar_lea.smem %s0, 26
  %s53 = sld [smem:[%s52]]
  %s54 = scalar_lea.smem %s0, 27
  %s55 = sld [smem:[%s54]]
  %s56 = scalar_lea.smem %s0, 28
  %s57 = sld [smem:[%s56]]
  %s58 = scalar_lea.smem %s0, 29
  %s59 = sld [smem:[%s58]]
  %s60 = scalar_lea.smem %s0, 30
  %s61 = sld [smem:[%s60]]
  %62 = xla_tuple %s59, %s61
  %s63 = sld [smem:[#allocation0]]
  $region226: #{_lambda_.1} parent=0
    _
  %s65 = ssub.s32 1, %s63
  %s66 = scalar_select 0, %s65, %s63
  %v67 = vstv %s57
  %68 = vst [vmem:[#allocation2] sm:$0x1] %v67
  $region1: #{_lambda_.1} parent=0
    #allocation3 [shape = 'u8[2048]{0}', space=vmem, size = 0x800, scoped, tag = 'input window, operand 1, single buffered']
    #allocation4 [shape = 's32[1]{0}', space=sflag, size = 0x4, scoped, tag = 'scoped memory for _lambda_.1']
    #allocation5 [shape = 's32[1]{0}', space=sflag, size = 0x4, scoped, tag = 'scoped memory for _lambda_.1']
    #allocation6 [shape = 'u8[2048]{0}', space=vmem, size = 0x800, scoped, tag = 'input window, operand 2, single buffered']
    #allocation7 [shape = 's32[1]{0}', space=sflag, size = 0x4, scoped, tag = 'scoped memory for _lambda_.1']
    #allocation8 [shape = 'u8[4096]{0}', space=vmem, size = 0x1000, scoped, tag = 'input window, operand 4, single buffered']
    #allocation9 [shape = 'u8[4096]{0}', space=vmem, size = 0x1000, scoped, tag = 'input window, operand 5, single buffered']
    #allocation10 [shape = 's32[1]{0}', space=sflag, size = 0x4, scoped, tag = 'scoped memory for _lambda_.1']
    #allocation11 [shape = 'u8[4096]{0}', space=vmem, size = 0x1000, scoped, tag = 'input window, operand 6, single buffered']
    #allocation12 [shape = 'u8[8192]{0}', space=vmem, size = 0x2000, scoped, tag = 'input window, operand 7, single buffered']
    #allocation13 [shape = 's32[1]{0}', space=sflag, size = 0x4, scoped, tag = 'scoped memory for _lambda_.1']
    #allocation14 [shape = 'u8[8192]{0}', space=vmem, size = 0x2000, scoped, tag = 'input window, operand 8, single buffered']
    #allocation15 [shape = 'u8[8192]{0}', space=vmem, size = 0x2000, scoped, tag = 'input window, operand 9, single buffered']
    #allocation16 [shape = 's32[1]{0}', space=sflag, size = 0x4, scoped, tag = 'scoped memory for _lambda_.1']
    #allocation17 [shape = 'u8[8192]{0}', space=vmem, size = 0x2000, scoped, tag = 'input window, operand 10, single buffered']
    #allocation18 [shape = 'u8[16384]{0}', space=vmem, size = 0x4000, scoped, tag = 'input window, operand 11, single buffered']
    #allocation19 [shape = 's32[1]{0}', space=sflag, size = 0x4, scoped, tag = 'scoped memory for _lambda_.1']
    #allocation20 [shape = 'u8[24576]{0}', space=vmem, size = 0x6000, scoped, tag = 'input window, operand 13, single buffered']
    #allocation21 [shape = 'u8[24576]{0}', space=vmem, size = 0x6000, scoped, tag = 'input window, operand 14, single buffered']
    #allocation22 [shape = 's32[1]{0}', space=sflag, size = 0x4, scoped, tag = 'scoped memory for _lambda_.1']
    #allocation23 [shape = 'u8[94208]{0}', space=vmem, size = 0x17000, scoped, tag = 'input window, operand 16, single buffered']
    #allocation24 [shape = 'u8[32768]{0}', space=vmem, size = 0x8000, scoped, tag = 'input window, operand 17, single buffered']
    #allocation25 [shape = 's32[1]{0}', space=sflag, size = 0x4, scoped, tag = 'scoped memory for _lambda_.1']
    #allocation26 [shape = 'u8[8192]{0}', space=vmem, size = 0x2000, scoped, tag = 'input window, operand 18, single buffered']
    #allocation27 [shape = 'u8[8192]{0}', space=vmem, size = 0x2000, scoped, tag = 'input window, operand 19, single buffered']
    #allocation28 [shape = 's32[1]{0}', space=sflag, size = 0x4, scoped, tag = 'scoped memory for _lambda_.1']
    #allocation29 [shape = 'u8[8192]{0}', space=vmem, size = 0x2000, scoped, tag = 'input window, operand 20, single buffered']
    #allocation30 [shape = 'u8[8192]{0}', space=vmem, size = 0x2000, scoped, tag = 'input window, operand 21, single buffered']
    #allocation31 [shape = 's32[1]{0}', space=sflag, size = 0x4, scoped, tag = 'scoped memory for _lambda_.1']
    #allocation32 [shape = 'u8[262144]{0}', space=vmem, size = 0x40000, scoped, tag = 'input window, operand 22, single buffered']
    #allocation33 [shape = 'u8[65536]{0}', space=vmem, size = 0x10000, scoped, tag = 'input window, operand 23, single buffered']
    #allocation34 [shape = 's32[1]{0}', space=sflag, size = 0x4, scoped, tag = 'scoped memory for _lambda_.1']
    #allocation35 [shape = 'u8[16384]{0}', space=vmem, size = 0x4000, scoped, tag = 'input window, operand 24, single buffered']
    #allocation36 [shape = 'u8[4096]{0}', space=vmem, size = 0x1000, scoped, tag = 'input window, operand 25, single buffered']
    #allocation37 [shape = 's32[1]{0}', space=sflag, size = 0x4, scoped, tag = 'scoped memory for _lambda_.1']
    #allocation38 [shape = 'u8[1024]{0}', space=vmem, size = 0x400, scoped, tag = 'input window, operand 27, single buffered']
    #allocation39 [shape = 'u8[512]{0}', space=vmem, size = 0x400, scoped, tag = 'output window, operand 1, single buffered']
    %69 = vsyncpa [#allocation4], 0
    %70 = vsyncpa [#allocation7], 0
    %71 = vsyncpa [#allocation10], 0
    %72 = vsyncpa [#allocation13], 0
    %73 = vsyncpa [#allocation16], 0
    %74 = vsyncpa [#allocation19], 0
    %75 = vsyncpa [#allocation22], 0
    %76 = vsyncpa [#allocation25], 0
    %77 = vsyncpa [#allocation28], 0
    %78 = vsyncpa [#allocation31], 0
    %79 = vsyncpa [#allocation34], 0
    %80 = vsyncpa [#allocation37], 0
    %81 = vsyncpa [#allocation5], 0
    // Predicated region
    $region2: #{_lambda_.1} parent=1 // pred_check
      _
    $region3: #{_lambda_.1} parent=1 // pred_check_branch
      %83 = sbr.rel (0) target = $region5
    $region4: #{_lambda_.1} parent=1 // pred_region
      _
    $region5: #{_lambda_.1} parent=1 // pred_fallthru
      _
    // Predicated region
    $region6: #{_lambda_.1} parent=1 // pred_check
      _
    $region7: #{_lambda_.1} parent=1 // pred_check_branch
      %85 = sbr.rel (0) target = $region9
    $region8: #{_lambda_.1} parent=1 // pred_region
      %87 = vsyncadd [#allocation4], 0
      %s89 = sshll.u32 %s3, 4
      %s90 = int_to_ptr.hbm [resolvable:$true] %s89
      %s91 = sshll.u32 [#allocation3], 4
      %s92 = int_to_ptr.vmem [resolvable:$true] %s91
      %94 = dma.hbm_to_vmem [thread:$0]  %s90, 64, %s92, [#allocation4]
    $region9: #{_lambda_.1} parent=1 // pred_fallthru
      _
    // Predicated region
    $region10: #{_lambda_.1} parent=1 // pred_check
      _
    $region11: #{_lambda_.1} parent=1 // pred_check_branch
      %96 = sbr.rel (0) target = $region13
    $region12: #{_lambda_.1} parent=1 // pred_region
      %98 = vsyncadd [#allocation7], 0
      %s100 = sshll.u32 %s5, 4
      %s101 = int_to_ptr.hbm [resolvable:$true] %s100
      %s102 = sshll.u32 [#allocation6], 4
      %s103 = int_to_ptr.vmem [resolvable:$true] %s102
      %105 = dma.hbm_to_vmem [thread:$0]  %s101, 64, %s103, [#allocation7]
    $region13: #{_lambda_.1} parent=1 // pred_fallthru
      _
    // Predicated region
    $region14: #{_lambda_.1} parent=1 // pred_check
      _
    $region15: #{_lambda_.1} parent=1 // pred_check_branch
      %107 = sbr.rel (0) target = $region17
    $region16: #{_lambda_.1} parent=1 // pred_region
      _
    $region17: #{_lambda_.1} parent=1 // pred_fallthru
      _
    // Predicated region
    $region18: #{_lambda_.1} parent=1 // pred_check
      _
    $region19: #{_lambda_.1} parent=1 // pred_check_branch
      %109 = sbr.rel (0) target = $region21
    $region20: #{_lambda_.1} parent=1 // pred_region
      %111 = vsyncadd [#allocation7], 0
      %s113 = sshll.u32 %s9, 4
      %s114 = int_to_ptr.hbm [resolvable:$true] %s113
      %s115 = sshll.u32 [#allocation8], 4
      %s116 = int_to_ptr.vmem [resolvable:$true] %s115
      %118 = dma.hbm_to_vmem [thread:$0]  %s114, 128, %s116, [#allocation7]
    $region21: #{_lambda_.1} parent=1 // pred_fallthru
      _
    // Predicated region
    $region22: #{_lambda_.1} parent=1 // pred_check
      _
    $region23: #{_lambda_.1} parent=1 // pred_check_branch
      %120 = sbr.rel (0) target = $region25
    $region24: #{_lambda_.1} parent=1 // pred_region
      %122 = vsyncadd [#allocation10], 0
      %s124 = sshll.u32 %s11, 4
      %s125 = int_to_ptr.hbm [resolvable:$true] %s124
      %s126 = sshll.u32 [#allocation9], 4
      %s127 = int_to_ptr.vmem [resolvable:$true] %s126
      %129 = dma.hbm_to_vmem [thread:$0]  %s125, 128, %s127, [#allocation10]
    $region25: #{_lambda_.1} parent=1 // pred_fallthru
      _
    // Predicated region
    $region26: #{_lambda_.1} parent=1 // pred_check
      _
    $region27: #{_lambda_.1} parent=1 // pred_check_branch
      %131 = sbr.rel (0) target = $region29
    $region28: #{_lambda_.1} parent=1 // pred_region
      %133 = vsyncadd [#allocation10], 0
      %s135 = sshll.u32 %s13, 4
      %s136 = int_to_ptr.hbm [resolvable:$true] %s135
      %s137 = sshll.u32 [#allocation11], 4
      %s138 = int_to_ptr.vmem [resolvable:$true] %s137
      %140 = dma.hbm_to_vmem [thread:$0]  %s136, 128, %s138, [#allocation10]
    $region29: #{_lambda_.1} parent=1 // pred_fallthru
      _
    // Predicated region
    $region30: #{_lambda_.1} parent=1 // pred_check
      _
    $region31: #{_lambda_.1} parent=1 // pred_check_branch
      %142 = sbr.rel (0) target = $region33
    $region32: #{_lambda_.1} parent=1 // pred_region
      %144 = vsyncadd [#allocation13], 0
      %s145 = sshll.u32 %s15, 4
      %s146 = int_to_ptr.hbm [resolvable:$true] %s145
      %s147 = sshll.u32 [#allocation12], 4
      %s148 = int_to_ptr.vmem [resolvable:$true] %s147
      %153 = dma.hbm_to_vmem [thread:$0]  %s146, 256, %s148, [#allocation13], 128, 128, 8
    $region33: #{_lambda_.1} parent=1 // pred_fallthru
      _
    // Predicated region
    $region34: #{_lambda_.1} parent=1 // pred_check
      _
    $region35: #{_lambda_.1} parent=1 // pred_check_branch
      %155 = sbr.rel (0) target = $region37
    $region36: #{_lambda_.1} parent=1 // pred_region
      %157 = vsyncadd [#allocation13], 0
      %s158 = sshll.u32 %s17, 4
      %s159 = int_to_ptr.hbm [resolvable:$true] %s158
      %s160 = sshll.u32 [#allocation14], 4
      %s161 = int_to_ptr.vmem [resolvable:$true] %s160
      %166 = dma.hbm_to_vmem [thread:$0]  %s159, 256, %s161, [#allocation13], 128, 128, 8
    $region37: #{_lambda_.1} parent=1 // pred_fallthru
      _
    // Predicated region
    $region38: #{_lambda_.1} parent=1 // pred_check
      _
    $region39: #{_lambda_.1} parent=1 // pred_check_branch
      %168 = sbr.rel (0) target = $region41
    $region40: #{_lambda_.1} parent=1 // pred_region
      %170 = vsyncadd [#allocation16], 0
      %s171 = sshll.u32 %s19, 4
      %s172 = int_to_ptr.hbm [resolvable:$true] %s171
      %s173 = sshll.u32 [#allocation15], 4
      %s174 = int_to_ptr.vmem [resolvable:$true] %s173
      %179 = dma.hbm_to_vmem [thread:$0]  %s172, 256, %s174, [#allocation16], 128, 128, 8
    $region41: #{_lambda_.1} parent=1 // pred_fallthru
      _
    // Predicated region
    $region42: #{_lambda_.1} parent=1 // pred_check
      _
    $region43: #{_lambda_.1} parent=1 // pred_check_branch
      %181 = sbr.rel (0) target = $region45
    $region44: #{_lambda_.1} parent=1 // pred_region
      %183 = vsyncadd [#allocation16], 0
      %s184 = sshll.u32 %s21, 4
      %s185 = int_to_ptr.hbm [resolvable:$true] %s184
      %s186 = sshll.u32 [#allocation17], 4
      %s187 = int_to_ptr.vmem [resolvable:$true] %s186
      %192 = dma.hbm_to_vmem [thread:$0]  %s185, 256, %s187, [#allocation16], 128, 128, 8
    $region45: #{_lambda_.1} parent=1 // pred_fallthru
      _
    // Predicated region
    $region46: #{_lambda_.1} parent=1 // pred_check
      _
    $region47: #{_lambda_.1} parent=1 // pred_check_branch
      %194 = sbr.rel (0) target = $region49
    $region48: #{_lambda_.1} parent=1 // pred_region
      %196 = vsyncadd [#allocation19], 0
      %s197 = sshll.u32 %s23, 4
      %s198 = int_to_ptr.hbm [resolvable:$true] %s197
      %s199 = sshll.u32 [#allocation18], 4
      %s200 = int_to_ptr.vmem [resolvable:$true] %s199
      %205 = dma.hbm_to_vmem [thread:$0]  %s198, 512, %s200, [#allocation19], 256, 256, 16
    $region49: #{_lambda_.1} parent=1 // pred_fallthru
      _
    // Predicated region
    $region50: #{_lambda_.1} parent=1 // pred_check
      _
    $region51: #{_lambda_.1} parent=1 // pred_check_branch
      %207 = sbr.rel (0) target = $region53
    $region52: #{_lambda_.1} parent=1 // pred_region
      _
    $region53: #{_lambda_.1} parent=1 // pred_fallthru
      _
    // Predicated region
    $region54: #{_lambda_.1} parent=1 // pred_check
      _
    $region55: #{_lambda_.1} parent=1 // pred_check_branch
      %209 = sbr.rel (0) target = $region57
    $region56: #{_lambda_.1} parent=1 // pred_region
      %211 = vsyncadd [#allocation19], 0
      %s212 = sshll.u32 %s27, 4
      %s213 = int_to_ptr.hbm [resolvable:$true] %s212
      %s214 = sshll.u32 [#allocation20], 4
      %s215 = int_to_ptr.vmem [resolvable:$true] %s214
      %220 = dma.hbm_to_vmem [thread:$0]  %s213, 768, %s215, [#allocation19], 256, 256, 16
    $region57: #{_lambda_.1} parent=1 // pred_fallthru
      _
    // Predicated region
    $region58: #{_lambda_.1} parent=1 // pred_check
      _
    $region59: #{_lambda_.1} parent=1 // pred_check_branch
      %222 = sbr.rel (0) target = $region61
    $region60: #{_lambda_.1} parent=1 // pred_region
      %224 = vsyncadd [#allocation22], 0
      %s225 = sshll.u32 %s29, 4
      %s226 = int_to_ptr.hbm [resolvable:$true] %s225
      %s227 = sshll.u32 [#allocation21], 4
      %s228 = int_to_ptr.vmem [resolvable:$true] %s227
      %233 = dma.hbm_to_vmem [thread:$0]  %s226, 768, %s228, [#allocation22], 256, 256, 16
    $region61: #{_lambda_.1} parent=1 // pred_fallthru
      _
    // Predicated region
    $region62: #{_lambda_.1} parent=1 // pred_check
      _
    $region63: #{_lambda_.1} parent=1 // pred_check_branch
      %235 = sbr.rel (0) target = $region65
    $region64: #{_lambda_.1} parent=1 // pred_region
      _
    $region65: #{_lambda_.1} parent=1 // pred_fallthru
      _
    // Predicated region
    $region66: #{_lambda_.1} parent=1 // pred_check
      _
    $region67: #{_lambda_.1} parent=1 // pred_check_branch
      %237 = sbr.rel (0) target = $region69
    $region68: #{_lambda_.1} parent=1 // pred_region
      %239 = vsyncadd [#allocation22], 0
      %s240 = sshll.u32 %s33, 4
      %s241 = int_to_ptr.hbm [resolvable:$true] %s240
      %s242 = sshll.u32 [#allocation23], 4
      %s243 = int_to_ptr.vmem [resolvable:$true] %s242
      %248 = dma.hbm_to_vmem [thread:$0]  %s241, 2944, %s243, [#allocation22], 128, 128, 8
    $region69: #{_lambda_.1} parent=1 // pred_fallthru
      _
    // Predicated region
    $region70: #{_lambda_.1} parent=1 // pred_check
      _
    $region71: #{_lambda_.1} parent=1 // pred_check_branch
      %250 = sbr.rel (0) target = $region73
    $region72: #{_lambda_.1} parent=1 // pred_region
      %252 = vsyncadd [#allocation25], 0
      %s253 = sshll.u32 %s35, 4
      %s254 = int_to_ptr.hbm [resolvable:$true] %s253
      %s255 = sshll.u32 [#allocation24], 4
      %s256 = int_to_ptr.vmem [resolvable:$true] %s255
      %261 = dma.hbm_to_vmem [thread:$0]  %s254, 1024, %s256, [#allocation25], 512, 512, 32
    $region73: #{_lambda_.1} parent=1 // pred_fallthru
      _
    // Predicated region
    $region74: #{_lambda_.1} parent=1 // pred_check
      _
    $region75: #{_lambda_.1} parent=1 // pred_check_branch
      %263 = sbr.rel (0) target = $region77
    $region76: #{_lambda_.1} parent=1 // pred_region
      %265 = vsyncadd [#allocation25], 0
      %s266 = sshll.u32 %s37, 4
      %s267 = int_to_ptr.hbm [resolvable:$true] %s266
      %s268 = sshll.u32 [#allocation26], 4
      %s269 = int_to_ptr.vmem [resolvable:$true] %s268
      %274 = dma.hbm_to_vmem [thread:$0]  %s267, 256, %s269, [#allocation25], 128, 128, 8
    $region77: #{_lambda_.1} parent=1 // pred_fallthru
      _
    // Predicated region
    $region78: #{_lambda_.1} parent=1 // pred_check
      _
    $region79: #{_lambda_.1} parent=1 // pred_check_branch
      %276 = sbr.rel (0) target = $region81
    $region80: #{_lambda_.1} parent=1 // pred_region
      %278 = vsyncadd [#allocation28], 0
      %s279 = sshll.u32 %s39, 4
      %s280 = int_to_ptr.hbm [resolvable:$true] %s279
      %s281 = sshll.u32 [#allocation27], 4
      %s282 = int_to_ptr.vmem [resolvable:$true] %s281
      %287 = dma.hbm_to_vmem [thread:$0]  %s280, 256, %s282, [#allocation28], 128, 128, 8
    $region81: #{_lambda_.1} parent=1 // pred_fallthru
      _
    // Predicated region
    $region82: #{_lambda_.1} parent=1 // pred_check
      _
    $region83: #{_lambda_.1} parent=1 // pred_check_branch
      %289 = sbr.rel (0) target = $region85
    $region84: #{_lambda_.1} parent=1 // pred_region
      %291 = vsyncadd [#allocation28], 0
      %s292 = sshll.u32 %s41, 4
      %s293 = int_to_ptr.hbm [resolvable:$true] %s292
      %s294 = sshll.u32 [#allocation29], 4
      %s295 = int_to_ptr.vmem [resolvable:$true] %s294
      %300 = dma.hbm_to_vmem [thread:$0]  %s293, 256, %s295, [#allocation28], 128, 128, 8
    $region85: #{_lambda_.1} parent=1 // pred_fallthru
      _
    // Predicated region
    $region86: #{_lambda_.1} parent=1 // pred_check
      _
    $region87: #{_lambda_.1} parent=1 // pred_check_branch
      %302 = sbr.rel (0) target = $region89
    $region88: #{_lambda_.1} parent=1 // pred_region
      %304 = vsyncadd [#allocation31], 0
      %s305 = sshll.u32 %s43, 4
      %s306 = int_to_ptr.hbm [resolvable:$true] %s305
      %s307 = sshll.u32 [#allocation30], 4
      %s308 = int_to_ptr.vmem [resolvable:$true] %s307
      %313 = dma.hbm_to_vmem [thread:$0]  %s306, 256, %s308, [#allocation31], 128, 128, 8
    $region89: #{_lambda_.1} parent=1 // pred_fallthru
      _
    // Predicated region
    $region90: #{_lambda_.1} parent=1 // pred_check
      _
    $region91: #{_lambda_.1} parent=1 // pred_check_branch
      %315 = sbr.rel (0) target = $region93
    $region92: #{_lambda_.1} parent=1 // pred_region
      %317 = vsyncadd [#allocation31], 0
      %s318 = sshll.u32 %s45, 4
      %s319 = int_to_ptr.hbm [resolvable:$true] %s318
      %s320 = sshll.u32 [#allocation32], 4
      %s321 = int_to_ptr.vmem [resolvable:$true] %s320
      %326 = dma.hbm_to_vmem [thread:$0]  %s319, 8192, %s321, [#allocation31], 128, 128, 8
    $region93: #{_lambda_.1} parent=1 // pred_fallthru
      _
    // Predicated region
    $region94: #{_lambda_.1} parent=1 // pred_check
      _
    $region95: #{_lambda_.1} parent=1 // pred_check_branch
      %328 = sbr.rel (0) target = $region97
    $region96: #{_lambda_.1} parent=1 // pred_region
      %330 = vsyncadd [#allocation34], 0
      %s331 = sshll.u32 %s47, 4
      %s332 = int_to_ptr.hbm [resolvable:$true] %s331
      %s333 = sshll.u32 [#allocation33], 4
      %s334 = int_to_ptr.vmem [resolvable:$true] %s333
      %339 = dma.hbm_to_vmem [thread:$0]  %s332, 2048, %s334, [#allocation34], 128, 128, 8
    $region97: #{_lambda_.1} parent=1 // pred_fallthru
      _
    // Predicated region
    $region98: #{_lambda_.1} parent=1 // pred_check
      _
    $region99: #{_lambda_.1} parent=1 // pred_check_branch
      %341 = sbr.rel (0) target = $region101
    $region100: #{_lambda_.1} parent=1 // pred_region
      %343 = vsyncadd [#allocation34], 0
      %s344 = sshll.u32 %s49, 4
      %s345 = int_to_ptr.hbm [resolvable:$true] %s344
      %s346 = sshll.u32 [#allocation35], 4
      %s347 = int_to_ptr.vmem [resolvable:$true] %s346
      %352 = dma.hbm_to_vmem [thread:$0]  %s345, 512, %s347, [#allocation34], 128, 128, 8
    $region101: #{_lambda_.1} parent=1 // pred_fallthru
      _
    // Predicated region
    $region102: #{_lambda_.1} parent=1 // pred_check
      _
    $region103: #{_lambda_.1} parent=1 // pred_check_branch
      %354 = sbr.rel (0) target = $region105
    $region104: #{_lambda_.1} parent=1 // pred_region
      %356 = vsyncadd [#allocation37], 0
      %s358 = sshll.u32 %s51, 4
      %s359 = int_to_ptr.hbm [resolvable:$true] %s358
      %s360 = sshll.u32 [#allocation36], 4
      %s361 = int_to_ptr.vmem [resolvable:$true] %s360
      %363 = dma.hbm_to_vmem [thread:$0]  %s359, 128, %s361, [#allocation37]
    $region105: #{_lambda_.1} parent=1 // pred_fallthru
      _
    // Predicated region
    $region106: #{_lambda_.1} parent=1 // pred_check
      _
    $region107: #{_lambda_.1} parent=1 // pred_check_branch
      %365 = sbr.rel (0) target = $region109
    $region108: #{_lambda_.1} parent=1 // pred_region
      _
    $region109: #{_lambda_.1} parent=1 // pred_fallthru
      _
    // Predicated region
    $region110: #{_lambda_.1} parent=1 // pred_check
      _
    $region111: #{_lambda_.1} parent=1 // pred_check_branch
      %367 = sbr.rel (0) target = $region113
    $region112: #{_lambda_.1} parent=1 // pred_region
      %369 = vsyncadd [#allocation37], 0
      %s371 = sshll.u32 %s55, 4
      %s372 = int_to_ptr.hbm [resolvable:$true] %s371
      %s373 = sshll.u32 [#allocation38], 4
      %s374 = int_to_ptr.vmem [resolvable:$true] %s373
      %376 = dma.hbm_to_vmem [thread:$0]  %s372, 32, %s374, [#allocation37]
    $region113: #{_lambda_.1} parent=1 // pred_fallthru
      _
    // Predicated region
    $region114: #{_lambda_.1} parent=1 // pred_check
      _
    $region115: #{_lambda_.1} parent=1 // pred_check_branch
      %378 = sbr.rel (0) target = $region117
    $region116: #{_lambda_.1} parent=1 // pred_region
      _
    $region117: #{_lambda_.1} parent=1 // pred_fallthru
      _
    // Predicated region
    $region118: #{_lambda_.1} parent=1 // pred_check
      _
    $region119: #{_lambda_.1} parent=1 // pred_check_branch
      %380 = sbr.rel (0) target = $region121
    $region120: #{_lambda_.1} parent=1 // pred_region
      %382 = dma.done [#allocation4], 64
    $region121: #{_lambda_.1} parent=1 // pred_fallthru
      _
    // Predicated region
    $region122: #{_lambda_.1} parent=1 // pred_check
      _
    $region123: #{_lambda_.1} parent=1 // pred_check_branch
      %384 = sbr.rel (0) target = $region125
    $region124: #{_lambda_.1} parent=1 // pred_region
      %386 = dma.done [#allocation7], 64
    $region125: #{_lambda_.1} parent=1 // pred_fallthru
      _
    // Predicated region
    $region126: #{_lambda_.1} parent=1 // pred_check
      _
    $region127: #{_lambda_.1} parent=1 // pred_check_branch
      %388 = sbr.rel (0) target = $region129
    $region128: #{_lambda_.1} parent=1 // pred_region
      %390 = dma.done [#allocation7], 128
    $region129: #{_lambda_.1} parent=1 // pred_fallthru
      _
    // Predicated region
    $region130: #{_lambda_.1} parent=1 // pred_check
      _
    $region131: #{_lambda_.1} parent=1 // pred_check_branch
      %392 = sbr.rel (0) target = $region133
    $region132: #{_lambda_.1} parent=1 // pred_region
      %394 = dma.done [#allocation10], 128
    $region133: #{_lambda_.1} parent=1 // pred_fallthru
      _
    // Predicated region
    $region134: #{_lambda_.1} parent=1 // pred_check
      _
    $region135: #{_lambda_.1} parent=1 // pred_check_branch
      %396 = sbr.rel (0) target = $region137
    $region136: #{_lambda_.1} parent=1 // pred_region
      %398 = dma.done [#allocation10], 128
    $region137: #{_lambda_.1} parent=1 // pred_fallthru
      _
    // Predicated region
    $region138: #{_lambda_.1} parent=1 // pred_check
      _
    $region139: #{_lambda_.1} parent=1 // pred_check_branch
      %400 = sbr.rel (0) target = $region141
    $region140: #{_lambda_.1} parent=1 // pred_region
      %402 = dma.done [#allocation13], 256
    $region141: #{_lambda_.1} parent=1 // pred_fallthru
      _
    // Predicated region
    $region142: #{_lambda_.1} parent=1 // pred_check
      _
    $region143: #{_lambda_.1} parent=1 // pred_check_branch
      %404 = sbr.rel (0) target = $region145
    $region144: #{_lambda_.1} parent=1 // pred_region
      %406 = dma.done [#allocation13], 256
    $region145: #{_lambda_.1} parent=1 // pred_fallthru
      _
    // Predicated region
    $region146: #{_lambda_.1} parent=1 // pred_check
      _
    $region147: #{_lambda_.1} parent=1 // pred_check_branch
      %408 = sbr.rel (0) target = $region149
    $region148: #{_lambda_.1} parent=1 // pred_region
      %410 = dma.done [#allocation16], 256
    $region149: #{_lambda_.1} parent=1 // pred_fallthru
      _
    // Predicated region
    $region150: #{_lambda_.1} parent=1 // pred_check
      _
    $region151: #{_lambda_.1} parent=1 // pred_check_branch
      %412 = sbr.rel (0) target = $region153
    $region152: #{_lambda_.1} parent=1 // pred_region
      %414 = dma.done [#allocation16], 256
    $region153: #{_lambda_.1} parent=1 // pred_fallthru
      _
    // Predicated region
    $region154: #{_lambda_.1} parent=1 // pred_check
      _
    $region155: #{_lambda_.1} parent=1 // pred_check_branch
      %416 = sbr.rel (0) target = $region157
    $region156: #{_lambda_.1} parent=1 // pred_region
      %418 = dma.done [#allocation19], 512
    $region157: #{_lambda_.1} parent=1 // pred_fallthru
      _
    // Predicated region
    $region158: #{_lambda_.1} parent=1 // pred_check
      _
    $region159: #{_lambda_.1} parent=1 // pred_check_branch
      %420 = sbr.rel (0) target = $region161
    $region160: #{_lambda_.1} parent=1 // pred_region
      %422 = dma.done [#allocation19], 768
    $region161: #{_lambda_.1} parent=1 // pred_fallthru
      _
    // Predicated region
    $region162: #{_lambda_.1} parent=1 // pred_check
      _
    $region163: #{_lambda_.1} parent=1 // pred_check_branch
      %424 = sbr.rel (0) target = $region165
    $region164: #{_lambda_.1} parent=1 // pred_region
      %426 = dma.done [#allocation22], 768
    $region165: #{_lambda_.1} parent=1 // pred_fallthru
      _
    // Predicated region
    $region166: #{_lambda_.1} parent=1 // pred_check
      _
    $region167: #{_lambda_.1} parent=1 // pred_check_branch
      %428 = sbr.rel (0) target = $region169
    $region168: #{_lambda_.1} parent=1 // pred_region
      %430 = dma.done [#allocation22], 2944
    $region169: #{_lambda_.1} parent=1 // pred_fallthru
      _
    // Predicated region
    $region170: #{_lambda_.1} parent=1 // pred_check
      _
    $region171: #{_lambda_.1} parent=1 // pred_check_branch
      %432 = sbr.rel (0) target = $region173
    $region172: #{_lambda_.1} parent=1 // pred_region
      %434 = dma.done [#allocation25], 1024
    $region173: #{_lambda_.1} parent=1 // pred_fallthru
      _
    // Predicated region
    $region174: #{_lambda_.1} parent=1 // pred_check
      _
    $region175: #{_lambda_.1} parent=1 // pred_check_branch
      %436 = sbr.rel (0) target = $region177
    $region176: #{_lambda_.1} parent=1 // pred_region
      %438 = dma.done [#allocation25], 256
    $region177: #{_lambda_.1} parent=1 // pred_fallthru
      _
    // Predicated region
    $region178: #{_lambda_.1} parent=1 // pred_check
      _
    $region179: #{_lambda_.1} parent=1 // pred_check_branch
      %440 = sbr.rel (0) target = $region181
    $region180: #{_lambda_.1} parent=1 // pred_region
      %442 = dma.done [#allocation28], 256
    $region181: #{_lambda_.1} parent=1 // pred_fallthru
      _
    // Predicated region
    $region182: #{_lambda_.1} parent=1 // pred_check
      _
    $region183: #{_lambda_.1} parent=1 // pred_check_branch
      %444 = sbr.rel (0) target = $region185
    $region184: #{_lambda_.1} parent=1 // pred_region
      %446 = dma.done [#allocation28], 256
    $region185: #{_lambda_.1} parent=1 // pred_fallthru
      _
    // Predicated region
    $region186: #{_lambda_.1} parent=1 // pred_check
      _
    $region187: #{_lambda_.1} parent=1 // pred_check_branch
      %448 = sbr.rel (0) target = $region189
    $region188: #{_lambda_.1} parent=1 // pred_region
      %450 = dma.done [#allocation31], 256
    $region189: #{_lambda_.1} parent=1 // pred_fallthru
      _
    // Predicated region
    $region190: #{_lambda_.1} parent=1 // pred_check
      _
    $region191: #{_lambda_.1} parent=1 // pred_check_branch
      %452 = sbr.rel (0) target = $region193
    $region192: #{_lambda_.1} parent=1 // pred_region
      %454 = dma.done [#allocation31], 8192
    $region193: #{_lambda_.1} parent=1 // pred_fallthru
      _
    // Predicated region
    $region194: #{_lambda_.1} parent=1 // pred_check
      _
    $region195: #{_lambda_.1} parent=1 // pred_check_branch
      %456 = sbr.rel (0) target = $region197
    $region196: #{_lambda_.1} parent=1 // pred_region
      %458 = dma.done [#allocation34], 2048
    $region197: #{_lambda_.1} parent=1 // pred_fallthru
      _
    // Predicated region
    $region198: #{_lambda_.1} parent=1 // pred_check
      _
    $region199: #{_lambda_.1} parent=1 // pred_check_branch
      %460 = sbr.rel (0) target = $region201
    $region200: #{_lambda_.1} parent=1 // pred_region
      %462 = dma.done [#allocation34], 512
    $region201: #{_lambda_.1} parent=1 // pred_fallthru
      _
    // Predicated region
    $region202: #{_lambda_.1} parent=1 // pred_check
      _
    $region203: #{_lambda_.1} parent=1 // pred_check_branch
      %464 = sbr.rel (0) target = $region205
    $region204: #{_lambda_.1} parent=1 // pred_region
      %466 = dma.done [#allocation37], 128
    $region205: #{_lambda_.1} parent=1 // pred_fallthru
      _
    // Predicated region
    $region206: #{_lambda_.1} parent=1 // pred_check
      _
    $region207: #{_lambda_.1} parent=1 // pred_check_branch
      %468 = sbr.rel (0) target = $region209
    $region208: #{_lambda_.1} parent=1 // pred_region
      %470 = dma.done [#allocation37], 32
    $region209: #{_lambda_.1} parent=1 // pred_fallthru
      _
    %v471 = vld [vmem:[#allocation23] sm:$0xff]
    %v472 = vld [vmem:[#allocation23 + $0x8] sm:$0xff]
    %v473 = vld [vmem:[#allocation23 + $0x10] sm:$0xff]
    %v474 = vld [vmem:[#allocation23 + $0x18] sm:$0xff]
    %v475 = vld [vmem:[#allocation23 + $0x20] sm:$0xff]
    %v476 = vld [vmem:[#allocation23 + $0x28] sm:$0xff]
    %v477 = vld [vmem:[#allocation23 + $0x30] sm:$0xff]
    %v478 = vld [vmem:[#allocation23 + $0x38] sm:$0xff]
    %v479 = vld [vmem:[#allocation23 + $0x40] sm:$0xff]
    %v480 = vld [vmem:[#allocation23 + $0x48] sm:$0xff]
    %v481 = vld [vmem:[#allocation23 + $0x50] sm:$0xff]
    %v482 = vld [vmem:[#allocation23 + $0x58] sm:$0xff]
    %v483 = vld [vmem:[#allocation23 + $0x60] sm:$0xff]
    %v484 = vld [vmem:[#allocation23 + $0x68] sm:$0xff]
    %v485 = vld [vmem:[#allocation23 + $0x70] sm:$0xff]
    %v486 = vld [vmem:[#allocation23 + $0x78] sm:$0xff]
    %v487 = vld [vmem:[#allocation23 + $0x80] sm:$0xff]
    %v488 = vld [vmem:[#allocation23 + $0x88] sm:$0xff]
    %v489 = vld [vmem:[#allocation23 + $0x90] sm:$0xff]
    %v490 = vld [vmem:[#allocation23 + $0x98] sm:$0xff]
    %v491 = vld [vmem:[#allocation23 + $0xa0] sm:$0xff]
    %v492 = vld [vmem:[#allocation23 + $0xa8] sm:$0xff]
    %v493 = vld [vmem:[#allocation23 + $0xb0] sm:$0xf]
    %v494 = vld [vmem:[%s1] sm:$0xf]
    %v495 = vld [vmem:[#allocation24] sm:$0xff]
    %v496 = vld [vmem:[#allocation24 + $0x8] sm:$0xff]
    %v497 = vld [vmem:[#allocation24 + $0x10] sm:$0xff]
    %v498 = vld [vmem:[#allocation24 + $0x18] sm:$0xff]
    %v499 = vld [vmem:[#allocation24 + $0x20] sm:$0x1]
    %v500 = vld [vmem:[#allocation24 + $0x28] sm:$0x1]
    %v501 = vld [vmem:[#allocation24 + $0x30] sm:$0x1]
    %v502 = vld [vmem:[#allocation24 + $0x38] sm:$0x1]
    %v503 = vld [vmem:[#allocation3] sm:$0xf]
    %v505 = vperm.slane %v494, 3
    %506 = vrot.lane.b32.xlu0 %v505, 17
    %v507 = vpop.permute.xlu0 %506
    %v509 = vperm.slane %v494, 0
    %v510 = vperm.slane %v494, 1
    %v511 = vperm.slane %v494, 2
    %512 = vrot.lane.b32.xlu0 %v509, 17
    %v513 = vpop.permute.xlu0 %512
    %514 = vrot.lane.b32.xlu0 %v510, 17
    %v515 = vpop.permute.xlu0 %514
    %516 = vrot.lane.b32.xlu0 %v511, 17
    %v517 = vpop.permute.xlu0 %516
    %vm518 = vcmask 138240
    %v519 = vsel %vm518, %v513, %v515
    %v520 = vsel %vm518, %v515, %v517
    %v521 = vsel %vm518, %v517, %v507
    %v526 = vsel %vm518, %v507, %v513
    %v527 = vmul.f32 %v526, %v495
    %v528 = vmul.f32 %v519, %v496
    %v529 = vmul.f32 %v520, %v497
    %v530 = vmul.f32 %v521, %v498
    %531 = vrot.lane.b32.xlu0 %v505, 16
    %v532 = vpop.permute.xlu0 %531
    %534 = vrot.lane.b32.xlu0 %v509, 16
    %v535 = vpop.permute.xlu0 %534
    %536 = vrot.lane.b32.xlu0 %v510, 16
    %v537 = vpop.permute.xlu0 %536
    %538 = vrot.lane.b32.xlu0 %v511, 16
    %v539 = vpop.permute.xlu0 %538
    %vm540 = vcmask 130048
    %v541 = vsel %vm540, %v535, %v537
    %v542 = vsel %vm540, %v537, %v539
    %v543 = vsel %vm540, %v539, %v532
    %v548 = vsel %vm540, %v532, %v535
    %v553 = vrot.slane %v495, 1
    %v554 = vrot.slane %v496, 1
    %v555 = vrot.slane %v497, 1
    %v556 = vrot.slane %v498, 1
    %v561 = vmul.f32 %v548, %v553
    %v562 = vmul.f32 %v541, %v554
    %v563 = vmul.f32 %v542, %v555
    %v564 = vmul.f32 %v543, %v556
    %565 = vrot.lane.b32.xlu0 %v505, 15
    %v566 = vpop.permute.xlu0 %565
    %568 = vrot.lane.b32.xlu0 %v509, 15
    %v569 = vpop.permute.xlu0 %568
    %570 = vrot.lane.b32.xlu0 %v510, 15
    %v571 = vpop.permute.xlu0 %570
    %572 = vrot.lane.b32.xlu0 %v511, 15
    %v573 = vpop.permute.xlu0 %572
    %vm574 = vcmask 121856
    %v575 = vsel %vm574, %v569, %v571
    %v576 = vsel %vm574, %v571, %v573
    %v577 = vsel %vm574, %v573, %v566
    %v582 = vsel %vm574, %v566, %v569
    %v583 = vrot.slane %v495, 2
    %v584 = vrot.slane %v496, 2
    %v585 = vrot.slane %v497, 2
    %v586 = vrot.slane %v498, 2
    %v591 = vmul.f32 %v582, %v583
    %v592 = vmul.f32 %v575, %v584
    %v593 = vmul.f32 %v576, %v585
    %v594 = vmul.f32 %v577, %v586
    %595 = vrot.lane.b32.xlu0 %v505, 1
    %v596 = vpop.permute.xlu0 %595
    %598 = vrot.lane.b32.xlu0 %v509, 1
    %v599 = vpop.permute.xlu0 %598
    %600 = vrot.lane.b32.xlu0 %v510, 1
    %v601 = vpop.permute.xlu0 %600
    %602 = vrot.lane.b32.xlu0 %v511, 1
    %v603 = vpop.permute.xlu0 %602
    %vm604 = vcmask 7168
    %v605 = vsel %vm604, %v599, %v601
    %v606 = vsel %vm604, %v601, %v603
    %v607 = vsel %vm604, %v603, %v596
    %v612 = vsel %vm604, %v596, %v599
    %v613 = vrot.slane %v495, 3
    %v614 = vrot.slane %v496, 3
    %v615 = vrot.slane %v497, 3
    %v616 = vrot.slane %v498, 3
    %v621 = vmul.f32 %v612, %v613
    %v622 = vmul.f32 %v605, %v614
    %v623 = vmul.f32 %v606, %v615
    %v624 = vmul.f32 %v607, %v616
    %625 = vst [vmem:[#allocation1] sm:$0xff] %v495
    %626 = vst [vmem:[#allocation1 + $0x9] sm:$0xff] %v496
    %627 = vst [vmem:[#allocation1 + $0x12] sm:$0xff] %v497
    %628 = vst [vmem:[#allocation1 + $0x1b] sm:$0xff] %v498
    %s629 = scalar_lea.vmem [#allocation1], 4
    %v630 = vld [vmem:[%s629] ss:$9 sm:$0xff]
    %v632 = vmul.f32 %v494, %v630
    %633 = vrot.lane.b32.xlu0 %v509, 127
    %v634 = vpop.permute.xlu0 %633
    %635 = vrot.lane.b32.xlu0 %v510, 127
    %v636 = vpop.permute.xlu0 %635
    %637 = vrot.lane.b32.xlu0 %v511, 127
    %v638 = vpop.permute.xlu0 %637
    %639 = vrot.lane.b32.xlu0 %v505, 127
    %v640 = vpop.permute.xlu0 %639
    %vm641 = vcmask 1039360
    %v642 = vsel %vm641, %v634, %v636
    %v643 = vsel %vm641, %v636, %v638
    %v644 = vsel %vm641, %v638, %v640
    %v650 = vsel %vm641, %v640, %v634
    %v651 = vrot.slane %v495, 5
    %v652 = vrot.slane %v496, 5
    %v653 = vrot.slane %v497, 5
    %v654 = vrot.slane %v498, 5
    %v659 = vmul.f32 %v642, %v651
    %v660 = vmul.f32 %v643, %v652
    %v661 = vmul.f32 %v644, %v653
    %v662 = vmul.f32 %v650, %v654
    %663 = vrot.lane.b32.xlu0 %v509, 113
    %v664 = vpop.permute.xlu0 %663
    %665 = vrot.lane.b32.xlu0 %v510, 113
    %v666 = vpop.permute.xlu0 %665
    %667 = vrot.lane.b32.xlu0 %v511, 113
    %v668 = vpop.permute.xlu0 %667
    %669 = vrot.lane.b32.xlu0 %v505, 113
    %v670 = vpop.permute.xlu0 %669
    %vm671 = vcmask 924672
    %v672 = vsel %vm671, %v664, %v666
    %v673 = vsel %vm671, %v666, %v668
    %v674 = vsel %vm671, %v668, %v670
    %v680 = vsel %vm671, %v670, %v664
    %v681 = vrot.slane %v495, 6
    %v682 = vrot.slane %v496, 6
    %v683 = vrot.slane %v497, 6
    %v684 = vrot.slane %v498, 6
    %v689 = vmul.f32 %v672, %v681
    %v690 = vmul.f32 %v673, %v682
    %v691 = vmul.f32 %v674, %v683
    %v692 = vmul.f32 %v680, %v684
    %693 = vrot.lane.b32.xlu0 %v509, 112
    %v694 = vpop.permute.xlu0 %693
    %695 = vrot.lane.b32.xlu0 %v510, 112
    %v696 = vpop.permute.xlu0 %695
    %697 = vrot.lane.b32.xlu0 %v511, 112
    %v698 = vpop.permute.xlu0 %697
    %699 = vrot.lane.b32.xlu0 %v505, 112
    %v700 = vpop.permute.xlu0 %699
    %vm701 = vcmask 916480
    %v702 = vsel %vm701, %v694, %v696
    %v703 = vsel %vm701, %v696, %v698
    %v704 = vsel %vm701, %v698, %v700
    %v710 = vsel %vm701, %v700, %v694
    %v711 = vrot.slane %v495, 7
    %v712 = vrot.slane %v496, 7
    %v713 = vrot.slane %v497, 7
    %v714 = vrot.slane %v498, 7
    %v719 = vmul.f32 %v702, %v711
    %v720 = vmul.f32 %v703, %v712
    %v721 = vmul.f32 %v704, %v713
    %v722 = vmul.f32 %v710, %v714
    %723 = vrot.lane.b32.xlu0 %v509, 111
    %v724 = vpop.permute.xlu0 %723
    %725 = vrot.lane.b32.xlu0 %v510, 111
    %v726 = vpop.permute.xlu0 %725
    %727 = vrot.lane.b32.xlu0 %v511, 111
    %v728 = vpop.permute.xlu0 %727
    %729 = vrot.lane.b32.xlu0 %v505, 111
    %v730 = vpop.permute.xlu0 %729
    %vm731 = vcmask 908288
    %v732 = vsel %vm731, %v724, %v726
    %v733 = vsel %vm731, %v726, %v728
    %v734 = vsel %vm731, %v728, %v730
    %v740 = vsel %vm731, %v730, %v724
    %v741 = vmul.f32 %v732, %v499
    %v742 = vmul.f32 %v733, %v500
    %v743 = vmul.f32 %v734, %v501
    %v744 = vmul.f32 %v740, %v502
    %v749 = vrot.slane %v561, 7
    %v750 = vrot.slane %v562, 7
    %v751 = vrot.slane %v563, 7
    %v752 = vrot.slane %v564, 7
    %v761 = vrot.slane %v591, 6
    %v762 = vrot.slane %v592, 6
    %v763 = vrot.slane %v593, 6
    %v764 = vrot.slane %v594, 6
    %v773 = vrot.slane %v621, 5
    %v774 = vrot.slane %v622, 5
    %v775 = vrot.slane %v623, 5
    %v776 = vrot.slane %v624, 5
    %v782 = vperm.slane %v632, 0
    %v783 = vperm.slane %v632, 1
    %v784 = vperm.slane %v632, 2
    %v785 = vperm.slane %v632, 3
    %v794 = vrot.slane %v659, 3
    %v795 = vrot.slane %v660, 3
    %v796 = vrot.slane %v661, 3
    %v797 = vrot.slane %v662, 3
    %v806 = vrot.slane %v689, 2
    %v807 = vrot.slane %v690, 2
    %v808 = vrot.slane %v691, 2
    %v809 = vrot.slane %v692, 2
    %v818 = vrot.slane %v719, 1
    %v819 = vrot.slane %v720, 1
    %v820 = vrot.slane %v721, 1
    %v821 = vrot.slane %v722, 1
    %vm826 = vcmask 1040384
    %v827 = vsel %vm826, %v527, %v749
    %v828 = vsel %vm826, %v528, %v750
    %v829 = vsel %vm826, %v529, %v751
    %v830 = vsel %vm826, %v530, %v752
    %vm831 = vcmask 1041408
    %v832 = vsel %vm831, %v827, %v761
    %v833 = vsel %vm831, %v828, %v762
    %v834 = vsel %vm831, %v829, %v763
    %v835 = vsel %vm831, %v830, %v764
    %vm836 = vcmask 1042432
    %v837 = vsel %vm836, %v832, %v773
    %v838 = vsel %vm836, %v833, %v774
    %v839 = vsel %vm836, %v834, %v775
    %v840 = vsel %vm836, %v835, %v776
    %vm841 = vcmask 1043456
    %v842 = vsel %vm841, %v837, %v782
    %v843 = vsel %vm841, %v838, %v783
    %v844 = vsel %vm841, %v839, %v784
    %v845 = vsel %vm841, %v840, %v785
    %vm846 = vcmask 1044480
    %v847 = vsel %vm846, %v842, %v794
    %v848 = vsel %vm846, %v843, %v795
    %v849 = vsel %vm846, %v844, %v796
    %v850 = vsel %vm846, %v845, %v797
    %vm851 = vcmask 1045504
    %v852 = vsel %vm851, %v847, %v806
    %v853 = vsel %vm851, %v848, %v807
    %v854 = vsel %vm851, %v849, %v808
    %v855 = vsel %vm851, %v850, %v809
    %vm856 = vcmask 1046528
    %v857 = vsel %vm856, %v852, %v818
    %v858 = vsel %vm856, %v853, %v819
    %v859 = vsel %vm856, %v854, %v820
    %v860 = vsel %vm856, %v855, %v821
    %862 = vset.pattern.permute.xlu0 0
    %863 = vperm.xlu0 %862, %v471
    %v864 = vpop.permute.xlu0 %863
    %vm866 = vcmask 72704
    %v868 = vsel %vm866, %v503, 0
    %v871 = vsel %vm826, %v741, 0
    %v874 = vsel %vm826, %v742, 0
    %v877 = vsel %vm826, %v743, 0
    %v880 = vsel %vm826, %v744, 0
    %882 = vmatpush.msra.mxu0 0.0
    %883 = vmatpush.msra.mxu0 0.0
    %884 = vmatpush.msra.mxu0 0.0
    %885 = vmatpush.msra.mxu0 0.0
    %886 = vmatpush.msra.mxu0 0.0
    %887 = vmatpush.msra.mxu0 0.0
    %888 = vmatpush.msra.mxu0 0.0
    %889 = vmatpush.msra.mxu0 0.0
    %890 = vmatpush.msra.mxu0 0.0
    %891 = vmatpush.msra.mxu0 0.0
    %892 = vmatpush.msra.mxu0 0.0
    %893 = vmatpush.msra.mxu0 0.0
    %894 = vmatpush.msra.mxu0 0.0
    %895 = vmatpush.msra.mxu0 0.0
    %896 = vmatpush.msra.mxu0 %v871
    %897 = vmatpush.msra.mxu0 %v857
    %898 = vmatmul.f32.gmra.mxu0 %v868
    %v899 = vpop.f32.mrf.mxu0
    %v900 = vadd.f32 %v864, %v899
    %901 = vdwg.mxu0
    %902 = vmatpush.msra.mxu0 0.0
    %903 = vmatpush.msra.mxu0 0.0
    %904 = vmatpush.msra.mxu0 0.0
    %905 = vmatpush.msra.mxu0 0.0
    %906 = vmatpush.msra.mxu0 0.0
    %907 = vmatpush.msra.mxu0 0.0
    %908 = vmatpush.msra.mxu0 0.0
    %909 = vmatpush.msra.mxu0 0.0
    %910 = vmatpush.msra.mxu0 0.0
    %911 = vmatpush.msra.mxu0 0.0
    %912 = vmatpush.msra.mxu0 0.0
    %913 = vmatpush.msra.mxu0 0.0
    %914 = vmatpush.msra.mxu0 0.0
    %915 = vmatpush.msra.mxu0 0.0
    %916 = vmatpush.msra.mxu0 %v874
    %917 = vmatpush.msra.mxu0 %v858
    %918 = vmatmul.f32.gmra.mxu0 %v868
    %v919 = vpop.f32.mrf.mxu0
    %v920 = vadd.f32 %v864, %v919
    %921 = vdwg.mxu0
    %922 = vmatpush.msra.mxu0 0.0
    %923 = vmatpush.msra.mxu0 0.0
    %924 = vmatpush.msra.mxu0 0.0
    %925 = vmatpush.msra.mxu0 0.0
    %926 = vmatpush.msra.mxu0 0.0
    %927 = vmatpush.msra.mxu0 0.0
    %928 = vmatpush.msra.mxu0 0.0
    %929 = vmatpush.msra.mxu0 0.0
    %930 = vmatpush.msra.mxu0 0.0
    %931 = vmatpush.msra.mxu0 0.0
    %932 = vmatpush.msra.mxu0 0.0
    %933 = vmatpush.msra.mxu0 0.0
    %934 = vmatpush.msra.mxu0 0.0
    %935 = vmatpush.msra.mxu0 0.0
    %936 = vmatpush.msra.mxu0 %v877
    %937 = vmatpush.msra.mxu0 %v859
    %938 = vmatmul.f32.gmra.mxu0 %v868
    %v939 = vpop.f32.mrf.mxu0
    %v940 = vadd.f32 %v864, %v939
    %941 = vdwg.mxu0
    %942 = vmatpush.msra.mxu0 0.0
    %943 = vmatpush.msra.mxu0 0.0
    %944 = vmatpush.msra.mxu0 0.0
    %945 = vmatpush.msra.mxu0 0.0
    %946 = vmatpush.msra.mxu0 0.0
    %947 = vmatpush.msra.mxu0 0.0
    %948 = vmatpush.msra.mxu0 0.0
    %949 = vmatpush.msra.mxu0 0.0
    %950 = vmatpush.msra.mxu0 0.0
    %951 = vmatpush.msra.mxu0 0.0
    %952 = vmatpush.msra.mxu0 0.0
    %953 = vmatpush.msra.mxu0 0.0
    %954 = vmatpush.msra.mxu0 0.0
    %955 = vmatpush.msra.mxu0 0.0
    %956 = vmatpush.msra.mxu0 %v880
    %957 = vmatpush.msra.mxu0 %v860
    %958 = vmatmul.f32.gmra.mxu0 %v868
    %v959 = vpop.f32.mrf.mxu0
    %v960 = vadd.f32 %v864, %v959
    %961 = vdwg.mxu0
    %vm962 = vcmp.ge.f32.partialorder %v900, 0.0
    %vm963 = vcmp.ge.f32.partialorder %v920, 0.0
    %vm964 = vcmp.ge.f32.partialorder %v940, 0.0
    %vm965 = vcmp.ge.f32.partialorder %v960, 0.0
    %v966 = vmul.f32 %v900, 0.1
    %v967 = vmul.f32 %v920, 0.1
    %v968 = vmul.f32 %v940, 0.1
    %v969 = vmul.f32 %v960, 0.1
    %v970 = vsel %vm962, %v900, %v966
    %v971 = vsel %vm963, %v920, %v967
    %v972 = vsel %vm964, %v940, %v968
    %v973 = vsel %vm965, %v960, %v969
    %v974 = vld [vmem:[#allocation6] sm:$0xf]
    %976 = vrot.lane.b32.xlu0 %v973, 17
    %v977 = vpop.permute.xlu0 %976
    %982 = vrot.lane.b32.xlu0 %v970, 17
    %v983 = vpop.permute.xlu0 %982
    %984 = vrot.lane.b32.xlu0 %v971, 17
    %v985 = vpop.permute.xlu0 %984
    %986 = vrot.lane.b32.xlu0 %v972, 17
    %v987 = vpop.permute.xlu0 %986
    %v988 = vsel %vm518, %v983, %v985
    %v989 = vsel %vm518, %v985, %v987
    %v990 = vsel %vm518, %v987, %v977
    %v995 = vsel %vm518, %v977, %v983
    %v996 = vperm.slane %v495, 0
    %v997 = vperm.slane %v496, 0
    %v998 = vperm.slane %v497, 0
    %v999 = vperm.slane %v498, 0
    %v1000 = vmul.f32 %v995, %v996
    %v1001 = vmul.f32 %v988, %v997
    %v1002 = vmul.f32 %v989, %v998
    %v1003 = vmul.f32 %v990, %v999
    %1004 = vrot.lane.b32.xlu0 %v973, 16
    %v1005 = vpop.permute.xlu0 %1004
    %1007 = vrot.lane.b32.xlu0 %v970, 16
    %v1008 = vpop.permute.xlu0 %1007
    %1009 = vrot.lane.b32.xlu0 %v971, 16
    %v1010 = vpop.permute.xlu0 %1009
    %1011 = vrot.lane.b32.xlu0 %v972, 16
    %v1012 = vpop.permute.xlu0 %1011
    %v1013 = vsel %vm540, %v1008, %v1010
    %v1014 = vsel %vm540, %v1010, %v1012
    %v1015 = vsel %vm540, %v1012, %v1005
    %v1020 = vsel %vm540, %v1005, %v1008
    %v1021 = vperm.slane %v495, 1
    %v1022 = vperm.slane %v496, 1
    %v1023 = vperm.slane %v497, 1
    %v1024 = vperm.slane %v498, 1
    %v1025 = vmul.f32 %v1020, %v1021
    %v1026 = vmul.f32 %v1013, %v1022
    %v1027 = vmul.f32 %v1014, %v1023
    %v1028 = vmul.f32 %v1015, %v1024
    %1029 = vrot.lane.b32.xlu0 %v973, 15
    %v1030 = vpop.permute.xlu0 %1029
    %1032 = vrot.lane.b32.xlu0 %v970, 15
    %v1033 = vpop.permute.xlu0 %1032
    %1034 = vrot.lane.b32.xlu0 %v971, 15
    %v1035 = vpop.permute.xlu0 %1034
    %1036 = vrot.lane.b32.xlu0 %v972, 15
    %v1037 = vpop.permute.xlu0 %1036
    %v1038 = vsel %vm574, %v1033, %v1035
    %v1039 = vsel %vm574, %v1035, %v1037
    %v1040 = vsel %vm574, %v1037, %v1030
    %v1045 = vsel %vm574, %v1030, %v1033
    %v1046 = vperm.slane %v495, 2
    %v1047 = vperm.slane %v496, 2
    %v1048 = vperm.slane %v497, 2
    %v1049 = vperm.slane %v498, 2
    %v1050 = vmul.f32 %v1045, %v1046
    %v1051 = vmul.f32 %v1038, %v1047
    %v1052 = vmul.f32 %v1039, %v1048
    %v1053 = vmul.f32 %v1040, %v1049
    %1054 = vrot.lane.b32.xlu0 %v973, 1
    %v1055 = vpop.permute.xlu0 %1054
    %1057 = vrot.lane.b32.xlu0 %v970, 1
    %v1058 = vpop.permute.xlu0 %1057
    %1059 = vrot.lane.b32.xlu0 %v971, 1
    %v1060 = vpop.permute.xlu0 %1059
    %1061 = vrot.lane.b32.xlu0 %v972, 1
    %v1062 = vpop.permute.xlu0 %1061
    %v1063 = vsel %vm604, %v1058, %v1060
    %v1064 = vsel %vm604, %v1060, %v1062
    %v1065 = vsel %vm604, %v1062, %v1055
    %v1070 = vsel %vm604, %v1055, %v1058
    %v1071 = vperm.slane %v495, 3
    %v1072 = vperm.slane %v496, 3
    %v1073 = vperm.slane %v497, 3
    %v1074 = vperm.slane %v498, 3
    %v1075 = vmul.f32 %v1070, %v1071
    %v1076 = vmul.f32 %v1063, %v1072
    %v1077 = vmul.f32 %v1064, %v1073
    %v1078 = vmul.f32 %v1065, %v1074
    %v1079 = vperm.slane %v495, 4
    %v1080 = vperm.slane %v496, 4
    %v1081 = vperm.slane %v497, 4
    %v1082 = vperm.slane %v498, 4
    %v1083 = vmul.f32 %v970, %v1079
    %v1084 = vmul.f32 %v971, %v1080
    %v1085 = vmul.f32 %v972, %v1081
    %v1086 = vmul.f32 %v973, %v1082
    %1087 = vrot.lane.b32.xlu0 %v970, 127
    %v1088 = vpop.permute.xlu0 %1087
    %1089 = vrot.lane.b32.xlu0 %v971, 127
    %v1090 = vpop.permute.xlu0 %1089
    %1091 = vrot.lane.b32.xlu0 %v972, 127
    %v1092 = vpop.permute.xlu0 %1091
    %1093 = vrot.lane.b32.xlu0 %v973, 127
    %v1094 = vpop.permute.xlu0 %1093
    %v1095 = vsel %vm641, %v1088, %v1090
    %v1096 = vsel %vm641, %v1090, %v1092
    %v1097 = vsel %vm641, %v1092, %v1094
    %v1103 = vsel %vm641, %v1094, %v1088
    %v1104 = vperm.slane %v495, 5
    %v1105 = vperm.slane %v496, 5
    %v1106 = vperm.slane %v497, 5
    %v1107 = vperm.slane %v498, 5
    %v1108 = vmul.f32 %v1095, %v1104
    %v1109 = vmul.f32 %v1096, %v1105
    %v1110 = vmul.f32 %v1097, %v1106
    %v1111 = vmul.f32 %v1103, %v1107
    %1112 = vrot.lane.b32.xlu0 %v970, 113
    %v1113 = vpop.permute.xlu0 %1112
    %1114 = vrot.lane.b32.xlu0 %v971, 113
    %v1115 = vpop.permute.xlu0 %1114
    %1116 = vrot.lane.b32.xlu0 %v972, 113
    %v1117 = vpop.permute.xlu0 %1116
    %1118 = vrot.lane.b32.xlu0 %v973, 113
    %v1119 = vpop.permute.xlu0 %1118
    %v1120 = vsel %vm671, %v1113, %v1115
    %v1121 = vsel %vm671, %v1115, %v1117
    %v1122 = vsel %vm671, %v1117, %v1119
    %v1128 = vsel %vm671, %v1119, %v1113
    %v1129 = vperm.slane %v495, 6
    %v1130 = vperm.slane %v496, 6
    %v1131 = vperm.slane %v497, 6
    %v1132 = vperm.slane %v498, 6
    %v1133 = vmul.f32 %v1120, %v1129
    %v1134 = vmul.f32 %v1121, %v1130
    %v1135 = vmul.f32 %v1122, %v1131
    %v1136 = vmul.f32 %v1128, %v1132
    %1137 = vrot.lane.b32.xlu0 %v970, 112
    %v1138 = vpop.permute.xlu0 %1137
    %1139 = vrot.lane.b32.xlu0 %v971, 112
    %v1140 = vpop.permute.xlu0 %1139
    %1141 = vrot.lane.b32.xlu0 %v972, 112
    %v1142 = vpop.permute.xlu0 %1141
    %1143 = vrot.lane.b32.xlu0 %v973, 112
    %v1144 = vpop.permute.xlu0 %1143
    %v1145 = vsel %vm701, %v1138, %v1140
    %v1146 = vsel %vm701, %v1140, %v1142
    %v1147 = vsel %vm701, %v1142, %v1144
    %v1153 = vsel %vm701, %v1144, %v1138
    %v1154 = vperm.slane %v495, 7
    %v1155 = vperm.slane %v496, 7
    %v1156 = vperm.slane %v497, 7
    %v1157 = vperm.slane %v498, 7
    %v1158 = vmul.f32 %v1145, %v1154
    %v1159 = vmul.f32 %v1146, %v1155
    %v1160 = vmul.f32 %v1147, %v1156
    %v1161 = vmul.f32 %v1153, %v1157
    %1162 = vrot.lane.b32.xlu0 %v970, 111
    %v1163 = vpop.permute.xlu0 %1162
    %1164 = vrot.lane.b32.xlu0 %v971, 111
    %v1165 = vpop.permute.xlu0 %1164
    %1166 = vrot.lane.b32.xlu0 %v972, 111
    %v1167 = vpop.permute.xlu0 %1166
    %1168 = vrot.lane.b32.xlu0 %v973, 111
    %v1169 = vpop.permute.xlu0 %1168
    %v1170 = vsel %vm731, %v1163, %v1165
    %v1171 = vsel %vm731, %v1165, %v1167
    %v1172 = vsel %vm731, %v1167, %v1169
    %v1178 = vsel %vm731, %v1169, %v1163
    %v1179 = vperm.slane %v499, 0
    %v1180 = vperm.slane %v500, 0
    %v1181 = vperm.slane %v501, 0
    %v1182 = vperm.slane %v502, 0
    %v1183 = vmul.f32 %v1170, %v1179
    %v1184 = vmul.f32 %v1171, %v1180
    %v1185 = vmul.f32 %v1172, %v1181
    %v1186 = vmul.f32 %v1178, %v1182
    %v1191 = vrot.slane %v1025, 4
    %v1192 = vrot.slane %v1026, 4
    %v1193 = vrot.slane %v1027, 4
    %v1194 = vrot.slane %v1028, 4
    %v1203 = vrot.slane %v1075, 4
    %v1204 = vrot.slane %v1076, 4
    %v1205 = vrot.slane %v1077, 4
    %v1206 = vrot.slane %v1078, 4
    %v1215 = vrot.slane %v1108, 4
    %v1216 = vrot.slane %v1109, 4
    %v1217 = vrot.slane %v1110, 4
    %v1218 = vrot.slane %v1111, 4
    %v1227 = vrot.slane %v1158, 4
    %v1228 = vrot.slane %v1159, 4
    %v1229 = vrot.slane %v1160, 4
    %v1230 = vrot.slane %v1161, 4
    %v1235 = vsel %vm841, %v1000, %v1191
    %v1236 = vsel %vm841, %v1001, %v1192
    %v1237 = vsel %vm841, %v1002, %v1193
    %v1238 = vsel %vm841, %v1003, %v1194
    %v1239 = vsel %vm841, %v1050, %v1203
    %v1240 = vsel %vm841, %v1051, %v1204
    %v1241 = vsel %vm841, %v1052, %v1205
    %v1242 = vsel %vm841, %v1053, %v1206
    %v1243 = vsel %vm841, %v1083, %v1215
    %v1244 = vsel %vm841, %v1084, %v1216
    %v1245 = vsel %vm841, %v1085, %v1217
    %v1246 = vsel %vm841, %v1086, %v1218
    %v1247 = vsel %vm841, %v1133, %v1227
    %v1248 = vsel %vm841, %v1134, %v1228
    %v1249 = vsel %vm841, %v1135, %v1229
    %v1250 = vsel %vm841, %v1136, %v1230
    %v1251 = vrot.slane %v864, 4
    %vm1253 = vcmask 293888
    %v1255 = vsel %vm1253, %v974, 0
    %v1258 = vsel %vm841, %v1183, 0
    %v1261 = vsel %vm841, %v1184, 0
    %v1264 = vsel %vm841, %v1185, 0
    %v1267 = vsel %vm841, %v1186, 0
    %1269 = vmatpush.msra.mxu0 0.0
    %1270 = vmatpush.msra.mxu0 0.0
    %1271 = vmatpush.msra.mxu0 0.0
    %1272 = vmatpush.msra.mxu0 0.0
    %1273 = vmatpush.msra.mxu0 0.0
    %1274 = vmatpush.msra.mxu0 0.0
    %1275 = vmatpush.msra.mxu0 0.0
    %1276 = vmatpush.msra.mxu0 0.0
    %1277 = vmatpush.msra.mxu0 0.0
    %1278 = vmatpush.msra.mxu0 0.0
    %1279 = vmatpush.msra.mxu0 0.0
    %1280 = vmatpush.msra.mxu0 %v1258
    %1281 = vmatpush.msra.mxu0 %v1247
    %1282 = vmatpush.msra.mxu0 %v1243
    %1283 = vmatpush.msra.mxu0 %v1239
    %1284 = vmatpush.msra.mxu0 %v1235
    %1285 = vmatmul.f32.gmra.mxu0 %v1255
    %v1286 = vpop.f32.mrf.mxu0
    %v1287 = vadd.f32 %v1251, %v1286
    %1288 = vdwg.mxu0
    %1289 = vmatpush.msra.mxu0 0.0
    %1290 = vmatpush.msra.mxu0 0.0
    %1291 = vmatpush.msra.mxu0 0.0
    %1292 = vmatpush.msra.mxu0 0.0
    %1293 = vmatpush.msra.mxu0 0.0
    %1294 = vmatpush.msra.mxu0 0.0
    %1295 = vmatpush.msra.mxu0 0.0
    %1296 = vmatpush.msra.mxu0 0.0
    %1297 = vmatpush.msra.mxu0 0.0
    %1298 = vmatpush.msra.mxu0 0.0
    %1299 = vmatpush.msra.mxu0 0.0
    %1300 = vmatpush.msra.mxu0 %v1261
    %1301 = vmatpush.msra.mxu0 %v1248
    %1302 = vmatpush.msra.mxu0 %v1244
    %1303 = vmatpush.msra.mxu0 %v1240
    %1304 = vmatpush.msra.mxu0 %v1236
    %1305 = vmatmul.f32.gmra.mxu0 %v1255
    %v1306 = vpop.f32.mrf.mxu0
    %v1307 = vadd.f32 %v1251, %v1306
    %1308 = vdwg.mxu0
    %1309 = vmatpush.msra.mxu0 0.0
    %1310 = vmatpush.msra.mxu0 0.0
    %1311 = vmatpush.msra.mxu0 0.0
    %1312 = vmatpush.msra.mxu0 0.0
    %1313 = vmatpush.msra.mxu0 0.0
    %1314 = vmatpush.msra.mxu0 0.0
    %1315 = vmatpush.msra.mxu0 0.0
    %1316 = vmatpush.msra.mxu0 0.0
    %1317 = vmatpush.msra.mxu0 0.0
    %1318 = vmatpush.msra.mxu0 0.0
    %1319 = vmatpush.msra.mxu0 0.0
    %1320 = vmatpush.msra.mxu0 %v1264
    %1321 = vmatpush.msra.mxu0 %v1249
    %1322 = vmatpush.msra.mxu0 %v1245
    %1323 = vmatpush.msra.mxu0 %v1241
    %1324 = vmatpush.msra.mxu0 %v1237
    %1325 = vmatmul.f32.gmra.mxu0 %v1255
    %v1326 = vpop.f32.mrf.mxu0
    %v1327 = vadd.f32 %v1251, %v1326
    %1328 = vdwg.mxu0
    %1329 = vmatpush.msra.mxu0 0.0
    %1330 = vmatpush.msra.mxu0 0.0
    %1331 = vmatpush.msra.mxu0 0.0
    %1332 = vmatpush.msra.mxu0 0.0
    %1333 = vmatpush.msra.mxu0 0.0
    %1334 = vmatpush.msra.mxu0 0.0
    %1335 = vmatpush.msra.mxu0 0.0
    %1336 = vmatpush.msra.mxu0 0.0
    %1337 = vmatpush.msra.mxu0 0.0
    %1338 = vmatpush.msra.mxu0 0.0
    %1339 = vmatpush.msra.mxu0 0.0
    %1340 = vmatpush.msra.mxu0 %v1267
    %1341 = vmatpush.msra.mxu0 %v1250
    %1342 = vmatpush.msra.mxu0 %v1246
    %1343 = vmatpush.msra.mxu0 %v1242
    %1344 = vmatpush.msra.mxu0 %v1238
    %1345 = vmatmul.f32.gmra.mxu0 %v1255
    %v1346 = vpop.f32.mrf.mxu0
    %v1347 = vadd.f32 %v1251, %v1346
    %1348 = vdwg.mxu0
    %vm1349 = vcmp.ge.f32.partialorder %v1287, 0.0
    %vm1350 = vcmp.ge.f32.partialorder %v1307, 0.0
    %vm1351 = vcmp.ge.f32.partialorder %v1327, 0.0
    %vm1352 = vcmp.ge.f32.partialorder %v1347, 0.0
    %v1353 = vmul.f32 %v1287, 0.1
    %v1354 = vmul.f32 %v1307, 0.1
    %v1355 = vmul.f32 %v1327, 0.1
    %v1356 = vmul.f32 %v1347, 0.1
    %v1357 = vsel %vm1349, %v1287, %v1353
    %v1358 = vsel %vm1350, %v1307, %v1354
    %v1359 = vsel %vm1351, %v1327, %v1355
    %v1360 = vsel %vm1352, %v1347, %v1356
    %v1361 = vld [vmem:[%s7] sm:$0xf]
    %1363 = vrot.lane.b32.xlu0 %v1360, 17
    %v1364 = vpop.permute.xlu0 %1363
    %1369 = vrot.lane.b32.xlu0 %v1357, 17
    %v1370 = vpop.permute.xlu0 %1369
    %1371 = vrot.lane.b32.xlu0 %v1358, 17
    %v1372 = vpop.permute.xlu0 %1371
    %1373 = vrot.lane.b32.xlu0 %v1359, 17
    %v1374 = vpop.permute.xlu0 %1373
    %v1375 = vsel %vm518, %v1370, %v1372
    %v1376 = vsel %vm518, %v1372, %v1374
    %v1377 = vsel %vm518, %v1374, %v1364
    %v1382 = vsel %vm518, %v1364, %v1370
    %v1383 = vmul.f32 %v1382, %v996
    %v1384 = vmul.f32 %v1375, %v997
    %v1385 = vmul.f32 %v1376, %v998
    %v1386 = vmul.f32 %v1377, %v999
    %1387 = vrot.lane.b32.xlu0 %v1360, 16
    %v1388 = vpop.permute.xlu0 %1387
    %1390 = vrot.lane.b32.xlu0 %v1357, 16
    %v1391 = vpop.permute.xlu0 %1390
    %1392 = vrot.lane.b32.xlu0 %v1358, 16
    %v1393 = vpop.permute.xlu0 %1392
    %1394 = vrot.lane.b32.xlu0 %v1359, 16
    %v1395 = vpop.permute.xlu0 %1394
    %v1396 = vsel %vm540, %v1391, %v1393
    %v1397 = vsel %vm540, %v1393, %v1395
    %v1398 = vsel %vm540, %v1395, %v1388
    %v1403 = vsel %vm540, %v1388, %v1391
    %v1404 = vmul.f32 %v1403, %v1021
    %v1405 = vmul.f32 %v1396, %v1022
    %v1406 = vmul.f32 %v1397, %v1023
    %v1407 = vmul.f32 %v1398, %v1024
    %1408 = vrot.lane.b32.xlu0 %v1360, 15
    %v1409 = vpop.permute.xlu0 %1408
    %1411 = vrot.lane.b32.xlu0 %v1357, 15
    %v1412 = vpop.permute.xlu0 %1411
    %1413 = vrot.lane.b32.xlu0 %v1358, 15
    %v1414 = vpop.permute.xlu0 %1413
    %1415 = vrot.lane.b32.xlu0 %v1359, 15
    %v1416 = vpop.permute.xlu0 %1415
    %v1417 = vsel %vm574, %v1412, %v1414
    %v1418 = vsel %vm574, %v1414, %v1416
    %v1419 = vsel %vm574, %v1416, %v1409
    %v1424 = vsel %vm574, %v1409, %v1412
    %v1425 = vmul.f32 %v1424, %v1046
    %v1426 = vmul.f32 %v1417, %v1047
    %v1427 = vmul.f32 %v1418, %v1048
    %v1428 = vmul.f32 %v1419, %v1049
    %1429 = vrot.lane.b32.xlu0 %v1360, 1
    %v1430 = vpop.permute.xlu0 %1429
    %1432 = vrot.lane.b32.xlu0 %v1357, 1
    %v1433 = vpop.permute.xlu0 %1432
    %1434 = vrot.lane.b32.xlu0 %v1358, 1
    %v1435 = vpop.permute.xlu0 %1434
    %1436 = vrot.lane.b32.xlu0 %v1359, 1
    %v1437 = vpop.permute.xlu0 %1436
    %v1438 = vsel %vm604, %v1433, %v1435
    %v1439 = vsel %vm604, %v1435, %v1437
    %v1440 = vsel %vm604, %v1437, %v1430
    %v1445 = vsel %vm604, %v1430, %v1433
    %v1446 = vmul.f32 %v1445, %v1071
    %v1447 = vmul.f32 %v1438, %v1072
    %v1448 = vmul.f32 %v1439, %v1073
    %v1449 = vmul.f32 %v1440, %v1074
    %v1450 = vmul.f32 %v1357, %v1079
    %v1451 = vmul.f32 %v1358, %v1080
    %v1452 = vmul.f32 %v1359, %v1081
    %v1453 = vmul.f32 %v1360, %v1082
    %1454 = vrot.lane.b32.xlu0 %v1357, 127
    %v1455 = vpop.permute.xlu0 %1454
    %1456 = vrot.lane.b32.xlu0 %v1358, 127
    %v1457 = vpop.permute.xlu0 %1456
    %1458 = vrot.lane.b32.xlu0 %v1359, 127
    %v1459 = vpop.permute.xlu0 %1458
    %1460 = vrot.lane.b32.xlu0 %v1360, 127
    %v1461 = vpop.permute.xlu0 %1460
    %v1462 = vsel %vm641, %v1455, %v1457
    %v1463 = vsel %vm641, %v1457, %v1459
    %v1464 = vsel %vm641, %v1459, %v1461
    %v1470 = vsel %vm641, %v1461, %v1455
    %v1471 = vmul.f32 %v1462, %v1104
    %v1472 = vmul.f32 %v1463, %v1105
    %v1473 = vmul.f32 %v1464, %v1106
    %v1474 = vmul.f32 %v1470, %v1107
    %1475 = vrot.lane.b32.xlu0 %v1357, 113
    %v1476 = vpop.permute.xlu0 %1475
    %1477 = vrot.lane.b32.xlu0 %v1358, 113
    %v1478 = vpop.permute.xlu0 %1477
    %1479 = vrot.lane.b32.xlu0 %v1359, 113
    %v1480 = vpop.permute.xlu0 %1479
    %1481 = vrot.lane.b32.xlu0 %v1360, 113
    %v1482 = vpop.permute.xlu0 %1481
    %v1483 = vsel %vm671, %v1476, %v1478
    %v1484 = vsel %vm671, %v1478, %v1480
    %v1485 = vsel %vm671, %v1480, %v1482
    %v1491 = vsel %vm671, %v1482, %v1476
    %v1492 = vmul.f32 %v1483, %v1129
    %v1493 = vmul.f32 %v1484, %v1130
    %v1494 = vmul.f32 %v1485, %v1131
    %v1495 = vmul.f32 %v1491, %v1132
    %1496 = vrot.lane.b32.xlu0 %v1357, 112
    %v1497 = vpop.permute.xlu0 %1496
    %1498 = vrot.lane.b32.xlu0 %v1358, 112
    %v1499 = vpop.permute.xlu0 %1498
    %1500 = vrot.lane.b32.xlu0 %v1359, 112
    %v1501 = vpop.permute.xlu0 %1500
    %1502 = vrot.lane.b32.xlu0 %v1360, 112
    %v1503 = vpop.permute.xlu0 %1502
    %v1504 = vsel %vm701, %v1497, %v1499
    %v1505 = vsel %vm701, %v1499, %v1501
    %v1506 = vsel %vm701, %v1501, %v1503
    %v1512 = vsel %vm701, %v1503, %v1497
    %v1513 = vmul.f32 %v1504, %v1154
    %v1514 = vmul.f32 %v1505, %v1155
    %v1515 = vmul.f32 %v1506, %v1156
    %v1516 = vmul.f32 %v1512, %v1157
    %1517 = vrot.lane.b32.xlu0 %v1357, 111
    %v1518 = vpop.permute.xlu0 %1517
    %1519 = vrot.lane.b32.xlu0 %v1358, 111
    %v1520 = vpop.permute.xlu0 %1519
    %1521 = vrot.lane.b32.xlu0 %v1359, 111
    %v1522 = vpop.permute.xlu0 %1521
    %1523 = vrot.lane.b32.xlu0 %v1360, 111
    %v1524 = vpop.permute.xlu0 %1523
    %v1525 = vsel %vm731, %v1518, %v1520
    %v1526 = vsel %vm731, %v1520, %v1522
    %v1527 = vsel %vm731, %v1522, %v1524
    %v1533 = vsel %vm731, %v1524, %v1518
    %v1534 = vmul.f32 %v1525, %v1179
    %v1535 = vmul.f32 %v1526, %v1180
    %v1536 = vmul.f32 %v1527, %v1181
    %v1537 = vmul.f32 %v1533, %v1182
    %v1542 = vrot.slane %v1404, 4
    %v1543 = vrot.slane %v1405, 4
    %v1544 = vrot.slane %v1406, 4
    %v1545 = vrot.slane %v1407, 4
    %v1554 = vrot.slane %v1446, 4
    %v1555 = vrot.slane %v1447, 4
    %v1556 = vrot.slane %v1448, 4
    %v1557 = vrot.slane %v1449, 4
    %v1566 = vrot.slane %v1471, 4
    %v1567 = vrot.slane %v1472, 4
    %v1568 = vrot.slane %v1473, 4
    %v1569 = vrot.slane %v1474, 4
    %v1578 = vrot.slane %v1513, 4
    %v1579 = vrot.slane %v1514, 4
    %v1580 = vrot.slane %v1515, 4
    %v1581 = vrot.slane %v1516, 4
    %v1586 = vsel %vm841, %v1383, %v1542
    %v1587 = vsel %vm841, %v1384, %v1543
    %v1588 = vsel %vm841, %v1385, %v1544
    %v1589 = vsel %vm841, %v1386, %v1545
    %v1590 = vsel %vm841, %v1425, %v1554
    %v1591 = vsel %vm841, %v1426, %v1555
    %v1592 = vsel %vm841, %v1427, %v1556
    %v1593 = vsel %vm841, %v1428, %v1557
    %v1594 = vsel %vm841, %v1450, %v1566
    %v1595 = vsel %vm841, %v1451, %v1567
    %v1596 = vsel %vm841, %v1452, %v1568
    %v1597 = vsel %vm841, %v1453, %v1569
    %v1598 = vsel %vm841, %v1492, %v1578
    %v1599 = vsel %vm841, %v1493, %v1579
    %v1600 = vsel %vm841, %v1494, %v1580
    %v1601 = vsel %vm841, %v1495, %v1581
    %v1603 = vsel %vm1253, %v1361, 0
    %v1606 = vsel %vm841, %v1534, 0
    %v1609 = vsel %vm841, %v1535, 0
    %v1612 = vsel %vm841, %v1536, 0
    %v1615 = vsel %vm841, %v1537, 0
    %1617 = vmatpush.msra.mxu0 0.0
    %1618 = vmatpush.msra.mxu0 0.0
    %1619 = vmatpush.msra.mxu0 0.0
    %1620 = vmatpush.msra.mxu0 0.0
    %1621 = vmatpush.msra.mxu0 0.0
    %1622 = vmatpush.msra.mxu0 0.0
    %1623 = vmatpush.msra.mxu0 0.0
    %1624 = vmatpush.msra.mxu0 0.0
    %1625 = vmatpush.msra.mxu0 0.0
    %1626 = vmatpush.msra.mxu0 0.0
    %1627 = vmatpush.msra.mxu0 0.0
    %1628 = vmatpush.msra.mxu0 %v1606
    %1629 = vmatpush.msra.mxu0 %v1598
    %1630 = vmatpush.msra.mxu0 %v1594
    %1631 = vmatpush.msra.mxu0 %v1590
    %1632 = vmatpush.msra.mxu0 %v1586
    %1633 = vmatmul.f32.gmra.mxu0 %v1603
    %v1634 = vpop.f32.mrf.mxu0
    %v1635 = vadd.f32 0.0, %v1634
    %1636 = vdwg.mxu0
    %1637 = vmatpush.msra.mxu0 0.0
    %1638 = vmatpush.msra.mxu0 0.0
    %1639 = vmatpush.msra.mxu0 0.0
    %1640 = vmatpush.msra.mxu0 0.0
    %1641 = vmatpush.msra.mxu0 0.0
    %1642 = vmatpush.msra.mxu0 0.0
    %1643 = vmatpush.msra.mxu0 0.0
    %1644 = vmatpush.msra.mxu0 0.0
    %1645 = vmatpush.msra.mxu0 0.0
    %1646 = vmatpush.msra.mxu0 0.0
    %1647 = vmatpush.msra.mxu0 0.0
    %1648 = vmatpush.msra.mxu0 %v1609
    %1649 = vmatpush.msra.mxu0 %v1599
    %1650 = vmatpush.msra.mxu0 %v1595
    %1651 = vmatpush.msra.mxu0 %v1591
    %1652 = vmatpush.msra.mxu0 %v1587
    %1653 = vmatmul.f32.gmra.mxu0 %v1603
    %v1654 = vpop.f32.mrf.mxu0
    %v1655 = vadd.f32 0.0, %v1654
    %1656 = vdwg.mxu0
    %1657 = vmatpush.msra.mxu0 0.0
    %1658 = vmatpush.msra.mxu0 0.0
    %1659 = vmatpush.msra.mxu0 0.0
    %1660 = vmatpush.msra.mxu0 0.0
    %1661 = vmatpush.msra.mxu0 0.0
    %1662 = vmatpush.msra.mxu0 0.0
    %1663 = vmatpush.msra.mxu0 0.0
    %1664 = vmatpush.msra.mxu0 0.0
    %1665 = vmatpush.msra.mxu0 0.0
    %1666 = vmatpush.msra.mxu0 0.0
    %1667 = vmatpush.msra.mxu0 0.0
    %1668 = vmatpush.msra.mxu0 %v1612
    %1669 = vmatpush.msra.mxu0 %v1600
    %1670 = vmatpush.msra.mxu0 %v1596
    %1671 = vmatpush.msra.mxu0 %v1592
    %1672 = vmatpush.msra.mxu0 %v1588
    %1673 = vmatmul.f32.gmra.mxu0 %v1603
    %v1674 = vpop.f32.mrf.mxu0
    %v1675 = vadd.f32 0.0, %v1674
    %1676 = vdwg.mxu0
    %1677 = vmatpush.msra.mxu0 0.0
    %1678 = vmatpush.msra.mxu0 0.0
    %1679 = vmatpush.msra.mxu0 0.0
    %1680 = vmatpush.msra.mxu0 0.0
    %1681 = vmatpush.msra.mxu0 0.0
    %1682 = vmatpush.msra.mxu0 0.0
    %1683 = vmatpush.msra.mxu0 0.0
    %1684 = vmatpush.msra.mxu0 0.0
    %1685 = vmatpush.msra.mxu0 0.0
    %1686 = vmatpush.msra.mxu0 0.0
    %1687 = vmatpush.msra.mxu0 0.0
    %1688 = vmatpush.msra.mxu0 %v1615
    %1689 = vmatpush.msra.mxu0 %v1601
    %1690 = vmatpush.msra.mxu0 %v1597
    %1691 = vmatpush.msra.mxu0 %v1593
    %1692 = vmatpush.msra.mxu0 %v1589
    %1693 = vmatmul.f32.gmra.mxu0 %v1603
    %v1694 = vpop.f32.mrf.mxu0
    %v1695 = vadd.f32 0.0, %v1694
    %1696 = vdwg.mxu0
    %v1697 = vld [vmem:[#allocation32] sm:$0xff]
    %v1698 = vld [vmem:[#allocation32 + $0x8] sm:$0xff]
    %v1699 = vld [vmem:[#allocation32 + $0x10] sm:$0xff]
    %v1700 = vld [vmem:[#allocation32 + $0x18] sm:$0xff]
    %v1701 = vld [vmem:[#allocation32 + $0x20] sm:$0xff]
    %v1702 = vld [vmem:[#allocation32 + $0x28] sm:$0xff]
    %v1703 = vld [vmem:[#allocation32 + $0x30] sm:$0xff]
    %v1704 = vld [vmem:[#allocation32 + $0x38] sm:$0xff]
    %v1705 = vld [vmem:[#allocation32 + $0x40] sm:$0xff]
    %v1706 = vld [vmem:[#allocation32 + $0x48] sm:$0xff]
    %v1707 = vld [vmem:[#allocation32 + $0x50] sm:$0xff]
    %v1708 = vld [vmem:[#allocation32 + $0x58] sm:$0xff]
    %v1709 = vld [vmem:[#allocation32 + $0x60] sm:$0xff]
    %v1710 = vld [vmem:[#allocation32 + $0x68] sm:$0xff]
    %v1711 = vld [vmem:[#allocation32 + $0x70] sm:$0xff]
    %v1712 = vld [vmem:[#allocation32 + $0x78] sm:$0xff]
    %v1713 = vld [vmem:[#allocation32 + $0x80] sm:$0xff]
    %v1714 = vld [vmem:[#allocation32 + $0x88] sm:$0xff]
    %v1715 = vld [vmem:[#allocation32 + $0x90] sm:$0xff]
    %v1716 = vld [vmem:[#allocation32 + $0x98] sm:$0xff]
    %v1717 = vld [vmem:[#allocation32 + $0xa0] sm:$0xff]
    %v1718 = vld [vmem:[#allocation32 + $0xa8] sm:$0xff]
    %v1719 = vld [vmem:[#allocation32 + $0xb0] sm:$0xff]
    %v1720 = vld [vmem:[#allocation32 + $0xb8] sm:$0xff]
    %v1721 = vld [vmem:[#allocation32 + $0xc0] sm:$0xff]
    %v1722 = vld [vmem:[#allocation32 + $0xc8] sm:$0xff]
    %v1723 = vld [vmem:[#allocation32 + $0xd0] sm:$0xff]
    %v1724 = vld [vmem:[#allocation32 + $0xd8] sm:$0xff]
    %v1725 = vld [vmem:[#allocation32 + $0xe0] sm:$0xff]
    %v1726 = vld [vmem:[#allocation32 + $0xe8] sm:$0xff]
    %v1727 = vld [vmem:[#allocation32 + $0xf0] sm:$0xff]
    %v1728 = vld [vmem:[#allocation32 + $0xf8] sm:$0xff]
    %v1729 = vld [vmem:[#allocation32 + $0x100] sm:$0xff]
    %v1730 = vld [vmem:[#allocation32 + $0x108] sm:$0xff]
    %v1731 = vld [vmem:[#allocation32 + $0x110] sm:$0xff]
    %v1732 = vld [vmem:[#allocation32 + $0x118] sm:$0xff]
    %v1733 = vld [vmem:[#allocation32 + $0x120] sm:$0xff]
    %v1734 = vld [vmem:[#allocation32 + $0x128] sm:$0xff]
    %v1735 = vld [vmem:[#allocation32 + $0x130] sm:$0xff]
    %v1736 = vld [vmem:[#allocation32 + $0x138] sm:$0xff]
    %v1737 = vld [vmem:[#allocation32 + $0x140] sm:$0xff]
    %v1738 = vld [vmem:[#allocation32 + $0x148] sm:$0xff]
    %v1739 = vld [vmem:[#allocation32 + $0x150] sm:$0xff]
    %v1740 = vld [vmem:[#allocation32 + $0x158] sm:$0xff]
    %v1741 = vld [vmem:[#allocation32 + $0x160] sm:$0xff]
    %v1742 = vld [vmem:[#allocation32 + $0x168] sm:$0xff]
    %v1743 = vld [vmem:[#allocation32 + $0x170] sm:$0xff]
    %v1744 = vld [vmem:[#allocation32 + $0x178] sm:$0xff]
    %v1745 = vld [vmem:[#allocation32 + $0x180] sm:$0xff]
    %v1746 = vld [vmem:[#allocation32 + $0x188] sm:$0xff]
    %v1747 = vld [vmem:[#allocation32 + $0x190] sm:$0xff]
    %v1748 = vld [vmem:[#allocation32 + $0x198] sm:$0xff]
    %v1749 = vld [vmem:[#allocation32 + $0x1a0] sm:$0xff]
    %v1750 = vld [vmem:[#allocation32 + $0x1a8] sm:$0xff]
    %v1751 = vld [vmem:[#allocation32 + $0x1b0] sm:$0xff]
    %v1752 = vld [vmem:[#allocation32 + $0x1b8] sm:$0xff]
    %v1753 = vld [vmem:[#allocation32 + $0x1c0] sm:$0xff]
    %v1754 = vld [vmem:[#allocation32 + $0x1c8] sm:$0xff]
    %v1755 = vld [vmem:[#allocation32 + $0x1d0] sm:$0xff]
    %v1756 = vld [vmem:[#allocation32 + $0x1d8] sm:$0xff]
    %v1757 = vld [vmem:[#allocation32 + $0x1e0] sm:$0xff]
    %v1758 = vld [vmem:[#allocation32 + $0x1e8] sm:$0xff]
    %v1759 = vld [vmem:[#allocation32 + $0x1f0] sm:$0xff]
    %v1760 = vld [vmem:[#allocation32 + $0x1f8] sm:$0xff]
    %1762 = vset.pattern.permute.xlu0 0
    %1763 = vperm.xlu0 %1762, %v472
    %v1764 = vpop.permute.xlu0 %1763
    %1766 = vmatpush.msra.mxu0 %v1712
    %1767 = vmatpush.msra.mxu0 %v1711
    %1768 = vmatpush.msra.mxu0 %v1710
    %1769 = vmatpush.msra.mxu0 %v1709
    %1770 = vmatpush.msra.mxu0 %v1708
    %1771 = vmatpush.msra.mxu0 %v1707
    %1772 = vmatpush.msra.mxu0 %v1706
    %1773 = vmatpush.msra.mxu0 %v1705
    %1774 = vmatpush.msra.mxu0 %v1704
    %1775 = vmatpush.msra.mxu0 %v1703
    %1776 = vmatpush.msra.mxu0 %v1702
    %1777 = vmatpush.msra.mxu0 %v1701
    %1778 = vmatpush.msra.mxu0 %v1700
    %1779 = vmatpush.msra.mxu0 %v1699
    %1780 = vmatpush.msra.mxu0 %v1698
    %1781 = vmatpush.msra.mxu0 %v1697
    %1782 = vmatmul.f32.gmra.mxu0 %v1635
    %v1783 = vpop.f32.mrf.mxu0
    %v1784 = vadd.f32 %v1764, %v1783
    %1785 = vdwg.mxu0
    %1786 = vmatpush.msra.mxu0 %v1728
    %1787 = vmatpush.msra.mxu0 %v1727
    %1788 = vmatpush.msra.mxu0 %v1726
    %1789 = vmatpush.msra.mxu0 %v1725
    %1790 = vmatpush.msra.mxu0 %v1724
    %1791 = vmatpush.msra.mxu0 %v1723
    %1792 = vmatpush.msra.mxu0 %v1722
    %1793 = vmatpush.msra.mxu0 %v1721
    %1794 = vmatpush.msra.mxu0 %v1720
    %1795 = vmatpush.msra.mxu0 %v1719
    %1796 = vmatpush.msra.mxu0 %v1718
    %1797 = vmatpush.msra.mxu0 %v1717
    %1798 = vmatpush.msra.mxu0 %v1716
    %1799 = vmatpush.msra.mxu0 %v1715
    %1800 = vmatpush.msra.mxu0 %v1714
    %1801 = vmatpush.msra.mxu0 %v1713
    %1802 = vmatmul.f32.gmra.mxu0 %v1655
    %v1803 = vpop.f32.mrf.mxu0
    %v1804 = vadd.f32 %v1784, %v1803
    %1805 = vdwg.mxu0
    %1806 = vmatpush.msra.mxu0 %v1744
    %1807 = vmatpush.msra.mxu0 %v1743
    %1808 = vmatpush.msra.mxu0 %v1742
    %1809 = vmatpush.msra.mxu0 %v1741
    %1810 = vmatpush.msra.mxu0 %v1740
    %1811 = vmatpush.msra.mxu0 %v1739
    %1812 = vmatpush.msra.mxu0 %v1738
    %1813 = vmatpush.msra.mxu0 %v1737
    %1814 = vmatpush.msra.mxu0 %v1736
    %1815 = vmatpush.msra.mxu0 %v1735
    %1816 = vmatpush.msra.mxu0 %v1734
    %1817 = vmatpush.msra.mxu0 %v1733
    %1818 = vmatpush.msra.mxu0 %v1732
    %1819 = vmatpush.msra.mxu0 %v1731
    %1820 = vmatpush.msra.mxu0 %v1730
    %1821 = vmatpush.msra.mxu0 %v1729
    %1822 = vmatmul.f32.gmra.mxu0 %v1675
    %v1823 = vpop.f32.mrf.mxu0
    %v1824 = vadd.f32 %v1804, %v1823
    %1825 = vdwg.mxu0
    %1826 = vmatpush.msra.mxu0 %v1760
    %1827 = vmatpush.msra.mxu0 %v1759
    %1828 = vmatpush.msra.mxu0 %v1758
    %1829 = vmatpush.msra.mxu0 %v1757
    %1830 = vmatpush.msra.mxu0 %v1756
    %1831 = vmatpush.msra.mxu0 %v1755
    %1832 = vmatpush.msra.mxu0 %v1754
    %1833 = vmatpush.msra.mxu0 %v1753
    %1834 = vmatpush.msra.mxu0 %v1752
    %1835 = vmatpush.msra.mxu0 %v1751
    %1836 = vmatpush.msra.mxu0 %v1750
    %1837 = vmatpush.msra.mxu0 %v1749
    %1838 = vmatpush.msra.mxu0 %v1748
    %1839 = vmatpush.msra.mxu0 %v1747
    %1840 = vmatpush.msra.mxu0 %v1746
    %1841 = vmatpush.msra.mxu0 %v1745
    %1842 = vmatmul.f32.gmra.mxu0 %v1695
    %v1843 = vpop.f32.mrf.mxu0
    %v1844 = vadd.f32 %v1824, %v1843
    %1845 = vdwg.mxu0
    %vm1846 = vcmp.ge.f32.partialorder %v1844, 0.0
    %v1847 = vmul.f32 %v1844, 0.1
    %v1848 = vsel %vm1846, %v1844, %v1847
    %v1849 = vld [vmem:[#allocation26] sm:$0xff]
    %v1850 = vld [vmem:[#allocation26 + $0x8] sm:$0x1]
    %v1851 = vld [vmem:[#allocation8] sm:$0xff]
    %1853 = vrot.lane.b32.xlu0 %v1848, 9
    %v1854 = vpop.permute.xlu0 %1853
    %v1856 = vperm.slane %v1849, 0
    %v1857 = vmul.f32 %v1854, %v1856
    %1858 = vrot.lane.b32.xlu0 %v1848, 8
    %v1859 = vpop.permute.xlu0 %1858
    %vm1861 = vcmask 64512
    %v1862 = vperm.slane %v1849, 1
    %v1863 = vmul.f32 %v1859, %v1862
    %1864 = vrot.lane.b32.xlu0 %v1848, 7
    %v1865 = vpop.permute.xlu0 %1864
    %vm1867 = vcmask 56320
    %v1868 = vperm.slane %v1849, 2
    %v1869 = vmul.f32 %v1865, %v1868
    %1870 = vrot.lane.b32.xlu0 %v1848, 1
    %v1871 = vpop.permute.xlu0 %1870
    %v1873 = vperm.slane %v1849, 3
    %v1874 = vmul.f32 %v1871, %v1873
    %v1875 = vperm.slane %v1849, 4
    %v1876 = vmul.f32 %v1848, %v1875
    %1877 = vrot.lane.b32.xlu0 %v1848, 127
    %v1878 = vpop.permute.xlu0 %1877
    %v1880 = vperm.slane %v1849, 5
    %v1881 = vmul.f32 %v1878, %v1880
    %1882 = vrot.lane.b32.xlu0 %v1848, 121
    %v1883 = vpop.permute.xlu0 %1882
    %v1885 = vperm.slane %v1849, 6
    %v1886 = vmul.f32 %v1883, %v1885
    %1887 = vrot.lane.b32.xlu0 %v1848, 120
    %v1888 = vpop.permute.xlu0 %1887
    %v1890 = vperm.slane %v1849, 7
    %v1891 = vmul.f32 %v1888, %v1890
    %1892 = vrot.lane.b32.xlu0 %v1848, 119
    %v1893 = vpop.permute.xlu0 %1892
    %v1895 = vperm.slane %v1850, 0
    %v1896 = vmul.f32 %v1893, %v1895
    %v1898 = vrot.slane %v1863, 4
    %v1901 = vrot.slane %v1874, 4
    %v1904 = vrot.slane %v1881, 4
    %v1907 = vrot.slane %v1891, 4
    %v1909 = vsel %vm841, %v1857, %v1898
    %v1910 = vsel %vm841, %v1869, %v1901
    %v1911 = vsel %vm841, %v1876, %v1904
    %v1912 = vsel %vm841, %v1886, %v1907
    %1914 = vset.pattern.permute.xlu0 0
    %1915 = vperm.xlu0 %1914, %v473
    %v1916 = vpop.permute.xlu0 %1915
    %v1917 = vrot.slane %v1764, 4
    %v1918 = vrot.slane %v1916, 4
    %v1919 = vsel %vm841, %v1917, %v1918
    %v1922 = vsel %vm1253, %v1851, 0
    %v1925 = vsel %vm841, %v1896, 0
    %1927 = vmatpush.msra.mxu0 0.0
    %1928 = vmatpush.msra.mxu0 0.0
    %1929 = vmatpush.msra.mxu0 0.0
    %1930 = vmatpush.msra.mxu0 0.0
    %1931 = vmatpush.msra.mxu0 0.0
    %1932 = vmatpush.msra.mxu0 0.0
    %1933 = vmatpush.msra.mxu0 0.0
    %1934 = vmatpush.msra.mxu0 0.0
    %1935 = vmatpush.msra.mxu0 0.0
    %1936 = vmatpush.msra.mxu0 0.0
    %1937 = vmatpush.msra.mxu0 0.0
    %1938 = vmatpush.msra.mxu0 %v1925
    %1939 = vmatpush.msra.mxu0 %v1912
    %1940 = vmatpush.msra.mxu0 %v1911
    %1941 = vmatpush.msra.mxu0 %v1910
    %1942 = vmatpush.msra.mxu0 %v1909
    %1943 = vmatmul.f32.gmra.mxu0 %v1922
    %v1944 = vpop.f32.mrf.mxu0
    %v1945 = vadd.f32 %v1919, %v1944
    %1946 = vdwg.mxu0
    %vm1947 = vcmp.ge.f32.partialorder %v1945, 0.0
    %v1948 = vmul.f32 %v1945, 0.1
    %v1949 = vsel %vm1947, %v1945, %v1948
    %v1950 = vld [vmem:[#allocation9] sm:$0xff]
    %1952 = vrot.lane.b32.xlu0 %v1949, 9
    %v1953 = vpop.permute.xlu0 %1952
    %v1955 = vmul.f32 %v1953, %v1856
    %1956 = vrot.lane.b32.xlu0 %v1949, 8
    %v1957 = vpop.permute.xlu0 %1956
    %v1959 = vmul.f32 %v1957, %v1862
    %1960 = vrot.lane.b32.xlu0 %v1949, 7
    %v1961 = vpop.permute.xlu0 %1960
    %v1963 = vmul.f32 %v1961, %v1868
    %1964 = vrot.lane.b32.xlu0 %v1949, 1
    %v1965 = vpop.permute.xlu0 %1964
    %v1967 = vmul.f32 %v1965, %v1873
    %v1968 = vmul.f32 %v1949, %v1875
    %1969 = vrot.lane.b32.xlu0 %v1949, 127
    %v1970 = vpop.permute.xlu0 %1969
    %v1972 = vmul.f32 %v1970, %v1880
    %1973 = vrot.lane.b32.xlu0 %v1949, 121
    %v1974 = vpop.permute.xlu0 %1973
    %v1976 = vmul.f32 %v1974, %v1885
    %1977 = vrot.lane.b32.xlu0 %v1949, 120
    %v1978 = vpop.permute.xlu0 %1977
    %v1980 = vmul.f32 %v1978, %v1890
    %1981 = vrot.lane.b32.xlu0 %v1949, 119
    %v1982 = vpop.permute.xlu0 %1981
    %v1984 = vmul.f32 %v1982, %v1895
    %1986 = vset.pattern.permute.xlu0 0
    %1987 = vperm.xlu0 %1986, %v474
    %v1988 = vpop.permute.xlu0 %1987
    %v1989 = vrot.slane %v1988, 4
    %v1990 = vsel %vm841, %v1918, %v1989
    %vm1992 = vcmask 588800
    %v1994 = vsel %vm1992, %v1950, 0
    %1996 = vmatpush.msra.mxu0 0.0
    %1997 = vmatpush.msra.mxu0 0.0
    %1998 = vmatpush.msra.mxu0 0.0
    %1999 = vmatpush.msra.mxu0 0.0
    %2000 = vmatpush.msra.mxu0 0.0
    %2001 = vmatpush.msra.mxu0 0.0
    %2002 = vmatpush.msra.mxu0 0.0
    %2003 = vmatpush.msra.mxu0 %v1984
    %2004 = vmatpush.msra.mxu0 %v1980
    %2005 = vmatpush.msra.mxu0 %v1976
    %2006 = vmatpush.msra.mxu0 %v1972
    %2007 = vmatpush.msra.mxu0 %v1968
    %2008 = vmatpush.msra.mxu0 %v1967
    %2009 = vmatpush.msra.mxu0 %v1963
    %2010 = vmatpush.msra.mxu0 %v1959
    %2011 = vmatpush.msra.mxu0 %v1955
    %2012 = vmatmul.f32.gmra.mxu0 %v1994
    %v2013 = vpop.f32.mrf.mxu0
    %v2014 = vadd.f32 %v1990, %v2013
    %2015 = vdwg.mxu0
    %vm2016 = vcmp.ge.f32.partialorder %v2014, 0.0
    %v2017 = vmul.f32 %v2014, 0.1
    %v2018 = vsel %vm2016, %v2014, %v2017
    %v2019 = vld [vmem:[#allocation11] sm:$0xff]
    %2021 = vrot.lane.b32.xlu0 %v2018, 9
    %v2022 = vpop.permute.xlu0 %2021
    %v2024 = vmul.f32 %v2022, %v1856
    %2025 = vrot.lane.b32.xlu0 %v2018, 8
    %v2026 = vpop.permute.xlu0 %2025
    %v2028 = vmul.f32 %v2026, %v1862
    %2029 = vrot.lane.b32.xlu0 %v2018, 7
    %v2030 = vpop.permute.xlu0 %2029
    %v2032 = vmul.f32 %v2030, %v1868
    %2033 = vrot.lane.b32.xlu0 %v2018, 1
    %v2034 = vpop.permute.xlu0 %2033
    %v2036 = vmul.f32 %v2034, %v1873
    %v2037 = vmul.f32 %v2018, %v1875
    %2038 = vrot.lane.b32.xlu0 %v2018, 127
    %v2039 = vpop.permute.xlu0 %2038
    %v2041 = vmul.f32 %v2039, %v1880
    %2042 = vrot.lane.b32.xlu0 %v2018, 121
    %v2043 = vpop.permute.xlu0 %2042
    %v2045 = vmul.f32 %v2043, %v1885
    %2046 = vrot.lane.b32.xlu0 %v2018, 120
    %v2047 = vpop.permute.xlu0 %2046
    %v2049 = vmul.f32 %v2047, %v1890
    %2050 = vrot.lane.b32.xlu0 %v2018, 119
    %v2051 = vpop.permute.xlu0 %2050
    %v2053 = vmul.f32 %v2051, %v1895
    %v2055 = vsel %vm1992, %v2019, 0
    %2057 = vmatpush.msra.mxu0 0.0
    %2058 = vmatpush.msra.mxu0 0.0
    %2059 = vmatpush.msra.mxu0 0.0
    %2060 = vmatpush.msra.mxu0 0.0
    %2061 = vmatpush.msra.mxu0 0.0
    %2062 = vmatpush.msra.mxu0 0.0
    %2063 = vmatpush.msra.mxu0 0.0
    %2064 = vmatpush.msra.mxu0 %v2053
    %2065 = vmatpush.msra.mxu0 %v2049
    %2066 = vmatpush.msra.mxu0 %v2045
    %2067 = vmatpush.msra.mxu0 %v2041
    %2068 = vmatpush.msra.mxu0 %v2037
    %2069 = vmatpush.msra.mxu0 %v2036
    %2070 = vmatpush.msra.mxu0 %v2032
    %2071 = vmatpush.msra.mxu0 %v2028
    %2072 = vmatpush.msra.mxu0 %v2024
    %2073 = vmatmul.f32.gmra.mxu0 %v2055
    %v2074 = vpop.f32.mrf.mxu0
    %v2075 = vadd.f32 0.0, %v2074
    %2076 = vdwg.mxu0
    %v2077 = vld [vmem:[#allocation33] sm:$0xff]
    %v2078 = vld [vmem:[#allocation33 + $0x8] sm:$0xff]
    %v2079 = vld [vmem:[#allocation33 + $0x10] sm:$0xff]
    %v2080 = vld [vmem:[#allocation33 + $0x18] sm:$0xff]
    %v2081 = vld [vmem:[#allocation33 + $0x20] sm:$0xff]
    %v2082 = vld [vmem:[#allocation33 + $0x28] sm:$0xff]
    %v2083 = vld [vmem:[#allocation33 + $0x30] sm:$0xff]
    %v2084 = vld [vmem:[#allocation33 + $0x38] sm:$0xff]
    %v2085 = vld [vmem:[#allocation33 + $0x40] sm:$0xff]
    %v2086 = vld [vmem:[#allocation33 + $0x48] sm:$0xff]
    %v2087 = vld [vmem:[#allocation33 + $0x50] sm:$0xff]
    %v2088 = vld [vmem:[#allocation33 + $0x58] sm:$0xff]
    %v2089 = vld [vmem:[#allocation33 + $0x60] sm:$0xff]
    %v2090 = vld [vmem:[#allocation33 + $0x68] sm:$0xff]
    %v2091 = vld [vmem:[#allocation33 + $0x70] sm:$0xff]
    %v2092 = vld [vmem:[#allocation33 + $0x78] sm:$0xff]
    %2094 = vset.pattern.permute.xlu0 0
    %2095 = vperm.xlu0 %2094, %v475
    %v2096 = vpop.permute.xlu0 %2095
    %v2097 = vrot.slane %v2096, 4
    %v2098 = vsel %vm841, %v1989, %v2097
    %2100 = vmatpush.msra.mxu0 %v2092
    %2101 = vmatpush.msra.mxu0 %v2091
    %2102 = vmatpush.msra.mxu0 %v2090
    %2103 = vmatpush.msra.mxu0 %v2089
    %2104 = vmatpush.msra.mxu0 %v2088
    %2105 = vmatpush.msra.mxu0 %v2087
    %2106 = vmatpush.msra.mxu0 %v2086
    %2107 = vmatpush.msra.mxu0 %v2085
    %2108 = vmatpush.msra.mxu0 %v2084
    %2109 = vmatpush.msra.mxu0 %v2083
    %2110 = vmatpush.msra.mxu0 %v2082
    %2111 = vmatpush.msra.mxu0 %v2081
    %2112 = vmatpush.msra.mxu0 %v2080
    %2113 = vmatpush.msra.mxu0 %v2079
    %2114 = vmatpush.msra.mxu0 %v2078
    %2115 = vmatpush.msra.mxu0 %v2077
    %2116 = vmatmul.f32.gmra.mxu0 %v2075
    %v2117 = vpop.f32.mrf.mxu0
    %v2118 = vadd.f32 %v2098, %v2117
    %2119 = vdwg.mxu0
    %vm2120 = vcmp.ge.f32.partialorder %v2118, 0.0
    %v2121 = vmul.f32 %v2118, 0.1
    %v2122 = vsel %vm2120, %v2118, %v2121
    %v2123 = vld [vmem:[#allocation27] sm:$0xff]
    %v2124 = vld [vmem:[#allocation27 + $0x8] sm:$0x1]
    %v2125 = vld [vmem:[#allocation12] sm:$0xff]
    %v2126 = vld [vmem:[#allocation12 + $0x8] sm:$0xf]
    %2128 = vrot.lane.b32.xlu0 %v2122, 101
    %v2129 = vpop.permute.xlu0 %2128
    %2131 = vrot.lane.b32.xlu0 %v2122, 5
    %v2132 = vpop.permute.xlu0 %2131
    %vm2134 = vcmask 39936
    %v2135 = vsel %vm2134, %v2129, %v2132
    %v2136 = vperm.slane %v2123, 0
    %v2137 = vmul.f32 %v2135, %v2136
    %2138 = vrot.lane.b32.xlu0 %v2122, 100
    %v2139 = vpop.permute.xlu0 %2138
    %2141 = vrot.lane.b32.xlu0 %v2122, 4
    %v2142 = vpop.permute.xlu0 %2141
    %vm2144 = vcmask 31744
    %v2145 = vsel %vm2144, %v2139, %v2142
    %v2146 = vperm.slane %v2123, 1
    %v2147 = vmul.f32 %v2145, %v2146
    %2148 = vrot.lane.b32.xlu0 %v2122, 99
    %v2149 = vpop.permute.xlu0 %2148
    %2151 = vrot.lane.b32.xlu0 %v2122, 3
    %v2152 = vpop.permute.xlu0 %2151
    %vm2154 = vcmask 23552
    %v2155 = vsel %vm2154, %v2149, %v2152
    %v2156 = vperm.slane %v2123, 2
    %v2157 = vmul.f32 %v2155, %v2156
    %2158 = vrot.lane.b32.xlu0 %v2122, 97
    %v2159 = vpop.permute.xlu0 %2158
    %2161 = vrot.lane.b32.xlu0 %v2122, 1
    %v2162 = vpop.permute.xlu0 %2161
    %v2164 = vsel %vm604, %v2159, %v2162
    %v2165 = vperm.slane %v2123, 3
    %v2166 = vmul.f32 %v2164, %v2165
    %v2167 = vperm.slane %v2123, 4
    %v2168 = vmul.f32 %v2122, %v2167
    %2169 = vrot.lane.b32.xlu0 %v2122, 127
    %v2170 = vpop.permute.xlu0 %2169
    %2172 = vrot.lane.b32.xlu0 %v2122, 31
    %v2173 = vpop.permute.xlu0 %2172
    %vm2175 = vcmask 252928
    %v2176 = vsel %vm2175, %v2170, %v2173
    %v2177 = vperm.slane %v2123, 5
    %v2178 = vmul.f32 %v2176, %v2177
    %2179 = vrot.lane.b32.xlu0 %v2122, 125
    %v2180 = vpop.permute.xlu0 %2179
    %2182 = vrot.lane.b32.xlu0 %v2122, 29
    %v2183 = vpop.permute.xlu0 %2182
    %vm2185 = vcmask 236544
    %v2186 = vsel %vm2185, %v2180, %v2183
    %v2187 = vperm.slane %v2123, 6
    %v2188 = vmul.f32 %v2186, %v2187
    %2189 = vrot.lane.b32.xlu0 %v2122, 124
    %v2190 = vpop.permute.xlu0 %2189
    %2192 = vrot.lane.b32.xlu0 %v2122, 28
    %v2193 = vpop.permute.xlu0 %2192
    %vm2195 = vcmask 228352
    %v2196 = vsel %vm2195, %v2190, %v2193
    %v2197 = vperm.slane %v2123, 7
    %v2198 = vmul.f32 %v2196, %v2197
    %2199 = vrot.lane.b32.xlu0 %v2122, 123
    %v2200 = vpop.permute.xlu0 %2199
    %2202 = vrot.lane.b32.xlu0 %v2122, 27
    %v2203 = vpop.permute.xlu0 %2202
    %vm2205 = vcmask 220160
    %v2206 = vsel %vm2205, %v2200, %v2203
    %v2207 = vperm.slane %v2124, 0
    %v2208 = vmul.f32 %v2206, %v2207
    %2210 = vset.pattern.permute.xlu0 0
    %2211 = vperm.xlu0 %2210, %v476
    %v2212 = vpop.permute.xlu0 %2211
    %v2213 = vrot.slane %v2212, 4
    %v2214 = vsel %vm841, %v2097, %v2213
    %v2218 = vsel %vm1992, %v2125, 0
    %v2221 = vsel %vm1992, %v2126, 0
    %2223 = vmatpush.msra.mxu0 0.0
    %2224 = vmatpush.msra.mxu0 0.0
    %2225 = vmatpush.msra.mxu0 0.0
    %2226 = vmatpush.msra.mxu0 0.0
    %2227 = vmatpush.msra.mxu0 0.0
    %2228 = vmatpush.msra.mxu0 0.0
    %2229 = vmatpush.msra.mxu0 0.0
    %2230 = vmatpush.msra.mxu0 %v2208
    %2231 = vmatpush.msra.mxu0 %v2198
    %2232 = vmatpush.msra.mxu0 %v2188
    %2233 = vmatpush.msra.mxu0 %v2178
    %2234 = vmatpush.msra.mxu0 %v2168
    %2235 = vmatpush.msra.mxu0 %v2166
    %2236 = vmatpush.msra.mxu0 %v2157
    %2237 = vmatpush.msra.mxu0 %v2147
    %2238 = vmatpush.msra.mxu0 %v2137
    %2239 = vmatmul.f32.gmra.mxu0 %v2218
    %v2240 = vpop.f32.mrf.mxu0
    %v2241 = vadd.f32 %v2214, %v2240
    %2242 = vmatmul.f32.gmra.mxu0 %v2221
    %v2243 = vpop.f32.mrf.mxu0
    %v2244 = vadd.f32 %v2213, %v2243
    %2245 = vdwg.mxu0
    %vm2246 = vcmp.ge.f32.partialorder %v2241, 0.0
    %vm2247 = vcmp.ge.f32.partialorder %v2244, 0.0
    %v2248 = vmul.f32 %v2241, 0.1
    %v2249 = vmul.f32 %v2244, 0.1
    %v2250 = vsel %vm2246, %v2241, %v2248
    %v2251 = vsel %vm2247, %v2244, %v2249
    %v2252 = vld [vmem:[#allocation14] sm:$0xff]
    %v2253 = vld [vmem:[#allocation14 + $0x8] sm:$0xf]
    %2256 = vrot.lane.b32.xlu0 %v2250, 101
    %v2257 = vpop.permute.xlu0 %2256
    %2258 = vrot.lane.b32.xlu0 %v2251, 101
    %v2259 = vpop.permute.xlu0 %2258
    %2262 = vrot.lane.b32.xlu0 %v2250, 5
    %v2263 = vpop.permute.xlu0 %2262
    %2264 = vrot.lane.b32.xlu0 %v2251, 5
    %v2265 = vpop.permute.xlu0 %2264
    %v2268 = vsel %vm2134, %v2257, %v2263
    %v2269 = vsel %vm2134, %v2259, %v2265
    %v2270 = vmul.f32 %v2268, %v2136
    %v2271 = vmul.f32 %v2269, %v2136
    %2272 = vrot.lane.b32.xlu0 %v2250, 100
    %v2273 = vpop.permute.xlu0 %2272
    %2274 = vrot.lane.b32.xlu0 %v2251, 100
    %v2275 = vpop.permute.xlu0 %2274
    %2278 = vrot.lane.b32.xlu0 %v2250, 4
    %v2279 = vpop.permute.xlu0 %2278
    %2280 = vrot.lane.b32.xlu0 %v2251, 4
    %v2281 = vpop.permute.xlu0 %2280
    %v2284 = vsel %vm2144, %v2273, %v2279
    %v2285 = vsel %vm2144, %v2275, %v2281
    %v2286 = vmul.f32 %v2284, %v2146
    %v2287 = vmul.f32 %v2285, %v2146
    %2288 = vrot.lane.b32.xlu0 %v2250, 99
    %v2289 = vpop.permute.xlu0 %2288
    %2290 = vrot.lane.b32.xlu0 %v2251, 99
    %v2291 = vpop.permute.xlu0 %2290
    %2294 = vrot.lane.b32.xlu0 %v2250, 3
    %v2295 = vpop.permute.xlu0 %2294
    %2296 = vrot.lane.b32.xlu0 %v2251, 3
    %v2297 = vpop.permute.xlu0 %2296
    %v2300 = vsel %vm2154, %v2289, %v2295
    %v2301 = vsel %vm2154, %v2291, %v2297
    %v2302 = vmul.f32 %v2300, %v2156
    %v2303 = vmul.f32 %v2301, %v2156
    %2304 = vrot.lane.b32.xlu0 %v2250, 97
    %v2305 = vpop.permute.xlu0 %2304
    %2306 = vrot.lane.b32.xlu0 %v2251, 97
    %v2307 = vpop.permute.xlu0 %2306
    %2310 = vrot.lane.b32.xlu0 %v2250, 1
    %v2311 = vpop.permute.xlu0 %2310
    %2312 = vrot.lane.b32.xlu0 %v2251, 1
    %v2313 = vpop.permute.xlu0 %2312
    %v2316 = vsel %vm604, %v2305, %v2311
    %v2317 = vsel %vm604, %v2307, %v2313
    %v2318 = vmul.f32 %v2316, %v2165
    %v2319 = vmul.f32 %v2317, %v2165
    %v2320 = vmul.f32 %v2250, %v2167
    %v2321 = vmul.f32 %v2251, %v2167
    %2322 = vrot.lane.b32.xlu0 %v2250, 127
    %v2323 = vpop.permute.xlu0 %2322
    %2324 = vrot.lane.b32.xlu0 %v2251, 127
    %v2325 = vpop.permute.xlu0 %2324
    %2328 = vrot.lane.b32.xlu0 %v2250, 31
    %v2329 = vpop.permute.xlu0 %2328
    %2330 = vrot.lane.b32.xlu0 %v2251, 31
    %v2331 = vpop.permute.xlu0 %2330
    %v2334 = vsel %vm2175, %v2323, %v2329
    %v2335 = vsel %vm2175, %v2325, %v2331
    %v2336 = vmul.f32 %v2334, %v2177
    %v2337 = vmul.f32 %v2335, %v2177
    %2338 = vrot.lane.b32.xlu0 %v2250, 125
    %v2339 = vpop.permute.xlu0 %2338
    %2340 = vrot.lane.b32.xlu0 %v2251, 125
    %v2341 = vpop.permute.xlu0 %2340
    %2344 = vrot.lane.b32.xlu0 %v2250, 29
    %v2345 = vpop.permute.xlu0 %2344
    %2346 = vrot.lane.b32.xlu0 %v2251, 29
    %v2347 = vpop.permute.xlu0 %2346
    %v2350 = vsel %vm2185, %v2339, %v2345
    %v2351 = vsel %vm2185, %v2341, %v2347
    %v2352 = vmul.f32 %v2350, %v2187
    %v2353 = vmul.f32 %v2351, %v2187
    %2354 = vrot.lane.b32.xlu0 %v2250, 124
    %v2355 = vpop.permute.xlu0 %2354
    %2356 = vrot.lane.b32.xlu0 %v2251, 124
    %v2357 = vpop.permute.xlu0 %2356
    %2360 = vrot.lane.b32.xlu0 %v2250, 28
    %v2361 = vpop.permute.xlu0 %2360
    %2362 = vrot.lane.b32.xlu0 %v2251, 28
    %v2363 = vpop.permute.xlu0 %2362
    %v2366 = vsel %vm2195, %v2355, %v2361
    %v2367 = vsel %vm2195, %v2357, %v2363
    %v2368 = vmul.f32 %v2366, %v2197
    %v2369 = vmul.f32 %v2367, %v2197
    %2370 = vrot.lane.b32.xlu0 %v2250, 123
    %v2371 = vpop.permute.xlu0 %2370
    %2372 = vrot.lane.b32.xlu0 %v2251, 123
    %v2373 = vpop.permute.xlu0 %2372
    %2376 = vrot.lane.b32.xlu0 %v2250, 27
    %v2377 = vpop.permute.xlu0 %2376
    %2378 = vrot.lane.b32.xlu0 %v2251, 27
    %v2379 = vpop.permute.xlu0 %2378
    %v2382 = vsel %vm2205, %v2371, %v2377
    %v2383 = vsel %vm2205, %v2373, %v2379
    %v2384 = vmul.f32 %v2382, %v2207
    %v2385 = vmul.f32 %v2383, %v2207
    %v2388 = vrot.slane %v2286, 4
    %v2389 = vrot.slane %v2287, 4
    %v2390 = vsel %vm841, %v2388, %v2389
    %v2395 = vrot.slane %v2318, 4
    %v2396 = vrot.slane %v2319, 4
    %v2397 = vsel %vm841, %v2395, %v2396
    %v2402 = vrot.slane %v2336, 4
    %v2403 = vrot.slane %v2337, 4
    %v2404 = vsel %vm841, %v2402, %v2403
    %v2409 = vrot.slane %v2368, 4
    %v2410 = vrot.slane %v2369, 4
    %v2411 = vsel %vm841, %v2409, %v2410
    %v2414 = vsel %vm841, %v2271, %v2388
    %v2415 = vsel %vm841, %v2303, %v2395
    %v2416 = vsel %vm841, %v2321, %v2402
    %v2417 = vsel %vm841, %v2353, %v2409
    %2419 = vset.pattern.permute.xlu0 0
    %2420 = vperm.xlu0 %2419, %v477
    %v2421 = vpop.permute.xlu0 %2420
    %2424 = vset.pattern.permute.xlu0 0
    %2425 = vperm.xlu0 %2424, %v478
    %v2426 = vpop.permute.xlu0 %2425
    %vm2428 = vcmask 883712
    %v2430 = vsel %vm2428, %v2252, 0
    %v2433 = vsel %vm2428, %v2253, 0
    %v2436 = vsel %vm841, %v2385, 0
    %2438 = vmatpush.msra.mxu0 0.0
    %2439 = vmatpush.msra.mxu0 0.0
    %2440 = vmatpush.msra.mxu0 %v2436
    %2441 = vmatpush.msra.mxu0 %v2384
    %2442 = vmatpush.msra.mxu0 %v2411
    %2443 = vmatpush.msra.mxu0 %v2417
    %2444 = vmatpush.msra.mxu0 %v2352
    %2445 = vmatpush.msra.mxu0 %v2404
    %2446 = vmatpush.msra.mxu0 %v2416
    %2447 = vmatpush.msra.mxu0 %v2320
    %2448 = vmatpush.msra.mxu0 %v2397
    %2449 = vmatpush.msra.mxu0 %v2415
    %2450 = vmatpush.msra.mxu0 %v2302
    %2451 = vmatpush.msra.mxu0 %v2390
    %2452 = vmatpush.msra.mxu0 %v2414
    %2453 = vmatpush.msra.mxu0 %v2270
    %2454 = vmatmul.f32.gmra.mxu0 %v2430
    %v2455 = vpop.f32.mrf.mxu0
    %v2456 = vadd.f32 %v2421, %v2455
    %2457 = vmatmul.f32.gmra.mxu0 %v2433
    %v2458 = vpop.f32.mrf.mxu0
    %v2459 = vadd.f32 %v2426, %v2458
    %2460 = vdwg.mxu0
    %vm2461 = vcmp.ge.f32.partialorder %v2456, 0.0
    %vm2462 = vcmp.ge.f32.partialorder %v2459, 0.0
    %v2463 = vmul.f32 %v2456, 0.1
    %v2464 = vmul.f32 %v2459, 0.1
    %v2465 = vsel %vm2461, %v2456, %v2463
    %v2466 = vsel %vm2462, %v2459, %v2464
    %v2467 = vld [vmem:[#allocation15] sm:$0xff]
    %v2468 = vld [vmem:[#allocation15 + $0x8] sm:$0xf]
    %2471 = vrot.lane.b32.xlu0 %v2465, 101
    %v2472 = vpop.permute.xlu0 %2471
    %2473 = vrot.lane.b32.xlu0 %v2466, 101
    %v2474 = vpop.permute.xlu0 %2473
    %2477 = vrot.lane.b32.xlu0 %v2465, 5
    %v2478 = vpop.permute.xlu0 %2477
    %2479 = vrot.lane.b32.xlu0 %v2466, 5
    %v2480 = vpop.permute.xlu0 %2479
    %v2483 = vsel %vm2134, %v2472, %v2478
    %v2484 = vsel %vm2134, %v2474, %v2480
    %v2485 = vmul.f32 %v2483, %v2136
    %v2486 = vmul.f32 %v2484, %v2136
    %2487 = vrot.lane.b32.xlu0 %v2465, 100
    %v2488 = vpop.permute.xlu0 %2487
    %2489 = vrot.lane.b32.xlu0 %v2466, 100
    %v2490 = vpop.permute.xlu0 %2489
    %2493 = vrot.lane.b32.xlu0 %v2465, 4
    %v2494 = vpop.permute.xlu0 %2493
    %2495 = vrot.lane.b32.xlu0 %v2466, 4
    %v2496 = vpop.permute.xlu0 %2495
    %v2499 = vsel %vm2144, %v2488, %v2494
    %v2500 = vsel %vm2144, %v2490, %v2496
    %v2501 = vmul.f32 %v2499, %v2146
    %v2502 = vmul.f32 %v2500, %v2146
    %2503 = vrot.lane.b32.xlu0 %v2465, 99
    %v2504 = vpop.permute.xlu0 %2503
    %2505 = vrot.lane.b32.xlu0 %v2466, 99
    %v2506 = vpop.permute.xlu0 %2505
    %2509 = vrot.lane.b32.xlu0 %v2465, 3
    %v2510 = vpop.permute.xlu0 %2509
    %2511 = vrot.lane.b32.xlu0 %v2466, 3
    %v2512 = vpop.permute.xlu0 %2511
    %v2515 = vsel %vm2154, %v2504, %v2510
    %v2516 = vsel %vm2154, %v2506, %v2512
    %v2517 = vmul.f32 %v2515, %v2156
    %v2518 = vmul.f32 %v2516, %v2156
    %2519 = vrot.lane.b32.xlu0 %v2465, 97
    %v2520 = vpop.permute.xlu0 %2519
    %2521 = vrot.lane.b32.xlu0 %v2466, 97
    %v2522 = vpop.permute.xlu0 %2521
    %2525 = vrot.lane.b32.xlu0 %v2465, 1
    %v2526 = vpop.permute.xlu0 %2525
    %2527 = vrot.lane.b32.xlu0 %v2466, 1
    %v2528 = vpop.permute.xlu0 %2527
    %v2531 = vsel %vm604, %v2520, %v2526
    %v2532 = vsel %vm604, %v2522, %v2528
    %v2533 = vmul.f32 %v2531, %v2165
    %v2534 = vmul.f32 %v2532, %v2165
    %v2535 = vmul.f32 %v2465, %v2167
    %v2536 = vmul.f32 %v2466, %v2167
    %2537 = vrot.lane.b32.xlu0 %v2465, 127
    %v2538 = vpop.permute.xlu0 %2537
    %2539 = vrot.lane.b32.xlu0 %v2466, 127
    %v2540 = vpop.permute.xlu0 %2539
    %2543 = vrot.lane.b32.xlu0 %v2465, 31
    %v2544 = vpop.permute.xlu0 %2543
    %2545 = vrot.lane.b32.xlu0 %v2466, 31
    %v2546 = vpop.permute.xlu0 %2545
    %v2549 = vsel %vm2175, %v2538, %v2544
    %v2550 = vsel %vm2175, %v2540, %v2546
    %v2551 = vmul.f32 %v2549, %v2177
    %v2552 = vmul.f32 %v2550, %v2177
    %2553 = vrot.lane.b32.xlu0 %v2465, 125
    %v2554 = vpop.permute.xlu0 %2553
    %2555 = vrot.lane.b32.xlu0 %v2466, 125
    %v2556 = vpop.permute.xlu0 %2555
    %2559 = vrot.lane.b32.xlu0 %v2465, 29
    %v2560 = vpop.permute.xlu0 %2559
    %2561 = vrot.lane.b32.xlu0 %v2466, 29
    %v2562 = vpop.permute.xlu0 %2561
    %v2565 = vsel %vm2185, %v2554, %v2560
    %v2566 = vsel %vm2185, %v2556, %v2562
    %v2567 = vmul.f32 %v2565, %v2187
    %v2568 = vmul.f32 %v2566, %v2187
    %2569 = vrot.lane.b32.xlu0 %v2465, 124
    %v2570 = vpop.permute.xlu0 %2569
    %2571 = vrot.lane.b32.xlu0 %v2466, 124
    %v2572 = vpop.permute.xlu0 %2571
    %2575 = vrot.lane.b32.xlu0 %v2465, 28
    %v2576 = vpop.permute.xlu0 %2575
    %2577 = vrot.lane.b32.xlu0 %v2466, 28
    %v2578 = vpop.permute.xlu0 %2577
    %v2581 = vsel %vm2195, %v2570, %v2576
    %v2582 = vsel %vm2195, %v2572, %v2578
    %v2583 = vmul.f32 %v2581, %v2197
    %v2584 = vmul.f32 %v2582, %v2197
    %2585 = vrot.lane.b32.xlu0 %v2465, 123
    %v2586 = vpop.permute.xlu0 %2585
    %2587 = vrot.lane.b32.xlu0 %v2466, 123
    %v2588 = vpop.permute.xlu0 %2587
    %2591 = vrot.lane.b32.xlu0 %v2465, 27
    %v2592 = vpop.permute.xlu0 %2591
    %2593 = vrot.lane.b32.xlu0 %v2466, 27
    %v2594 = vpop.permute.xlu0 %2593
    %v2597 = vsel %vm2205, %v2586, %v2592
    %v2598 = vsel %vm2205, %v2588, %v2594
    %v2599 = vmul.f32 %v2597, %v2207
    %v2600 = vmul.f32 %v2598, %v2207
    %v2603 = vrot.slane %v2501, 4
    %v2604 = vrot.slane %v2502, 4
    %v2605 = vsel %vm841, %v2603, %v2604
    %v2610 = vrot.slane %v2533, 4
    %v2611 = vrot.slane %v2534, 4
    %v2612 = vsel %vm841, %v2610, %v2611
    %v2617 = vrot.slane %v2551, 4
    %v2618 = vrot.slane %v2552, 4
    %v2619 = vsel %vm841, %v2617, %v2618
    %v2624 = vrot.slane %v2583, 4
    %v2625 = vrot.slane %v2584, 4
    %v2626 = vsel %vm841, %v2624, %v2625
    %v2629 = vsel %vm841, %v2486, %v2603
    %v2630 = vsel %vm841, %v2518, %v2610
    %v2631 = vsel %vm841, %v2536, %v2617
    %v2632 = vsel %vm841, %v2568, %v2624
    %v2634 = vsel %vm2428, %v2467, 0
    %v2637 = vsel %vm2428, %v2468, 0
    %v2640 = vsel %vm841, %v2600, 0
    %2642 = vmatpush.msra.mxu0 0.0
    %2643 = vmatpush.msra.mxu0 0.0
    %2644 = vmatpush.msra.mxu0 %v2640
    %2645 = vmatpush.msra.mxu0 %v2599
    %2646 = vmatpush.msra.mxu0 %v2626
    %2647 = vmatpush.msra.mxu0 %v2632
    %2648 = vmatpush.msra.mxu0 %v2567
    %2649 = vmatpush.msra.mxu0 %v2619
    %2650 = vmatpush.msra.mxu0 %v2631
    %2651 = vmatpush.msra.mxu0 %v2535
    %2652 = vmatpush.msra.mxu0 %v2612
    %2653 = vmatpush.msra.mxu0 %v2630
    %2654 = vmatpush.msra.mxu0 %v2517
    %2655 = vmatpush.msra.mxu0 %v2605
    %2656 = vmatpush.msra.mxu0 %v2629
    %2657 = vmatpush.msra.mxu0 %v2485
    %2658 = vmatmul.f32.gmra.mxu0 %v2634
    %v2659 = vpop.f32.mrf.mxu0
    %v2660 = vadd.f32 0.0, %v2659
    %2661 = vmatmul.f32.gmra.mxu0 %v2637
    %v2662 = vpop.f32.mrf.mxu0
    %v2663 = vadd.f32 0.0, %v2662
    %2664 = vdwg.mxu0
    %v2665 = vld [vmem:[#allocation35] sm:$0xff]
    %v2666 = vld [vmem:[#allocation35 + $0x8] sm:$0xff]
    %v2667 = vld [vmem:[#allocation35 + $0x10] sm:$0xff]
    %v2668 = vld [vmem:[#allocation35 + $0x18] sm:$0xff]
    %2670 = vset.pattern.permute.xlu0 0
    %2671 = vperm.xlu0 %2670, %v479
    %v2672 = vpop.permute.xlu0 %2671
    %v2673 = vrot.slane %v2426, 4
    %v2674 = vrot.slane %v2672, 4
    %v2675 = vsel %vm841, %v2673, %v2674
    %vm2678 = vcmask 261120
    %v2680 = vsel %vm2678, %v2660, 0
    %v2683 = vsel %vm2678, %v2663, 0
    %2685 = vmatpush.msra.mxu0 0.0
    %2686 = vmatpush.msra.mxu0 0.0
    %2687 = vmatpush.msra.mxu0 0.0
    %2688 = vmatpush.msra.mxu0 0.0
    %2689 = vmatpush.msra.mxu0 0.0
    %2690 = vmatpush.msra.mxu0 0.0
    %2691 = vmatpush.msra.mxu0 0.0
    %2692 = vmatpush.msra.mxu0 0.0
    %2693 = vmatpush.msra.mxu0 0.0
    %2694 = vmatpush.msra.mxu0 0.0
    %2695 = vmatpush.msra.mxu0 0.0
    %2696 = vmatpush.msra.mxu0 0.0
    %2697 = vmatpush.msra.mxu0 %v2668
    %2698 = vmatpush.msra.mxu0 %v2667
    %2699 = vmatpush.msra.mxu0 %v2666
    %2700 = vmatpush.msra.mxu0 %v2665
    %2701 = vmatmul.f32.gmra.mxu0 %v2680
    %v2702 = vpop.f32.mrf.mxu0
    %v2703 = vadd.f32 %v2675, %v2702
    %2704 = vmatmul.f32.gmra.mxu0 %v2683
    %v2705 = vpop.f32.mrf.mxu0
    %v2706 = vadd.f32 %v2674, %v2705
    %2707 = vdwg.mxu0
    %vm2708 = vcmp.ge.f32.partialorder %v2703, 0.0
    %vm2709 = vcmp.ge.f32.partialorder %v2706, 0.0
    %v2710 = vmul.f32 %v2703, 0.1
    %v2711 = vmul.f32 %v2706, 0.1
    %v2712 = vsel %vm2708, %v2703, %v2710
    %v2713 = vsel %vm2709, %v2706, %v2711
    %v2714 = vld [vmem:[#allocation29] sm:$0xff]
    %v2715 = vld [vmem:[#allocation29 + $0x8] sm:$0x1]
    %v2716 = vld [vmem:[#allocation17] sm:$0xff]
    %v2717 = vld [vmem:[#allocation17 + $0x8] sm:$0xff]
    %2720 = vrot.lane.b32.xlu0 %v2712, 123
    %v2721 = vpop.permute.xlu0 %2720
    %2722 = vrot.lane.b32.xlu0 %v2713, 123
    %v2723 = vpop.permute.xlu0 %2722
    %2726 = vrot.lane.b32.xlu0 %v2712, 3
    %v2727 = vpop.permute.xlu0 %2726
    %2728 = vrot.lane.b32.xlu0 %v2713, 3
    %v2729 = vpop.permute.xlu0 %2728
    %v2732 = vsel %vm2154, %v2721, %v2727
    %v2733 = vsel %vm2154, %v2723, %v2729
    %v2734 = vperm.slane %v2714, 0
    %v2735 = vmul.f32 %v2732, %v2734
    %v2736 = vmul.f32 %v2733, %v2734
    %2737 = vrot.lane.b32.xlu0 %v2712, 122
    %v2738 = vpop.permute.xlu0 %2737
    %2739 = vrot.lane.b32.xlu0 %v2713, 122
    %v2740 = vpop.permute.xlu0 %2739
    %2743 = vrot.lane.b32.xlu0 %v2712, 2
    %v2744 = vpop.permute.xlu0 %2743
    %2745 = vrot.lane.b32.xlu0 %v2713, 2
    %v2746 = vpop.permute.xlu0 %2745
    %vm2749 = vcmask 15360
    %v2750 = vsel %vm2749, %v2738, %v2744
    %v2751 = vsel %vm2749, %v2740, %v2746
    %v2752 = vperm.slane %v2714, 1
    %v2753 = vmul.f32 %v2750, %v2752
    %v2754 = vmul.f32 %v2751, %v2752
    %2755 = vrot.lane.b32.xlu0 %v2712, 121
    %v2756 = vpop.permute.xlu0 %2755
    %2757 = vrot.lane.b32.xlu0 %v2713, 121
    %v2758 = vpop.permute.xlu0 %2757
    %2761 = vrot.lane.b32.xlu0 %v2712, 1
    %v2762 = vpop.permute.xlu0 %2761
    %2763 = vrot.lane.b32.xlu0 %v2713, 1
    %v2764 = vpop.permute.xlu0 %2763
    %v2767 = vsel %vm604, %v2756, %v2762
    %v2768 = vsel %vm604, %v2758, %v2764
    %v2769 = vperm.slane %v2714, 2
    %v2770 = vmul.f32 %v2767, %v2769
    %v2771 = vmul.f32 %v2768, %v2769
    %v2772 = vperm.slane %v2714, 3
    %v2773 = vmul.f32 %v2767, %v2772
    %v2774 = vmul.f32 %v2768, %v2772
    %v2775 = vperm.slane %v2714, 4
    %v2776 = vmul.f32 %v2712, %v2775
    %v2777 = vmul.f32 %v2713, %v2775
    %2778 = vrot.lane.b32.xlu0 %v2712, 127
    %v2779 = vpop.permute.xlu0 %2778
    %2780 = vrot.lane.b32.xlu0 %v2713, 127
    %v2781 = vpop.permute.xlu0 %2780
    %2784 = vrot.lane.b32.xlu0 %v2712, 7
    %v2785 = vpop.permute.xlu0 %2784
    %2786 = vrot.lane.b32.xlu0 %v2713, 7
    %v2787 = vpop.permute.xlu0 %2786
    %v2790 = vsel %vm1867, %v2779, %v2785
    %v2791 = vsel %vm1867, %v2781, %v2787
    %v2792 = vperm.slane %v2714, 5
    %v2793 = vmul.f32 %v2790, %v2792
    %v2794 = vmul.f32 %v2791, %v2792
    %v2795 = vperm.slane %v2714, 6
    %v2796 = vmul.f32 %v2790, %v2795
    %v2797 = vmul.f32 %v2791, %v2795
    %2798 = vrot.lane.b32.xlu0 %v2712, 126
    %v2799 = vpop.permute.xlu0 %2798
    %2800 = vrot.lane.b32.xlu0 %v2713, 126
    %v2801 = vpop.permute.xlu0 %2800
    %2804 = vrot.lane.b32.xlu0 %v2712, 6
    %v2805 = vpop.permute.xlu0 %2804
    %2806 = vrot.lane.b32.xlu0 %v2713, 6
    %v2807 = vpop.permute.xlu0 %2806
    %vm2810 = vcmask 48128
    %v2811 = vsel %vm2810, %v2799, %v2805
    %v2812 = vsel %vm2810, %v2801, %v2807
    %v2813 = vperm.slane %v2714, 7
    %v2814 = vmul.f32 %v2811, %v2813
    %v2815 = vmul.f32 %v2812, %v2813
    %2816 = vrot.lane.b32.xlu0 %v2712, 125
    %v2817 = vpop.permute.xlu0 %2816
    %2818 = vrot.lane.b32.xlu0 %v2713, 125
    %v2819 = vpop.permute.xlu0 %2818
    %2822 = vrot.lane.b32.xlu0 %v2712, 5
    %v2823 = vpop.permute.xlu0 %2822
    %2824 = vrot.lane.b32.xlu0 %v2713, 5
    %v2825 = vpop.permute.xlu0 %2824
    %v2828 = vsel %vm2134, %v2817, %v2823
    %v2829 = vsel %vm2134, %v2819, %v2825
    %v2830 = vperm.slane %v2715, 0
    %v2831 = vmul.f32 %v2828, %v2830
    %v2832 = vmul.f32 %v2829, %v2830
    %v2835 = vrot.slane %v2753, 4
    %v2836 = vrot.slane %v2754, 4
    %v2837 = vsel %vm841, %v2835, %v2836
    %v2842 = vrot.slane %v2773, 4
    %v2843 = vrot.slane %v2774, 4
    %v2844 = vsel %vm841, %v2842, %v2843
    %v2849 = vrot.slane %v2793, 4
    %v2850 = vrot.slane %v2794, 4
    %v2851 = vsel %vm841, %v2849, %v2850
    %v2856 = vrot.slane %v2814, 4
    %v2857 = vrot.slane %v2815, 4
    %v2858 = vsel %vm841, %v2856, %v2857
    %v2861 = vsel %vm841, %v2736, %v2835
    %v2862 = vsel %vm841, %v2771, %v2842
    %v2863 = vsel %vm841, %v2777, %v2849
    %v2864 = vsel %vm841, %v2797, %v2856
    %2866 = vset.pattern.permute.xlu0 0
    %2867 = vperm.xlu0 %2866, %v480
    %v2868 = vpop.permute.xlu0 %2867
    %2871 = vset.pattern.permute.xlu0 0
    %2872 = vperm.xlu0 %2871, %v481
    %v2873 = vpop.permute.xlu0 %2872
    %v2876 = vsel %vm2428, %v2716, 0
    %v2879 = vsel %vm2428, %v2717, 0
    %v2882 = vsel %vm841, %v2832, 0
    %2884 = vmatpush.msra.mxu0 0.0
    %2885 = vmatpush.msra.mxu0 0.0
    %2886 = vmatpush.msra.mxu0 %v2882
    %2887 = vmatpush.msra.mxu0 %v2831
    %2888 = vmatpush.msra.mxu0 %v2858
    %2889 = vmatpush.msra.mxu0 %v2864
    %2890 = vmatpush.msra.mxu0 %v2796
    %2891 = vmatpush.msra.mxu0 %v2851
    %2892 = vmatpush.msra.mxu0 %v2863
    %2893 = vmatpush.msra.mxu0 %v2776
    %2894 = vmatpush.msra.mxu0 %v2844
    %2895 = vmatpush.msra.mxu0 %v2862
    %2896 = vmatpush.msra.mxu0 %v2770
    %2897 = vmatpush.msra.mxu0 %v2837
    %2898 = vmatpush.msra.mxu0 %v2861
    %2899 = vmatpush.msra.mxu0 %v2735
    %2900 = vmatmul.f32.gmra.mxu0 %v2876
    %v2901 = vpop.f32.mrf.mxu0
    %v2902 = vadd.f32 %v2868, %v2901
    %2903 = vmatmul.f32.gmra.mxu0 %v2879
    %v2904 = vpop.f32.mrf.mxu0
    %v2905 = vadd.f32 %v2873, %v2904
    %2906 = vdwg.mxu0
    %vm2907 = vcmp.ge.f32.partialorder %v2902, 0.0
    %vm2908 = vcmp.ge.f32.partialorder %v2905, 0.0
    %v2909 = vmul.f32 %v2902, 0.1
    %v2910 = vmul.f32 %v2905, 0.1
    %v2911 = vsel %vm2907, %v2902, %v2909
    %v2912 = vsel %vm2908, %v2905, %v2910
    %v2913 = vld [vmem:[#allocation18] sm:$0xff]
    %v2914 = vld [vmem:[#allocation18 + $0x8] sm:$0xff]
    %v2915 = vld [vmem:[#allocation18 + $0x10] sm:$0xff]
    %v2916 = vld [vmem:[#allocation18 + $0x18] sm:$0xff]
    %2919 = vrot.lane.b32.xlu0 %v2911, 123
    %v2920 = vpop.permute.xlu0 %2919
    %2921 = vrot.lane.b32.xlu0 %v2912, 123
    %v2922 = vpop.permute.xlu0 %2921
    %2925 = vrot.lane.b32.xlu0 %v2911, 3
    %v2926 = vpop.permute.xlu0 %2925
    %2927 = vrot.lane.b32.xlu0 %v2912, 3
    %v2928 = vpop.permute.xlu0 %2927
    %v2931 = vsel %vm2154, %v2920, %v2926
    %v2932 = vsel %vm2154, %v2922, %v2928
    %v2933 = vmul.f32 %v2931, %v2734
    %v2934 = vmul.f32 %v2932, %v2734
    %2935 = vrot.lane.b32.xlu0 %v2911, 122
    %v2936 = vpop.permute.xlu0 %2935
    %2937 = vrot.lane.b32.xlu0 %v2912, 122
    %v2938 = vpop.permute.xlu0 %2937
    %2941 = vrot.lane.b32.xlu0 %v2911, 2
    %v2942 = vpop.permute.xlu0 %2941
    %2943 = vrot.lane.b32.xlu0 %v2912, 2
    %v2944 = vpop.permute.xlu0 %2943
    %v2947 = vsel %vm2749, %v2936, %v2942
    %v2948 = vsel %vm2749, %v2938, %v2944
    %v2949 = vmul.f32 %v2947, %v2752
    %v2950 = vmul.f32 %v2948, %v2752
    %2951 = vrot.lane.b32.xlu0 %v2911, 121
    %v2952 = vpop.permute.xlu0 %2951
    %2953 = vrot.lane.b32.xlu0 %v2912, 121
    %v2954 = vpop.permute.xlu0 %2953
    %2957 = vrot.lane.b32.xlu0 %v2911, 1
    %v2958 = vpop.permute.xlu0 %2957
    %2959 = vrot.lane.b32.xlu0 %v2912, 1
    %v2960 = vpop.permute.xlu0 %2959
    %v2963 = vsel %vm604, %v2952, %v2958
    %v2964 = vsel %vm604, %v2954, %v2960
    %v2965 = vmul.f32 %v2963, %v2769
    %v2966 = vmul.f32 %v2964, %v2769
    %v2967 = vmul.f32 %v2963, %v2772
    %v2968 = vmul.f32 %v2964, %v2772
    %v2969 = vmul.f32 %v2911, %v2775
    %v2970 = vmul.f32 %v2912, %v2775
    %2971 = vrot.lane.b32.xlu0 %v2911, 127
    %v2972 = vpop.permute.xlu0 %2971
    %2973 = vrot.lane.b32.xlu0 %v2912, 127
    %v2974 = vpop.permute.xlu0 %2973
    %2977 = vrot.lane.b32.xlu0 %v2911, 7
    %v2978 = vpop.permute.xlu0 %2977
    %2979 = vrot.lane.b32.xlu0 %v2912, 7
    %v2980 = vpop.permute.xlu0 %2979
    %v2983 = vsel %vm1867, %v2972, %v2978
    %v2984 = vsel %vm1867, %v2974, %v2980
    %v2985 = vmul.f32 %v2983, %v2792
    %v2986 = vmul.f32 %v2984, %v2792
    %v2987 = vmul.f32 %v2983, %v2795
    %v2988 = vmul.f32 %v2984, %v2795
    %2989 = vrot.lane.b32.xlu0 %v2911, 126
    %v2990 = vpop.permute.xlu0 %2989
    %2991 = vrot.lane.b32.xlu0 %v2912, 126
    %v2992 = vpop.permute.xlu0 %2991
    %2995 = vrot.lane.b32.xlu0 %v2911, 6
    %v2996 = vpop.permute.xlu0 %2995
    %2997 = vrot.lane.b32.xlu0 %v2912, 6
    %v2998 = vpop.permute.xlu0 %2997
    %v3001 = vsel %vm2810, %v2990, %v2996
    %v3002 = vsel %vm2810, %v2992, %v2998
    %v3003 = vmul.f32 %v3001, %v2813
    %v3004 = vmul.f32 %v3002, %v2813
    %3005 = vrot.lane.b32.xlu0 %v2911, 125
    %v3006 = vpop.permute.xlu0 %3005
    %3007 = vrot.lane.b32.xlu0 %v2912, 125
    %v3008 = vpop.permute.xlu0 %3007
    %3011 = vrot.lane.b32.xlu0 %v2911, 5
    %v3012 = vpop.permute.xlu0 %3011
    %3013 = vrot.lane.b32.xlu0 %v2912, 5
    %v3014 = vpop.permute.xlu0 %3013
    %v3017 = vsel %vm2134, %v3006, %v3012
    %v3018 = vsel %vm2134, %v3008, %v3014
    %v3019 = vmul.f32 %v3017, %v2830
    %v3020 = vmul.f32 %v3018, %v2830
    %3022 = vset.pattern.permute.xlu0 0
    %3023 = vperm.xlu0 %3022, %v482
    %v3024 = vpop.permute.xlu0 %3023
    %3027 = vset.pattern.permute.xlu0 0
    %3028 = vperm.xlu0 %3027, %v483
    %v3029 = vpop.permute.xlu0 %3028
    %v3032 = vsel %vm540, %v2914, 0
    %v3035 = vsel %vm540, %v2916, 0
    %3037 = vmatpush.msra.mxu0 %v3004
    %3038 = vmatpush.msra.mxu0 %v3003
    %3039 = vmatpush.msra.mxu0 %v2988
    %3040 = vmatpush.msra.mxu0 %v2987
    %3041 = vmatpush.msra.mxu0 %v2986
    %3042 = vmatpush.msra.mxu0 %v2985
    %3043 = vmatpush.msra.mxu0 %v2970
    %3044 = vmatpush.msra.mxu0 %v2969
    %3045 = vmatpush.msra.mxu0 %v2968
    %3046 = vmatpush.msra.mxu0 %v2967
    %3047 = vmatpush.msra.mxu0 %v2966
    %3048 = vmatpush.msra.mxu0 %v2965
    %3049 = vmatpush.msra.mxu0 %v2950
    %3050 = vmatpush.msra.mxu0 %v2949
    %3051 = vmatpush.msra.mxu0 %v2934
    %3052 = vmatpush.msra.mxu0 %v2933
    %3053 = vmatmul.f32.gmra.mxu0 %v2913
    %v3054 = vpop.f32.mrf.mxu0
    %v3055 = vadd.f32 %v3024, %v3054
    %3056 = vmatmul.f32.gmra.mxu0 %v2915
    %v3057 = vpop.f32.mrf.mxu0
    %v3058 = vadd.f32 %v3029, %v3057
    %3059 = vdwg.mxu0
    %3060 = vmatpush.msra.mxu0 0.0
    %3061 = vmatpush.msra.mxu0 0.0
    %3062 = vmatpush.msra.mxu0 0.0
    %3063 = vmatpush.msra.mxu0 0.0
    %3064 = vmatpush.msra.mxu0 0.0
    %3065 = vmatpush.msra.mxu0 0.0
    %3066 = vmatpush.msra.mxu0 0.0
    %3067 = vmatpush.msra.mxu0 0.0
    %3068 = vmatpush.msra.mxu0 0.0
    %3069 = vmatpush.msra.mxu0 0.0
    %3070 = vmatpush.msra.mxu0 0.0
    %3071 = vmatpush.msra.mxu0 0.0
    %3072 = vmatpush.msra.mxu0 0.0
    %3073 = vmatpush.msra.mxu0 0.0
    %3074 = vmatpush.msra.mxu0 %v3020
    %3075 = vmatpush.msra.mxu0 %v3019
    %3076 = vmatmul.f32.gmra.mxu0 %v3032
    %v3077 = vpop.f32.mrf.mxu0
    %v3078 = vadd.f32 %v3055, %v3077
    %3079 = vmatmul.f32.gmra.mxu0 %v3035
    %v3080 = vpop.f32.mrf.mxu0
    %v3081 = vadd.f32 %v3058, %v3080
    %3082 = vdwg.mxu0
    %vm3083 = vcmp.ge.f32.partialorder %v3078, 0.0
    %vm3084 = vcmp.ge.f32.partialorder %v3081, 0.0
    %v3085 = vmul.f32 %v3078, 0.1
    %v3086 = vmul.f32 %v3081, 0.1
    %v3087 = vsel %vm3083, %v3078, %v3085
    %v3088 = vsel %vm3084, %v3081, %v3086
    %v3089 = vld [vmem:[%s25] sm:$0xff]
    %v3090 = vld [vmem:[%s25 + $0x8] sm:$0xff]
    %v3091 = vld [vmem:[%s25 + $0x10] sm:$0xff]
    %v3092 = vld [vmem:[%s25 + $0x18] sm:$0xff]
    %3095 = vrot.lane.b32.xlu0 %v3087, 123
    %v3096 = vpop.permute.xlu0 %3095
    %3097 = vrot.lane.b32.xlu0 %v3088, 123
    %v3098 = vpop.permute.xlu0 %3097
    %3101 = vrot.lane.b32.xlu0 %v3087, 3
    %v3102 = vpop.permute.xlu0 %3101
    %3103 = vrot.lane.b32.xlu0 %v3088, 3
    %v3104 = vpop.permute.xlu0 %3103
    %v3107 = vsel %vm2154, %v3096, %v3102
    %v3108 = vsel %vm2154, %v3098, %v3104
    %v3109 = vmul.f32 %v3107, %v2734
    %v3110 = vmul.f32 %v3108, %v2734
    %3111 = vrot.lane.b32.xlu0 %v3087, 122
    %v3112 = vpop.permute.xlu0 %3111
    %3113 = vrot.lane.b32.xlu0 %v3088, 122
    %v3114 = vpop.permute.xlu0 %3113
    %3117 = vrot.lane.b32.xlu0 %v3087, 2
    %v3118 = vpop.permute.xlu0 %3117
    %3119 = vrot.lane.b32.xlu0 %v3088, 2
    %v3120 = vpop.permute.xlu0 %3119
    %v3123 = vsel %vm2749, %v3112, %v3118
    %v3124 = vsel %vm2749, %v3114, %v3120
    %v3125 = vmul.f32 %v3123, %v2752
    %v3126 = vmul.f32 %v3124, %v2752
    %3127 = vrot.lane.b32.xlu0 %v3087, 121
    %v3128 = vpop.permute.xlu0 %3127
    %3129 = vrot.lane.b32.xlu0 %v3088, 121
    %v3130 = vpop.permute.xlu0 %3129
    %3133 = vrot.lane.b32.xlu0 %v3087, 1
    %v3134 = vpop.permute.xlu0 %3133
    %3135 = vrot.lane.b32.xlu0 %v3088, 1
    %v3136 = vpop.permute.xlu0 %3135
    %v3139 = vsel %vm604, %v3128, %v3134
    %v3140 = vsel %vm604, %v3130, %v3136
    %v3141 = vmul.f32 %v3139, %v2769
    %v3142 = vmul.f32 %v3140, %v2769
    %v3143 = vmul.f32 %v3139, %v2772
    %v3144 = vmul.f32 %v3140, %v2772
    %v3145 = vmul.f32 %v3087, %v2775
    %v3146 = vmul.f32 %v3088, %v2775
    %3147 = vrot.lane.b32.xlu0 %v3087, 127
    %v3148 = vpop.permute.xlu0 %3147
    %3149 = vrot.lane.b32.xlu0 %v3088, 127
    %v3150 = vpop.permute.xlu0 %3149
    %3153 = vrot.lane.b32.xlu0 %v3087, 7
    %v3154 = vpop.permute.xlu0 %3153
    %3155 = vrot.lane.b32.xlu0 %v3088, 7
    %v3156 = vpop.permute.xlu0 %3155
    %v3159 = vsel %vm1867, %v3148, %v3154
    %v3160 = vsel %vm1867, %v3150, %v3156
    %v3161 = vmul.f32 %v3159, %v2792
    %v3162 = vmul.f32 %v3160, %v2792
    %v3163 = vmul.f32 %v3159, %v2795
    %v3164 = vmul.f32 %v3160, %v2795
    %3165 = vrot.lane.b32.xlu0 %v3087, 126
    %v3166 = vpop.permute.xlu0 %3165
    %3167 = vrot.lane.b32.xlu0 %v3088, 126
    %v3168 = vpop.permute.xlu0 %3167
    %3171 = vrot.lane.b32.xlu0 %v3087, 6
    %v3172 = vpop.permute.xlu0 %3171
    %3173 = vrot.lane.b32.xlu0 %v3088, 6
    %v3174 = vpop.permute.xlu0 %3173
    %v3177 = vsel %vm2810, %v3166, %v3172
    %v3178 = vsel %vm2810, %v3168, %v3174
    %v3179 = vmul.f32 %v3177, %v2813
    %v3180 = vmul.f32 %v3178, %v2813
    %3181 = vrot.lane.b32.xlu0 %v3087, 125
    %v3182 = vpop.permute.xlu0 %3181
    %3183 = vrot.lane.b32.xlu0 %v3088, 125
    %v3184 = vpop.permute.xlu0 %3183
    %3187 = vrot.lane.b32.xlu0 %v3087, 5
    %v3188 = vpop.permute.xlu0 %3187
    %3189 = vrot.lane.b32.xlu0 %v3088, 5
    %v3190 = vpop.permute.xlu0 %3189
    %v3193 = vsel %vm2134, %v3182, %v3188
    %v3194 = vsel %vm2134, %v3184, %v3190
    %v3195 = vmul.f32 %v3193, %v2830
    %v3196 = vmul.f32 %v3194, %v2830
    %v3198 = vsel %vm540, %v3090, 0
    %v3201 = vsel %vm540, %v3092, 0
    %3203 = vmatpush.msra.mxu0 %v3180
    %3204 = vmatpush.msra.mxu0 %v3179
    %3205 = vmatpush.msra.mxu0 %v3164
    %3206 = vmatpush.msra.mxu0 %v3163
    %3207 = vmatpush.msra.mxu0 %v3162
    %3208 = vmatpush.msra.mxu0 %v3161
    %3209 = vmatpush.msra.mxu0 %v3146
    %3210 = vmatpush.msra.mxu0 %v3145
    %3211 = vmatpush.msra.mxu0 %v3144
    %3212 = vmatpush.msra.mxu0 %v3143
    %3213 = vmatpush.msra.mxu0 %v3142
    %3214 = vmatpush.msra.mxu0 %v3141
    %3215 = vmatpush.msra.mxu0 %v3126
    %3216 = vmatpush.msra.mxu0 %v3125
    %3217 = vmatpush.msra.mxu0 %v3110
    %3218 = vmatpush.msra.mxu0 %v3109
    %3219 = vmatmul.f32.gmra.mxu0 %v3089
    %v3220 = vpop.f32.mrf.mxu0
    %v3221 = vadd.f32 0.0, %v3220
    %3222 = vmatmul.f32.gmra.mxu0 %v3091
    %v3223 = vpop.f32.mrf.mxu0
    %v3224 = vadd.f32 0.0, %v3223
    %3225 = vdwg.mxu0
    %3226 = vmatpush.msra.mxu0 0.0
    %3227 = vmatpush.msra.mxu0 0.0
    %3228 = vmatpush.msra.mxu0 0.0
    %3229 = vmatpush.msra.mxu0 0.0
    %3230 = vmatpush.msra.mxu0 0.0
    %3231 = vmatpush.msra.mxu0 0.0
    %3232 = vmatpush.msra.mxu0 0.0
    %3233 = vmatpush.msra.mxu0 0.0
    %3234 = vmatpush.msra.mxu0 0.0
    %3235 = vmatpush.msra.mxu0 0.0
    %3236 = vmatpush.msra.mxu0 0.0
    %3237 = vmatpush.msra.mxu0 0.0
    %3238 = vmatpush.msra.mxu0 0.0
    %3239 = vmatpush.msra.mxu0 0.0
    %3240 = vmatpush.msra.mxu0 %v3196
    %3241 = vmatpush.msra.mxu0 %v3195
    %3242 = vmatmul.f32.gmra.mxu0 %v3198
    %v3243 = vpop.f32.mrf.mxu0
    %v3244 = vadd.f32 %v3221, %v3243
    %3245 = vmatmul.f32.gmra.mxu0 %v3201
    %v3246 = vpop.f32.mrf.mxu0
    %v3247 = vadd.f32 %v3224, %v3246
    %3248 = vdwg.mxu0
    %v3249 = vld [vmem:[#allocation36] sm:$0xff]
    %3251 = vset.pattern.permute.xlu0 0
    %3252 = vperm.xlu0 %3251, %v484
    %v3253 = vpop.permute.xlu0 %3252
    %3256 = vset.pattern.permute.xlu0 0
    %3257 = vperm.xlu0 %3256, %v485
    %v3258 = vpop.permute.xlu0 %3257
    %v3261 = vsel %vm1861, %v3244, 0
    %v3264 = vsel %vm1861, %v3247, 0
    %3266 = vmatpush.msra.mxu0 0.0
    %3267 = vmatpush.msra.mxu0 0.0
    %3268 = vmatpush.msra.mxu0 0.0
    %3269 = vmatpush.msra.mxu0 0.0
    %3270 = vmatpush.msra.mxu0 0.0
    %3271 = vmatpush.msra.mxu0 0.0
    %3272 = vmatpush.msra.mxu0 0.0
    %3273 = vmatpush.msra.mxu0 0.0
    %3274 = vmatpush.msra.mxu0 0.0
    %3275 = vmatpush.msra.mxu0 0.0
    %3276 = vmatpush.msra.mxu0 0.0
    %3277 = vmatpush.msra.mxu0 0.0
    %3278 = vmatpush.msra.mxu0 0.0
    %3279 = vmatpush.msra.mxu0 0.0
    %3280 = vmatpush.msra.mxu0 0.0
    %3281 = vmatpush.msra.mxu0 %v3249
    %3282 = vmatmul.f32.gmra.mxu0 %v3261
    %v3283 = vpop.f32.mrf.mxu0
    %v3284 = vadd.f32 %v3253, %v3283
    %3285 = vmatmul.f32.gmra.mxu0 %v3264
    %v3286 = vpop.f32.mrf.mxu0
    %v3287 = vadd.f32 %v3258, %v3286
    %3288 = vdwg.mxu0
    %vm3289 = vcmp.ge.f32.partialorder %v3284, 0.0
    %vm3290 = vcmp.ge.f32.partialorder %v3287, 0.0
    %v3291 = vmul.f32 %v3284, 0.1
    %v3292 = vmul.f32 %v3287, 0.1
    %v3293 = vsel %vm3289, %v3284, %v3291
    %v3294 = vsel %vm3290, %v3287, %v3292
    %v3295 = vld [vmem:[#allocation30] sm:$0xff]
    %v3296 = vld [vmem:[#allocation30 + $0x8] sm:$0x1]
    %v3297 = vld [vmem:[#allocation20] sm:$0xff]
    %v3298 = vld [vmem:[#allocation20 + $0x8] sm:$0xff]
    %v3299 = vld [vmem:[#allocation20 + $0x10] sm:$0xff]
    %v3300 = vld [vmem:[#allocation20 + $0x18] sm:$0xff]
    %v3301 = vld [vmem:[#allocation20 + $0x20] sm:$0xf]
    %v3302 = vld [vmem:[#allocation20 + $0x28] sm:$0xf]
    %v3303 = vperm.slane %v3295, 0
    %v3304 = vmul.f32 %v3293, %v3303
    %v3305 = vmul.f32 %v3294, %v3303
    %3308 = vrot.lane.b32.xlu0 %v3293, 127
    %v3309 = vpop.permute.xlu0 %3308
    %3310 = vrot.lane.b32.xlu0 %v3294, 127
    %v3311 = vpop.permute.xlu0 %3310
    %3314 = vrot.lane.b32.xlu0 %v3293, 1
    %v3315 = vpop.permute.xlu0 %3314
    %3316 = vrot.lane.b32.xlu0 %v3294, 1
    %v3317 = vpop.permute.xlu0 %3316
    %v3320 = vsel %vm604, %v3309, %v3315
    %v3321 = vsel %vm604, %v3311, %v3317
    %v3322 = vperm.slane %v3295, 1
    %v3323 = vmul.f32 %v3320, %v3322
    %v3324 = vmul.f32 %v3321, %v3322
    %v3325 = vperm.slane %v3295, 2
    %v3326 = vmul.f32 %v3293, %v3325
    %v3327 = vmul.f32 %v3294, %v3325
    %v3328 = vperm.slane %v3295, 3
    %v3329 = vmul.f32 %v3320, %v3328
    %v3330 = vmul.f32 %v3321, %v3328
    %v3331 = vperm.slane %v3295, 4
    %v3332 = vmul.f32 %v3293, %v3331
    %v3333 = vmul.f32 %v3294, %v3331
    %v3334 = vperm.slane %v3295, 5
    %v3335 = vmul.f32 %v3320, %v3334
    %v3336 = vmul.f32 %v3321, %v3334
    %v3337 = vperm.slane %v3295, 6
    %v3338 = vmul.f32 %v3293, %v3337
    %v3339 = vmul.f32 %v3294, %v3337
    %v3340 = vperm.slane %v3295, 7
    %v3341 = vmul.f32 %v3320, %v3340
    %v3342 = vmul.f32 %v3321, %v3340
    %v3343 = vperm.slane %v3296, 0
    %v3344 = vmul.f32 %v3293, %v3343
    %v3345 = vmul.f32 %v3294, %v3343
    %3347 = vset.pattern.permute.xlu0 0
    %3348 = vperm.xlu0 %3347, %v486
    %v3349 = vpop.permute.xlu0 %3348
    %3352 = vset.pattern.permute.xlu0 0
    %3353 = vperm.xlu0 %3352, %v487
    %v3354 = vpop.permute.xlu0 %3353
    %3357 = vset.pattern.permute.xlu0 0
    %3358 = vperm.xlu0 %3357, %v488
    %v3359 = vpop.permute.xlu0 %3358
    %v3362 = vsel %vm540, %v3298, 0
    %v3365 = vsel %vm540, %v3300, 0
    %v3368 = vsel %vm540, %v3302, 0
    %3370 = vmatpush.msra.mxu0 %v3342
    %3371 = vmatpush.msra.mxu0 %v3341
    %3372 = vmatpush.msra.mxu0 %v3339
    %3373 = vmatpush.msra.mxu0 %v3338
    %3374 = vmatpush.msra.mxu0 %v3336
    %3375 = vmatpush.msra.mxu0 %v3335
    %3376 = vmatpush.msra.mxu0 %v3333
    %3377 = vmatpush.msra.mxu0 %v3332
    %3378 = vmatpush.msra.mxu0 %v3330
    %3379 = vmatpush.msra.mxu0 %v3329
    %3380 = vmatpush.msra.mxu0 %v3327
    %3381 = vmatpush.msra.mxu0 %v3326
    %3382 = vmatpush.msra.mxu0 %v3324
    %3383 = vmatpush.msra.mxu0 %v3323
    %3384 = vmatpush.msra.mxu0 %v3305
    %3385 = vmatpush.msra.mxu0 %v3304
    %3386 = vmatmul.f32.gmra.mxu0 %v3297
    %v3387 = vpop.f32.mrf.mxu0
    %v3388 = vadd.f32 %v3349, %v3387
    %3389 = vmatmul.f32.gmra.mxu0 %v3299
    %v3390 = vpop.f32.mrf.mxu0
    %v3391 = vadd.f32 %v3354, %v3390
    %3392 = vmatmul.f32.gmra.mxu0 %v3301
    %v3393 = vpop.f32.mrf.mxu0
    %v3394 = vadd.f32 %v3359, %v3393
    %3395 = vdwg.mxu0
    %3396 = vmatpush.msra.mxu0 0.0
    %3397 = vmatpush.msra.mxu0 0.0
    %3398 = vmatpush.msra.mxu0 0.0
    %3399 = vmatpush.msra.mxu0 0.0
    %3400 = vmatpush.msra.mxu0 0.0
    %3401 = vmatpush.msra.mxu0 0.0
    %3402 = vmatpush.msra.mxu0 0.0
    %3403 = vmatpush.msra.mxu0 0.0
    %3404 = vmatpush.msra.mxu0 0.0
    %3405 = vmatpush.msra.mxu0 0.0
    %3406 = vmatpush.msra.mxu0 0.0
    %3407 = vmatpush.msra.mxu0 0.0
    %3408 = vmatpush.msra.mxu0 0.0
    %3409 = vmatpush.msra.mxu0 0.0
    %3410 = vmatpush.msra.mxu0 %v3345
    %3411 = vmatpush.msra.mxu0 %v3344
    %3412 = vmatmul.f32.gmra.mxu0 %v3362
    %v3413 = vpop.f32.mrf.mxu0
    %v3414 = vadd.f32 %v3388, %v3413
    %3415 = vmatmul.f32.gmra.mxu0 %v3365
    %v3416 = vpop.f32.mrf.mxu0
    %v3417 = vadd.f32 %v3391, %v3416
    %3418 = vmatmul.f32.gmra.mxu0 %v3368
    %v3419 = vpop.f32.mrf.mxu0
    %v3420 = vadd.f32 %v3394, %v3419
    %3421 = vdwg.mxu0
    %vm3422 = vcmp.ge.f32.partialorder %v3414, 0.0
    %vm3423 = vcmp.ge.f32.partialorder %v3417, 0.0
    %vm3424 = vcmp.ge.f32.partialorder %v3420, 0.0
    %v3425 = vmul.f32 %v3414, 0.1
    %v3426 = vmul.f32 %v3417, 0.1
    %v3427 = vmul.f32 %v3420, 0.1
    %v3428 = vsel %vm3422, %v3414, %v3425
    %v3429 = vsel %vm3423, %v3417, %v3426
    %v3430 = vsel %vm3424, %v3420, %v3427
    %v3431 = vld [vmem:[#allocation21] sm:$0xff]
    %v3432 = vld [vmem:[#allocation21 + $0x8] sm:$0xff]
    %v3433 = vld [vmem:[#allocation21 + $0x10] sm:$0xff]
    %v3434 = vld [vmem:[#allocation21 + $0x18] sm:$0xff]
    %v3435 = vld [vmem:[#allocation21 + $0x20] sm:$0xf]
    %v3436 = vld [vmem:[#allocation21 + $0x28] sm:$0xf]
    %v3437 = vmul.f32 %v3428, %v3303
    %v3438 = vmul.f32 %v3429, %v3303
    %v3439 = vmul.f32 %v3430, %v3303
    %3443 = vrot.lane.b32.xlu0 %v3428, 127
    %v3444 = vpop.permute.xlu0 %3443
    %3445 = vrot.lane.b32.xlu0 %v3429, 127
    %v3446 = vpop.permute.xlu0 %3445
    %3447 = vrot.lane.b32.xlu0 %v3430, 127
    %v3448 = vpop.permute.xlu0 %3447
    %3452 = vrot.lane.b32.xlu0 %v3428, 1
    %v3453 = vpop.permute.xlu0 %3452
    %3454 = vrot.lane.b32.xlu0 %v3429, 1
    %v3455 = vpop.permute.xlu0 %3454
    %3456 = vrot.lane.b32.xlu0 %v3430, 1
    %v3457 = vpop.permute.xlu0 %3456
    %v3461 = vsel %vm604, %v3444, %v3453
    %v3462 = vsel %vm604, %v3446, %v3455
    %v3463 = vsel %vm604, %v3448, %v3457
    %v3464 = vmul.f32 %v3461, %v3322
    %v3465 = vmul.f32 %v3462, %v3322
    %v3466 = vmul.f32 %v3463, %v3322
    %v3467 = vmul.f32 %v3428, %v3325
    %v3468 = vmul.f32 %v3429, %v3325
    %v3469 = vmul.f32 %v3430, %v3325
    %v3470 = vmul.f32 %v3461, %v3328
    %v3471 = vmul.f32 %v3462, %v3328
    %v3472 = vmul.f32 %v3463, %v3328
    %v3473 = vmul.f32 %v3428, %v3331
    %v3474 = vmul.f32 %v3429, %v3331
    %v3475 = vmul.f32 %v3430, %v3331
    %v3476 = vmul.f32 %v3461, %v3334
    %v3477 = vmul.f32 %v3462, %v3334
    %v3478 = vmul.f32 %v3463, %v3334
    %v3479 = vmul.f32 %v3428, %v3337
    %v3480 = vmul.f32 %v3429, %v3337
    %v3481 = vmul.f32 %v3430, %v3337
    %v3482 = vmul.f32 %v3461, %v3340
    %v3483 = vmul.f32 %v3462, %v3340
    %v3484 = vmul.f32 %v3463, %v3340
    %v3485 = vmul.f32 %v3428, %v3343
    %v3486 = vmul.f32 %v3429, %v3343
    %v3487 = vmul.f32 %v3430, %v3343
    %v3491 = vrot.slane %v3464, 4
    %v3492 = vrot.slane %v3465, 4
    %v3493 = vsel %vm841, %v3491, %v3492
    %v3494 = vrot.slane %v3466, 4
    %v3495 = vsel %vm841, %v3492, %v3494
    %v3502 = vrot.slane %v3470, 4
    %v3503 = vrot.slane %v3471, 4
    %v3504 = vsel %vm841, %v3502, %v3503
    %v3505 = vrot.slane %v3472, 4
    %v3506 = vsel %vm841, %v3503, %v3505
    %v3513 = vrot.slane %v3476, 4
    %v3514 = vrot.slane %v3477, 4
    %v3515 = vsel %vm841, %v3513, %v3514
    %v3516 = vrot.slane %v3478, 4
    %v3517 = vsel %vm841, %v3514, %v3516
    %v3524 = vrot.slane %v3482, 4
    %v3525 = vrot.slane %v3483, 4
    %v3526 = vsel %vm841, %v3524, %v3525
    %v3527 = vrot.slane %v3484, 4
    %v3528 = vsel %vm841, %v3525, %v3527
    %v3532 = vsel %vm841, %v3439, %v3491
    %v3533 = vsel %vm841, %v3469, %v3502
    %v3534 = vsel %vm841, %v3475, %v3513
    %v3535 = vsel %vm841, %v3481, %v3524
    %3537 = vset.pattern.permute.xlu0 0
    %3538 = vperm.xlu0 %3537, %v489
    %v3539 = vpop.permute.xlu0 %3538
    %3541 = vset.pattern.permute.xlu0 0
    %3542 = vperm.xlu0 %3541, %v490
    %v3543 = vpop.permute.xlu0 %3542
    %v3544 = vrot.slane %v3359, 4
    %v3545 = vrot.slane %v3539, 4
    %v3546 = vsel %vm841, %v3544, %v3545
    %v3547 = vrot.slane %v3543, 4
    %v3548 = vsel %vm841, %v3545, %v3547
    %vm3552 = vcmask 424960
    %v3554 = vsel %vm3552, %v3432, 0
    %v3557 = vsel %vm3552, %v3434, 0
    %v3560 = vsel %vm3552, %v3436, 0
    %v3563 = vsel %vm841, %v3487, 0
    %3565 = vmatpush.msra.mxu0 %v3479
    %3566 = vmatpush.msra.mxu0 %v3517
    %3567 = vmatpush.msra.mxu0 %v3515
    %3568 = vmatpush.msra.mxu0 %v3534
    %3569 = vmatpush.msra.mxu0 %v3474
    %3570 = vmatpush.msra.mxu0 %v3473
    %3571 = vmatpush.msra.mxu0 %v3506
    %3572 = vmatpush.msra.mxu0 %v3504
    %3573 = vmatpush.msra.mxu0 %v3533
    %3574 = vmatpush.msra.mxu0 %v3468
    %3575 = vmatpush.msra.mxu0 %v3467
    %3576 = vmatpush.msra.mxu0 %v3495
    %3577 = vmatpush.msra.mxu0 %v3493
    %3578 = vmatpush.msra.mxu0 %v3532
    %3579 = vmatpush.msra.mxu0 %v3438
    %3580 = vmatpush.msra.mxu0 %v3437
    %3581 = vmatmul.f32.gmra.mxu0 %v3431
    %v3582 = vpop.f32.mrf.mxu0
    %v3583 = vadd.f32 %v3546, %v3582
    %3584 = vmatmul.f32.gmra.mxu0 %v3433
    %v3585 = vpop.f32.mrf.mxu0
    %v3586 = vadd.f32 %v3548, %v3585
    %3587 = vmatmul.f32.gmra.mxu0 %v3435
    %v3588 = vpop.f32.mrf.mxu0
    %v3589 = vadd.f32 %v3547, %v3588
    %3590 = vdwg.mxu0
    %3591 = vmatpush.msra.mxu0 0.0
    %3592 = vmatpush.msra.mxu0 0.0
    %3593 = vmatpush.msra.mxu0 0.0
    %3594 = vmatpush.msra.mxu0 0.0
    %3595 = vmatpush.msra.mxu0 0.0
    %3596 = vmatpush.msra.mxu0 0.0
    %3597 = vmatpush.msra.mxu0 0.0
    %3598 = vmatpush.msra.mxu0 0.0
    %3599 = vmatpush.msra.mxu0 0.0
    %3600 = vmatpush.msra.mxu0 %v3563
    %3601 = vmatpush.msra.mxu0 %v3486
    %3602 = vmatpush.msra.mxu0 %v3485
    %3603 = vmatpush.msra.mxu0 %v3528
    %3604 = vmatpush.msra.mxu0 %v3526
    %3605 = vmatpush.msra.mxu0 %v3535
    %3606 = vmatpush.msra.mxu0 %v3480
    %3607 = vmatmul.f32.gmra.mxu0 %v3554
    %v3608 = vpop.f32.mrf.mxu0
    %v3609 = vadd.f32 %v3583, %v3608
    %3610 = vmatmul.f32.gmra.mxu0 %v3557
    %v3611 = vpop.f32.mrf.mxu0
    %v3612 = vadd.f32 %v3586, %v3611
    %3613 = vmatmul.f32.gmra.mxu0 %v3560
    %v3614 = vpop.f32.mrf.mxu0
    %v3615 = vadd.f32 %v3589, %v3614
    %3616 = vdwg.mxu0
    %vm3617 = vcmp.ge.f32.partialorder %v3609, 0.0
    %vm3618 = vcmp.ge.f32.partialorder %v3612, 0.0
    %vm3619 = vcmp.ge.f32.partialorder %v3615, 0.0
    %v3620 = vmul.f32 %v3609, 0.1
    %v3621 = vmul.f32 %v3612, 0.1
    %v3622 = vmul.f32 %v3615, 0.1
    %v3623 = vsel %vm3617, %v3609, %v3620
    %v3624 = vsel %vm3618, %v3612, %v3621
    %v3625 = vsel %vm3619, %v3615, %v3622
    %v3626 = vld [vmem:[%s31] sm:$0xff]
    %v3627 = vld [vmem:[%s31 + $0x8] sm:$0xff]
    %v3628 = vld [vmem:[%s31 + $0x10] sm:$0xff]
    %v3629 = vld [vmem:[%s31 + $0x18] sm:$0xff]
    %v3630 = vld [vmem:[%s31 + $0x20] sm:$0xf]
    %v3631 = vld [vmem:[%s31 + $0x28] sm:$0xf]
    %v3632 = vmul.f32 %v3623, %v3303
    %v3633 = vmul.f32 %v3624, %v3303
    %v3634 = vmul.f32 %v3625, %v3303
    %3638 = vrot.lane.b32.xlu0 %v3623, 127
    %v3639 = vpop.permute.xlu0 %3638
    %3640 = vrot.lane.b32.xlu0 %v3624, 127
    %v3641 = vpop.permute.xlu0 %3640
    %3642 = vrot.lane.b32.xlu0 %v3625, 127
    %v3643 = vpop.permute.xlu0 %3642
    %3647 = vrot.lane.b32.xlu0 %v3623, 1
    %v3648 = vpop.permute.xlu0 %3647
    %3649 = vrot.lane.b32.xlu0 %v3624, 1
    %v3650 = vpop.permute.xlu0 %3649
    %3651 = vrot.lane.b32.xlu0 %v3625, 1
    %v3652 = vpop.permute.xlu0 %3651
    %v3656 = vsel %vm604, %v3639, %v3648
    %v3657 = vsel %vm604, %v3641, %v3650
    %v3658 = vsel %vm604, %v3643, %v3652
    %v3659 = vmul.f32 %v3656, %v3322
    %v3660 = vmul.f32 %v3657, %v3322
    %v3661 = vmul.f32 %v3658, %v3322
    %v3662 = vmul.f32 %v3623, %v3325
    %v3663 = vmul.f32 %v3624, %v3325
    %v3664 = vmul.f32 %v3625, %v3325
    %v3665 = vmul.f32 %v3656, %v3328
    %v3666 = vmul.f32 %v3657, %v3328
    %v3667 = vmul.f32 %v3658, %v3328
    %v3668 = vmul.f32 %v3623, %v3331
    %v3669 = vmul.f32 %v3624, %v3331
    %v3670 = vmul.f32 %v3625, %v3331
    %v3671 = vmul.f32 %v3656, %v3334
    %v3672 = vmul.f32 %v3657, %v3334
    %v3673 = vmul.f32 %v3658, %v3334
    %v3674 = vmul.f32 %v3623, %v3337
    %v3675 = vmul.f32 %v3624, %v3337
    %v3676 = vmul.f32 %v3625, %v3337
    %v3677 = vmul.f32 %v3656, %v3340
    %v3678 = vmul.f32 %v3657, %v3340
    %v3679 = vmul.f32 %v3658, %v3340
    %v3680 = vmul.f32 %v3623, %v3343
    %v3681 = vmul.f32 %v3624, %v3343
    %v3682 = vmul.f32 %v3625, %v3343
    %v3686 = vrot.slane %v3659, 4
    %v3687 = vrot.slane %v3660, 4
    %v3688 = vsel %vm841, %v3686, %v3687
    %v3689 = vrot.slane %v3661, 4
    %v3690 = vsel %vm841, %v3687, %v3689
    %v3697 = vrot.slane %v3665, 4
    %v3698 = vrot.slane %v3666, 4
    %v3699 = vsel %vm841, %v3697, %v3698
    %v3700 = vrot.slane %v3667, 4
    %v3701 = vsel %vm841, %v3698, %v3700
    %v3708 = vrot.slane %v3671, 4
    %v3709 = vrot.slane %v3672, 4
    %v3710 = vsel %vm841, %v3708, %v3709
    %v3711 = vrot.slane %v3673, 4
    %v3712 = vsel %vm841, %v3709, %v3711
    %v3719 = vrot.slane %v3677, 4
    %v3720 = vrot.slane %v3678, 4
    %v3721 = vsel %vm841, %v3719, %v3720
    %v3722 = vrot.slane %v3679, 4
    %v3723 = vsel %vm841, %v3720, %v3722
    %v3727 = vsel %vm841, %v3634, %v3686
    %v3728 = vsel %vm841, %v3664, %v3697
    %v3729 = vsel %vm841, %v3670, %v3708
    %v3730 = vsel %vm841, %v3676, %v3719
    %3732 = vset.pattern.permute.xlu0 0
    %3733 = vperm.xlu0 %3732, %v491
    %v3734 = vpop.permute.xlu0 %3733
    %3737 = vset.pattern.permute.xlu0 0
    %3738 = vperm.xlu0 %3737, %v492
    %v3739 = vpop.permute.xlu0 %3738
    %3742 = vset.pattern.permute.xlu0 0
    %3743 = vperm.xlu0 %3742, %v493
    %v3744 = vpop.permute.xlu0 %3743
    %v3747 = vsel %vm3552, %v3627, 0
    %v3750 = vsel %vm3552, %v3629, 0
    %v3753 = vsel %vm3552, %v3631, 0
    %v3756 = vsel %vm841, %v3682, 0
    %3758 = vmatpush.msra.mxu0 %v3674
    %3759 = vmatpush.msra.mxu0 %v3712
    %3760 = vmatpush.msra.mxu0 %v3710
    %3761 = vmatpush.msra.mxu0 %v3729
    %3762 = vmatpush.msra.mxu0 %v3669
    %3763 = vmatpush.msra.mxu0 %v3668
    %3764 = vmatpush.msra.mxu0 %v3701
    %3765 = vmatpush.msra.mxu0 %v3699
    %3766 = vmatpush.msra.mxu0 %v3728
    %3767 = vmatpush.msra.mxu0 %v3663
    %3768 = vmatpush.msra.mxu0 %v3662
    %3769 = vmatpush.msra.mxu0 %v3690
    %3770 = vmatpush.msra.mxu0 %v3688
    %3771 = vmatpush.msra.mxu0 %v3727
    %3772 = vmatpush.msra.mxu0 %v3633
    %3773 = vmatpush.msra.mxu0 %v3632
    %3774 = vmatmul.f32.gmra.mxu0 %v3626
    %v3775 = vpop.f32.mrf.mxu0
    %v3776 = vadd.f32 %v3734, %v3775
    %3777 = vmatmul.f32.gmra.mxu0 %v3628
    %v3778 = vpop.f32.mrf.mxu0
    %v3779 = vadd.f32 %v3739, %v3778
    %3780 = vmatmul.f32.gmra.mxu0 %v3630
    %v3781 = vpop.f32.mrf.mxu0
    %v3782 = vadd.f32 %v3744, %v3781
    %3783 = vdwg.mxu0
    %3784 = vmatpush.msra.mxu0 0.0
    %3785 = vmatpush.msra.mxu0 0.0
    %3786 = vmatpush.msra.mxu0 0.0
    %3787 = vmatpush.msra.mxu0 0.0
    %3788 = vmatpush.msra.mxu0 0.0
    %3789 = vmatpush.msra.mxu0 0.0
    %3790 = vmatpush.msra.mxu0 0.0
    %3791 = vmatpush.msra.mxu0 0.0
    %3792 = vmatpush.msra.mxu0 0.0
    %3793 = vmatpush.msra.mxu0 %v3756
    %3794 = vmatpush.msra.mxu0 %v3681
    %3795 = vmatpush.msra.mxu0 %v3680
    %3796 = vmatpush.msra.mxu0 %v3723
    %3797 = vmatpush.msra.mxu0 %v3721
    %3798 = vmatpush.msra.mxu0 %v3730
    %3799 = vmatpush.msra.mxu0 %v3675
    %3800 = vmatmul.f32.gmra.mxu0 %v3747
    %v3801 = vpop.f32.mrf.mxu0
    %v3802 = vadd.f32 %v3776, %v3801
    %3803 = vmatmul.f32.gmra.mxu0 %v3750
    %v3804 = vpop.f32.mrf.mxu0
    %v3805 = vadd.f32 %v3779, %v3804
    %3806 = vmatmul.f32.gmra.mxu0 %v3753
    %v3807 = vpop.f32.mrf.mxu0
    %v3808 = vadd.f32 %v3782, %v3807
    %3809 = vdwg.mxu0
    %vm3810 = vcmp.ge.f32.partialorder %v3802, 0.0
    %vm3811 = vcmp.ge.f32.partialorder %v3805, 0.0
    %vm3812 = vcmp.ge.f32.partialorder %v3808, 0.0
    %v3813 = vmul.f32 %v3802, 0.1
    %v3814 = vmul.f32 %v3805, 0.1
    %v3815 = vmul.f32 %v3808, 0.1
    %v3816 = vsel %vm3810, %v3802, %v3813
    %v3817 = vsel %vm3811, %v3805, %v3814
    %v3818 = vsel %vm3812, %v3808, %v3815
    %3819 = vst.msk [vmem:[%s59] sm:$0xff] %vm2749, %v3816
    %3820 = vst.msk [vmem:[%s59 + $0x8] sm:$0xff] %vm2749, %v3817
    %vm3821 = vcmask 11264
    %3822 = vst.msk [vmem:[%s59 + $0x10] sm:$0xf] %vm3821, %v3818
    %v3823 = vld [vmem:[%s53] sm:$0xff]
    %v3824 = vld [vmem:[%s53 + $0x8] sm:$0xff]
    %v3825 = vld [vmem:[%s53 + $0x10] sm:$0xf]
    %v3826 = vmul.f32 %v3816, %v3823
    %v3827 = vmul.f32 %v3817, %v3824
    %v3828 = vmul.f32 %v3818, %v3825
    %v3829 = vsel %vm2749, %v3826, 0.0
    %v3830 = vsel %vm2749, %v3827, 0.0
    %v3831 = vadd.f32 %v3829, %v3830
    %v3832 = vsel %vm3821, %v3828, 0.0
    %v3833 = vadd.f32 %v3831, %v3832
    %v3834 = vrot.slane %v3833, 4
    %v3835 = vadd.f32 %v3833, %v3834
    %v3836 = vrot.slane %v3835, 2
    %v3837 = vadd.f32 %v3835, %v3836
    %v3838 = vrot.slane %v3837, 1
    %v3839 = vadd.f32 %v3837, %v3838
    %v3840 = vld [vmem:[#allocation38] sm:$0x3]
    %v3841 = vld [vmem:[#allocation2] sm:$0x1]
    %3843 = vset.pattern.permute.xlu0 0
    %3844 = vperm.xlu0 %3843, %v3841
    %v3845 = vpop.permute.xlu0 %3844
    %v3847 = vperm.slane %v3845, 0
    %v3849 = vsel %vm2749, %v3839, 0
    %v3852 = vsel %vm831, %v3840, 0
    %3854 = vmatpush.msra.mxu0 0.0
    %3855 = vmatpush.msra.mxu0 0.0
    %3856 = vmatpush.msra.mxu0 0.0
    %3857 = vmatpush.msra.mxu0 0.0
    %3858 = vmatpush.msra.mxu0 0.0
    %3859 = vmatpush.msra.mxu0 0.0
    %3860 = vmatpush.msra.mxu0 0.0
    %3861 = vmatpush.msra.mxu0 0.0
    %3862 = vmatpush.msra.mxu0 0.0
    %3863 = vmatpush.msra.mxu0 0.0
    %3864 = vmatpush.msra.mxu0 0.0
    %3865 = vmatpush.msra.mxu0 0.0
    %3866 = vmatpush.msra.mxu0 0.0
    %3867 = vmatpush.msra.mxu0 0.0
    %3868 = vmatpush.msra.mxu0 0.0
    %3869 = vmatpush.msra.mxu0 %v3852
    %3870 = vmatmul.f32.gmra.mxu0 %v3849
    %v3871 = vpop.f32.mrf.mxu0
    %v3872 = vadd.f32 %v3847, %v3871
    %3873 = vdwg.mxu0
    %v3874 = vsub.f32 0.0, %v3872
    %v3875 = vmul.f32 %v3874, 1.442695
    %v3876 = vpow.pop %v3875
    %v3877 = vadd.f32 %v3876, 1.0
    %v3878 = vrcp.pop %v3877
    %v3879 = vmul.f32 %v3877, %v3878
    %v3880 = vsub.f32 1.0, %v3879
    %v3881 = vmul.f32 %v3878, %v3880
    %v3882 = vadd.f32 %v3878, %v3881
    %vm3883 = vweird.f32 %v3877
    %vm3884 = vweird.f32 %v3878
    %vm3885 = vmor %vm3883, %vm3884
    %v3886 = vsel %vm3885, %v3878, %v3882
    %v3887 = vand.u32 2147483647, %v3877
    %vm3888 = vcmp.eq.f32.partialorder %v3887, 8.507059e+37
    %v3889 = vand.u32 %v3877, 2147483648
    %v3890 = vor.u32 1.1754944e-38, %v3889
    %v3891 = vsel %vm3888, %v3890, %v3886
    %v3892 = vmul.f32 1.0, %v3891
    %vm3893 = vcmask 8192
    %3894 = vst.msk [vmem:[#allocation39] sm:$0x1] %vm3893, %v3892
    // Predicated region
    $region210: #{_lambda_.1} parent=1 // pred_check
      _
    $region211: #{_lambda_.1} parent=1 // pred_check_branch
      %3896 = sbr.rel (0) target = $region213
    $region212: #{_lambda_.1} parent=1 // pred_region
      _
    $region213: #{_lambda_.1} parent=1 // pred_fallthru
      _
    // Predicated region
    $region214: #{_lambda_.1} parent=1 // pred_check
      _
    $region215: #{_lambda_.1} parent=1 // pred_check_branch
      %3898 = sbr.rel (0) target = $region217
    $region216: #{_lambda_.1} parent=1 // pred_region
      %3900 = vsyncadd [#allocation5], 0
      %s3902 = sshll.u32 [#allocation39], 4
      %s3903 = int_to_ptr.vmem [resolvable:$true] %s3902
      %s3904 = sshll.u32 %s61, 4
      %s3905 = int_to_ptr.hbm [resolvable:$true] %s3904
      %3907 = dma.vmem_to_hbm [thread:$0]  %s3903, 16, %s3905, [#allocation5]
    $region217: #{_lambda_.1} parent=1 // pred_fallthru
      _
    // Predicated region
    $region218: #{_lambda_.1} parent=1 // pred_check
      _
    $region219: #{_lambda_.1} parent=1 // pred_check_branch
      %3909 = sbr.rel (0) target = $region221
    $region220: #{_lambda_.1} parent=1 // pred_region
      _
    $region221: #{_lambda_.1} parent=1 // pred_fallthru
      _
    // Predicated region
    $region222: #{_lambda_.1} parent=1 // pred_check
      _
    $region223: #{_lambda_.1} parent=1 // pred_check_branch
      %3911 = sbr.rel (0) target = $region225
    $region224: #{_lambda_.1} parent=1 // pred_region
      %3913 = dma.done [#allocation5], 16
    $region225: #{_lambda_.1} parent=1 // pred_fallthru
      _
    %3914 = vsyncpa [#allocation4], 1
    %3915 = vsyncpa [#allocation7], 1
    %3916 = vsyncpa [#allocation10], 1
    %3917 = vsyncpa [#allocation13], 1
    %3918 = vsyncpa [#allocation16], 1
    %3919 = vsyncpa [#allocation19], 1
    %3920 = vsyncpa [#allocation22], 1
    %3921 = vsyncpa [#allocation25], 1
    %3922 = vsyncpa [#allocation28], 1
    %3923 = vsyncpa [#allocation31], 1
    %3924 = vsyncpa [#allocation34], 1
    %3925 = vsyncpa [#allocation37], 1
    %3926 = vsyncpa [#allocation5], 1

</llo_original>
